<compile_context>
chip_gen: v7x
topology: tpu7x:2x2x1
jax: 0.10.0
libtpu: 0.0.40
codegen_flags: <defaults>
</compile_context>

<pallas_src>
import jax
import jax.numpy as jnp
from jax import lax
from jax.experimental import pallas as pl
from jax.experimental.pallas import tpu as pltpu

BN_EPS = 0.001


def _round_up(v, m):
    return -(-v // m) * m


def _pick_row_tile(ho, wo, cin, cout, n, budget_bytes=8 * 1024 * 1024, tr_cap=32):
    """Output-row tile TR (multiple of 8) for pass 1, tile count T and padded rows."""
    # f32 bytes resident per output row: parity-plane block + pre-BN y block,
    # each double-buffered by the BlockSpec pipeline.
    per_row = 8 * (4 * cin * (wo + 1) + cout * wo)
    tr = (budget_bytes // per_row) // 8 * 8
    tr = int(max(8, min(tr_cap, tr)))
    tr = min(tr, _round_up(ho, 8))
    t = -(-ho // tr)
    # v7x has 2 TensorCores per chip: keep >= 2 grid work items when possible.
    if n * t < 2 and ho > 8:
        tr = max(8, _round_up(-(-ho // 2), 8))
        t = -(-ho // tr)
    return tr, t, tr * t


def _pick_row_tile2(tr, t, wo, cout, budget_bytes=8 * 1024 * 1024):
    """Pass 2 is cheap per column -> largest row tile (multiple of TR) dividing Ho_pad."""
    per_row = 16 * cout * wo          # in + out blocks, f32, double-buffered
    for c in range(t, 0, -1):
        if t % c == 0 and c * tr * per_row <= budget_bytes:
            return c * tr, t // c
    return tr, t


def downsampler_block(x, conv_w, conv_b, bn_gamma, bn_beta):
    """x: (N, Cin, H, W) NCHW f32 -> (N, Cout, H//2, W//2) NCHW f32.

    conv_w: (Cc, Cin, 3, 3) PyTorch layout (Cc = noutput - ninput)
    conv_b: (Cc,);  bn_gamma / bn_beta: (Cout,) with Cout = Cc + Cin.
    """
    N, Cin, H, W = x.shape
    Cc = conv_w.shape[0]
    Cout = Cc + Cin
    if H % 2 or W % 2:
        # PyTorch's cat() would also fail for odd dims (conv and pool disagree).
        raise ValueError("DownsamplerBlock requires even spatial dims (H, W).")
    Ho, Wo = H // 2, W // 2

    TR, T, Ho_pad = _pick_row_tile(Ho, Wo, Cin, Cout, N)
    TR2, T2 = _pick_row_tile2(TR, T, Wo, Cout)

    x = x.astype(jnp.float32)

    # ---- wrapper layout glue: stride-2 parity planes (~1.05x of x) + row halo ----
    # xpad[i, j] = x[i-1, j-1]; needed rows 0 .. 2*Ho_pad, cols 0 .. 2*Wo.
    pad_b = 2 * (Ho_pad - Ho)
    xpad = jnp.pad(x, ((0, 0), (0, 0), (1, pad_b), (1, 1)))
    ee = xpad[:, :, 0::2, 0::2][:, :, :Ho_pad + 1, :Wo + 1]   # (N, Cin, Ho_pad+1, Wo+1)
    eo = xpad[:, :, 0::2, 1::2][:, :, :Ho_pad + 1, :Wo + 1]
    oe = xpad[:, :, 1::2, 0::2][:, :, :Ho_pad, :Wo + 1]
    oo = xpad[:, :, 1::2, 1::2][:, :, :Ho_pad, :Wo + 1]
    # plane channel order: [EE, EO, OE, OO]
    planes = jnp.concatenate([ee[:, :, :Ho_pad], eo[:, :, :Ho_pad], oe, oo], axis=1)
    # halo = the single extra (r+1) row each row-tile needs from EE / EO.
    halo = jnp.concatenate([ee[:, :, TR::TR], eo[:, :, TR::TR]], axis=1)  # (N,2Cin,T,Wo+1)
    halo = jnp.transpose(halo, (0, 2, 1, 3))                              # (N,T,2Cin,Wo+1)

    # conv weight (Cc,Cin,3,3) -> (Cc, 9*Cin) with K ordered (kh, kw, cin)
    w_mat = jnp.transpose(conv_w, (0, 2, 3, 1)).reshape(Cc, 9 * Cin).astype(jnp.float32)
    b_mat = conv_b.reshape(Cc, 1).astype(jnp.float32)

    cparams = pltpu.CompilerParams(
        dimension_semantics=("parallel", "parallel"),
        vmem_limit_bytes=32 * 1024 * 1024)

    # ------------- pass 1: in-kernel taps + conv GEMM + pool + partial BN stats -------------
    def pass1_kernel(planes_ref, halo_ref, w_ref, b_ref, y_ref, sum_ref, m2_ref):
        w = w_ref[...]                                   # (Cc, 9*Cin), hoisted
        b = b_ref[...]                                   # (Cc, 1)
        for r in range(TR):                              # static unroll over tile rows
            def cur(p, dc):                              # tap: plane p, parity row r
                return planes_ref[p * Cin:(p + 1) * Cin, r, dc:dc + Wo]

            def nxt(p, dc):                              # tap: plane p (0=EE,1=EO), row r+1
                if r + 1 < TR:
                    return planes_ref[p * Cin:(p + 1) * Cin, r + 1, dc:dc + Wo]
                return halo_ref[p * Cin:(p + 1) * Cin, dc:dc + Wo]

            t11, t12 = cur(3, 0), cur(2, 1)              # central taps == 2x2 pool window
            t21, t22 = nxt(1, 0), nxt(0, 1)
            taps = jnp.concatenate(
                [cur(0, 0), cur(1, 0), cur(0, 1),        # kh = 0
                 cur(2, 0), t11, t12,                    # kh = 1
                 nxt(0, 0), t21, t22],                   # kh = 2
                axis=0)                                  # (9*Cin, Wo)
            conv_r = jnp.dot(w, taps, preferred_element_type=jnp.float32) + b
            pool_r = jnp.maximum(jnp.maximum(t11, t12), jnp.maximum(t21, t22))
            y_ref[:, r, :] = jnp.concatenate([conv_r, pool_r], axis=0)   # (Cout, Wo)

        # Per-tile centered partial BN statistics (Chan).  Masking only on the
        # ragged last row tile; interior tiles are plain unmasked reductions.
        y = y_ref[...]                                   # (Cout, TR, Wo)
        t = pl.program_id(1)
        valid = jnp.minimum(TR, Ho - t * TR)

        @pl.when(valid == TR)
        def _():
            s = jnp.sum(jnp.sum(y, axis=2), axis=1)
            mu = s * (1.0 / (TR * Wo))
            d = y - mu[:, None, None]
            m2 = jnp.sum(jnp.sum(d * d, axis=2), axis=1)
            sum_ref[...] = s.reshape(1, Cout)
            m2_ref[...] = m2.reshape(1, Cout)

        @pl.when(valid < TR)
        def _():
            rows = lax.broadcasted_iota(jnp.int32, (1, TR, 1), 1)
            mask = rows < valid
            cnt = (valid * Wo).astype(jnp.float32)
            ym = jnp.where(mask, y, 0.0)
            s = jnp.sum(jnp.sum(ym, axis=2), axis=1)
            mu = s / cnt
            d = jnp.where(mask, y - mu[:, None, None], 0.0)
            m2 = jnp.sum(jnp.sum(d * d, axis=2), axis=1)
            sum_ref[...] = s.reshape(1, Cout)
            m2_ref[...] = m2.reshape(1, Cout)

    y, sums, m2s = pl.pallas_call(
        pass1_kernel,
        grid=(N, T),
        in_specs=[
            pl.BlockSpec((None, 4 * Cin, TR, Wo + 1), lambda n, t: (n, 0, t, 0)),
            pl.BlockSpec((None, None, 2 * Cin, Wo + 1), lambda n, t: (n, t, 0, 0)),
            pl.BlockSpec((Cc, 9 * Cin), lambda n, t: (0, 0)),
            pl.BlockSpec((Cc, 1), lambda n, t: (0, 0)),
        ],
        out_specs=(
            pl.BlockSpec((None, Cout, TR, Wo), lambda n, t: (n, 0, t, 0)),
            pl.BlockSpec((None, None, 1, Cout), lambda n, t: (n, t, 0, 0)),
            pl.BlockSpec((None, None, 1, Cout), lambda n, t: (n, t, 0, 0)),
        ),
        out_shape=(
            jax.ShapeDtypeStruct((N, Cout, Ho_pad, Wo), jnp.float32),
            jax.ShapeDtypeStruct((N, T, 1, Cout), jnp.float32),
            jax.ShapeDtypeStruct((N, T, 1, Cout), jnp.float32),
        ),
        compiler_params=cparams,
    )(planes, halo, w_mat, b_mat)

    # ------------- finalize BN stats (tiny, plain JAX; Chan combination) -------------
    counts = jnp.array([min(TR, Ho - t * TR) * Wo for t in range(T)],
                       jnp.float32).reshape(1, T, 1)
    sums = sums[:, :, 0, :]                              # (N, T, Cout)
    m2s = m2s[:, :, 0, :]
    total = float(N * Ho * Wo)
    mean = jnp.sum(sums, axis=(0, 1)) / total            # (Cout,)
    tile_mean = sums / counts
    ss = jnp.sum(m2s, axis=(0, 1)) + jnp.sum(
        counts * (tile_mean - mean[None, None, :]) ** 2, axis=(0, 1))
    var = ss / total                                     # biased, as PyTorch training BN
    inv = lax.rsqrt(var + BN_EPS)
    g = bn_gamma.astype(jnp.float32)
    scale = (g * inv).reshape(Cout, 1, 1)
    shift = (bn_beta.astype(jnp.float32) - mean * g * inv).reshape(Cout, 1, 1)

    # ------------- pass 2: scale + shift + ReLU, in place over y -------------
    def pass2_kernel(y_ref, scale_ref, shift_ref, o_ref):
        o_ref[...] = jnp.maximum(y_ref[...] * scale_ref[...] + shift_ref[...], 0.0)

    out = pl.pallas_call(
        pass2_kernel,
        grid=(N, T2),
        in_specs=[
            pl.BlockSpec((None, Cout, TR2, Wo), lambda n, t: (n, 0, t, 0)),
            pl.BlockSpec((Cout, 1, 1), lambda n, t: (0, 0, 0)),
            pl.BlockSpec((Cout, 1, 1), lambda n, t: (0, 0, 0)),
        ],
        out_specs=pl.BlockSpec((None, Cout, TR2, Wo), lambda n, t: (n, 0, t, 0)),
        out_shape=jax.ShapeDtypeStruct((N, Cout, Ho_pad, Wo), jnp.float32),
        input_output_aliases={0: 0},
        compiler_params=cparams,
    )(y, scale, shift)

    # Already NCHW: just drop the padded rows.
    return out[:, :, :Ho, :]


def _reference(x, conv_w, conv_b, bn_gamma, bn_beta):
    """Pure-JAX reference mirroring the PyTorch forward (training-mode BN)."""
    conv = lax.conv_general_dilated(
        x, conv_w, window_strides=(2, 2), padding=((1, 1), (1, 1)),
        dimension_numbers=("NCHW", "OIHW", "NCHW"))
    conv = conv + conv_b.reshape(1, -1, 1, 1)
    pooled = lax.reduce_window(x, -jnp.inf, lax.max,
                               window_dimensions=(1, 1, 2, 2),
                               window_strides=(1, 1, 2, 2), padding="VALID")
    y = jnp.concatenate([conv, pooled], axis=1)
    mean = jnp.mean(y, axis=(0, 2, 3), keepdims=True)
    var = jnp.mean((y - mean) ** 2, axis=(0, 2, 3), keepdims=True)
    y = (y - mean) * lax.rsqrt(var + BN_EPS)
    y = y * bn_gamma.reshape(1, -1, 1, 1) + bn_beta.reshape(1, -1, 1, 1)
    return jnp.maximum(y, 0.0)


if __name__ == "__main__":
    # Small shapes: N=2, ninput=4, noutput=8, H=W=16 -> out (2, 8, 8, 8) NCHW.
    N, ninput, noutput, H, W = 2, 4, 8, 16, 16
    Cc = noutput - ninput

    key = jax.random.PRNGKey(0)
    kx, kw, kb, kg, kbt = jax.random.split(key, 5)
    x = jax.random.normal(kx, (N, ninput, H, W), dtype=jnp.float32)
    conv_w = 0.1 * jax.random.normal(kw, (Cc, ninput, 3, 3), dtype=jnp.float32)
    conv_b = 0.1 * jax.random.normal(kb, (Cc,), dtype=jnp.float32)
    bn_gamma = 1.0 + 0.1 * jax.random.normal(kg, (noutput,), dtype=jnp.float32)
    bn_beta = 0.1 * jax.random.normal(kbt, (noutput,), dtype=jnp.float32)

    out = jax.jit(downsampler_block)(x, conv_w, conv_b, bn_gamma, bn_beta)
    out = jax.block_until_ready(out)
    assert out.shape == (N, noutput, H // 2, W // 2), out.shape

    ref = jax.block_until_ready(_reference(x, conv_w, conv_b, bn_gamma, bn_beta))

    import numpy as np
    np.testing.assert_allclose(np.asarray(out), np.asarray(ref),
                               rtol=1e-3, atol=1e-3)

    print("KERNEL_OK")
</pallas_src>

<mosaic_0001>
module attributes {stable_mosaic.version = 11 : i64} {
  func.func @pass1_kernel(%arg0: i32, %arg1: i32, %arg2: memref<1x16x8x9xf32, #tpu.memory_space<vmem>>, %arg3: memref<1x1x8x9xf32, #tpu.memory_space<vmem>>, %arg4: memref<4x36xf32, #tpu.memory_space<vmem>>, %arg5: memref<4x1xf32, #tpu.memory_space<vmem>>, %arg6: memref<1x8x8x8xf32, #tpu.memory_space<vmem>>, %arg7: memref<1x1x1x8xf32, #tpu.memory_space<vmem>>, %arg8: memref<1x1x1x8xf32, #tpu.memory_space<vmem>>) attributes {dimension_semantics = [#tpu.dimension_semantics<parallel>, #tpu.dimension_semantics<parallel>], iteration_bounds = array<i64: 2, 1>, scalar_prefetch = 0 : i64, scratch_operands = 0 : i64, tpu.core_type = #tpu.core_type<tc>, window_params = [{transform_indices = @transform_0, window_bounds = array<i64: 1, 16, 8, 9>}, {transform_indices = @transform_1, window_bounds = array<i64: 1, 1, 8, 9>}, {pipeline_mode = #tpu.pipeline_mode<synchronous>, transform_indices = @transform_2, window_bounds = array<i64: 4, 36>}, {pipeline_mode = #tpu.pipeline_mode<synchronous>, transform_indices = @transform_3, window_bounds = array<i64: 4, 1>}, {transform_indices = @transform_4, window_bounds = array<i64: 1, 8, 8, 8>}, {transform_indices = @transform_5, window_bounds = array<i64: 1, 1, 1, 8>}, {transform_indices = @transform_6, window_bounds = array<i64: 1, 1, 1, 8>}]} {
    %c0 = arith.constant 0 : index
    %c0_0 = arith.constant 0 : index
    %0 = vector.load %arg4[%c0, %c0_0] : memref<4x36xf32, #tpu.memory_space<vmem>>, vector<4x36xf32>
    %c0_1 = arith.constant 0 : index
    %c0_2 = arith.constant 0 : index
    %1 = vector.load %arg5[%c0_1, %c0_2] : memref<4x1xf32, #tpu.memory_space<vmem>>, vector<4x1xf32>
    %c0_3 = arith.constant 0 : index
    %c12 = arith.constant 12 : index
    %c0_4 = arith.constant 0 : index
    %c0_5 = arith.constant 0 : index
    %2 = vector.load %arg2[%c0_3, %c12, %c0_4, %c0_5] : memref<1x16x8x9xf32, #tpu.memory_space<vmem>>, vector<1x4x1x8xf32>
    %3 = vector.shape_cast %2 : vector<1x4x1x8xf32> to vector<4x8xf32>
    %c0_6 = arith.constant 0 : index
    %c8 = arith.constant 8 : index
    %c0_7 = arith.constant 0 : index
    %c1 = arith.constant 1 : index
    %4 = vector.load %arg2[%c0_6, %c8, %c0_7, %c1] : memref<1x16x8x9xf32, #tpu.memory_space<vmem>>, vector<1x4x1x8xf32>
    %5 = vector.shape_cast %4 : vector<1x4x1x8xf32> to vector<4x8xf32>
    %c0_8 = arith.constant 0 : index
    %c4 = arith.constant 4 : index
    %c1_9 = arith.constant 1 : index
    %c0_10 = arith.constant 0 : index
    %6 = vector.load %arg2[%c0_8, %c4, %c1_9, %c0_10] : memref<1x16x8x9xf32, #tpu.memory_space<vmem>>, vector<1x4x1x8xf32>
    %7 = vector.shape_cast %6 : vector<1x4x1x8xf32> to vector<4x8xf32>
    %c0_11 = arith.constant 0 : index
    %c0_12 = arith.constant 0 : index
    %c1_13 = arith.constant 1 : index
    %c1_14 = arith.constant 1 : index
    %8 = vector.load %arg2[%c0_11, %c0_12, %c1_13, %c1_14] : memref<1x16x8x9xf32, #tpu.memory_space<vmem>>, vector<1x4x1x8xf32>
    %9 = vector.shape_cast %8 : vector<1x4x1x8xf32> to vector<4x8xf32>
    %c0_15 = arith.constant 0 : index
    %c0_16 = arith.constant 0 : index
    %c0_17 = arith.constant 0 : index
    %c0_18 = arith.constant 0 : index
    %10 = vector.load %arg2[%c0_15, %c0_16, %c0_17, %c0_18] : memref<1x16x8x9xf32, #tpu.memory_space<vmem>>, vector<1x4x1x8xf32>
    %11 = vector.shape_cast %10 : vector<1x4x1x8xf32> to vector<4x8xf32>
    %c0_19 = arith.constant 0 : index
    %c4_20 = arith.constant 4 : index
    %c0_21 = arith.constant 0 : index
    %c0_22 = arith.constant 0 : index
    %12 = vector.load %arg2[%c0_19, %c4_20, %c0_21, %c0_22] : memref<1x16x8x9xf32, #tpu.memory_space<vmem>>, vector<1x4x1x8xf32>
    %13 = vector.shape_cast %12 : vector<1x4x1x8xf32> to vector<4x8xf32>
    %c0_23 = arith.constant 0 : index
    %c0_24 = arith.constant 0 : index
    %c0_25 = arith.constant 0 : index
    %c1_26 = arith.constant 1 : index
    %14 = vector.load %arg2[%c0_23, %c0_24, %c0_25, %c1_26] : memref<1x16x8x9xf32, #tpu.memory_space<vmem>>, vector<1x4x1x8xf32>
    %15 = vector.shape_cast %14 : vector<1x4x1x8xf32> to vector<4x8xf32>
    %c0_27 = arith.constant 0 : index
    %c8_28 = arith.constant 8 : index
    %c0_29 = arith.constant 0 : index
    %c0_30 = arith.constant 0 : index
    %16 = vector.load %arg2[%c0_27, %c8_28, %c0_29, %c0_30] : memref<1x16x8x9xf32, #tpu.memory_space<vmem>>, vector<1x4x1x8xf32>
    %17 = vector.shape_cast %16 : vector<1x4x1x8xf32> to vector<4x8xf32>
    %c0_31 = arith.constant 0 : index
    %c0_32 = arith.constant 0 : index
    %c1_33 = arith.constant 1 : index
    %c0_34 = arith.constant 0 : index
    %18 = vector.load %arg2[%c0_31, %c0_32, %c1_33, %c0_34] : memref<1x16x8x9xf32, #tpu.memory_space<vmem>>, vector<1x4x1x8xf32>
    %19 = vector.shape_cast %18 : vector<1x4x1x8xf32> to vector<4x8xf32>
    %20 = tpu.concatenate %11, %13, %15, %17, %3, %5, %19, %7, %9 in 0 : vector<4x8xf32>, vector<4x8xf32>, vector<4x8xf32>, vector<4x8xf32>, vector<4x8xf32>, vector<4x8xf32>, vector<4x8xf32>, vector<4x8xf32>, vector<4x8xf32> -> vector<36x8xf32>
    %cst = arith.constant dense<0.000000e+00> : vector<4x8xf32>
    %21 = tpu.matmul %0, %20, %cst {dimension_numbers = #tpu.dot_dimension_numbers<[1], [0], [0], [1], [0, 0, 1, 1], [], []>} : vector<4x36xf32>, vector<36x8xf32>, vector<4x8xf32> -> vector<4x8xf32>
    %22 = vector.broadcast %1 : vector<4x1xf32> to vector<4x8xf32>
    %23 = arith.addf %21, %22 : vector<4x8xf32>
    %24 = arith.maximumf %3, %5 : vector<4x8xf32>
    %25 = arith.maximumf %7, %9 : vector<4x8xf32>
    %26 = arith.maximumf %24, %25 : vector<4x8xf32>
    %27 = tpu.concatenate %23, %26 in 0 : vector<4x8xf32>, vector<4x8xf32> -> vector<8x8xf32>
    %c0_35 = arith.constant 0 : index
    %c0_36 = arith.constant 0 : index
    %c0_37 = arith.constant 0 : index
    %c0_38 = arith.constant 0 : index
    %28 = vector.load %arg6[%c0_35, %c0_36, %c0_37, %c0_38] : memref<1x8x8x8xf32, #tpu.memory_space<vmem>>, vector<1x8x1x8xf32>
    %29 = vector.shape_cast %28 : vector<1x8x1x8xf32> to vector<8x8xf32>
    %30 = vector.shape_cast %27 : vector<8x8xf32> to vector<1x8x1x8xf32>
    tpu.vector_store %arg6[%c0_35, %c0_36, %c0_37, %c0_38], %30 {strides = array<i32>} : memref<1x8x8x8xf32, #tpu.memory_space<vmem>>, vector<1x8x1x8xf32>,
    %c0_39 = arith.constant 0 : index
    %c12_40 = arith.constant 12 : index
    %c1_41 = arith.constant 1 : index
    %c0_42 = arith.constant 0 : index
    %31 = vector.load %arg2[%c0_39, %c12_40, %c1_41, %c0_42] : memref<1x16x8x9xf32, #tpu.memory_space<vmem>>, vector<1x4x1x8xf32>
    %32 = vector.shape_cast %31 : vector<1x4x1x8xf32> to vector<4x8xf32>
    %c0_43 = arith.constant 0 : index
    %c8_44 = arith.constant 8 : index
    %c1_45 = arith.constant 1 : index
    %c1_46 = arith.constant 1 : index
    %33 = vector.load %arg2[%c0_43, %c8_44, %c1_45, %c1_46] : memref<1x16x8x9xf32, #tpu.memory_space<vmem>>, vector<1x4x1x8xf32>
    %34 = vector.shape_cast %33 : vector<1x4x1x8xf32> to vector<4x8xf32>
    %c0_47 = arith.constant 0 : index
    %c4_48 = arith.constant 4 : index
    %c2 = arith.constant 2 : index
    %c0_49 = arith.constant 0 : index
    %35 = vector.load %arg2[%c0_47, %c4_48, %c2, %c0_49] : memref<1x16x8x9xf32, #tpu.memory_space<vmem>>, vector<1x4x1x8xf32>
    %36 = vector.shape_cast %35 : vector<1x4x1x8xf32> to vector<4x8xf32>
    %c0_50 = arith.constant 0 : index
    %c0_51 = arith.constant 0 : index
    %c2_52 = arith.constant 2 : index
    %c1_53 = arith.constant 1 : index
    %37 = vector.load %arg2[%c0_50, %c0_51, %c2_52, %c1_53] : memref<1x16x8x9xf32, #tpu.memory_space<vmem>>, vector<1x4x1x8xf32>
    %38 = vector.shape_cast %37 : vector<1x4x1x8xf32> to vector<4x8xf32>
    %c0_54 = arith.constant 0 : index
    %c0_55 = arith.constant 0 : index
    %c1_56 = arith.constant 1 : index
    %c0_57 = arith.constant 0 : index
    %39 = vector.load %arg2[%c0_54, %c0_55, %c1_56, %c0_57] : memref<1x16x8x9xf32, #tpu.memory_space<vmem>>, vector<1x4x1x8xf32>
    %40 = vector.shape_cast %39 : vector<1x4x1x8xf32> to vector<4x8xf32>
    %c0_58 = arith.constant 0 : index
    %c4_59 = arith.constant 4 : index
    %c1_60 = arith.constant 1 : index
    %c0_61 = arith.constant 0 : index
    %41 = vector.load %arg2[%c0_58, %c4_59, %c1_60, %c0_61] : memref<1x16x8x9xf32, #tpu.memory_space<vmem>>, vector<1x4x1x8xf32>
    %42 = vector.shape_cast %41 : vector<1x4x1x8xf32> to vector<4x8xf32>
    %c0_62 = arith.constant 0 : index
    %c0_63 = arith.constant 0 : index
    %c1_64 = arith.constant 1 : index
    %c1_65 = arith.constant 1 : index
    %43 = vector.load %arg2[%c0_62, %c0_63, %c1_64, %c1_65] : memref<1x16x8x9xf32, #tpu.memory_space<vmem>>, vector<1x4x1x8xf32>
    %44 = vector.shape_cast %43 : vector<1x4x1x8xf32> to vector<4x8xf32>
    %c0_66 = arith.constant 0 : index
    %c8_67 = arith.constant 8 : index
    %c1_68 = arith.constant 1 : index
    %c0_69 = arith.constant 0 : index
    %45 = vector.load %arg2[%c0_66, %c8_67, %c1_68, %c0_69] : memref<1x16x8x9xf32, #tpu.memory_space<vmem>>, vector<1x4x1x8xf32>
    %46 = vector.shape_cast %45 : vector<1x4x1x8xf32> to vector<4x8xf32>
    %c0_70 = arith.constant 0 : index
    %c0_71 = arith.constant 0 : index
    %c2_72 = arith.constant 2 : index
    %c0_73 = arith.constant 0 : index
    %47 = vector.load %arg2[%c0_70, %c0_71, %c2_72, %c0_73] : memref<1x16x8x9xf32, #tpu.memory_space<vmem>>, vector<1x4x1x8xf32>
    %48 = vector.shape_cast %47 : vector<1x4x1x8xf32> to vector<4x8xf32>
    %49 = tpu.concatenate %40, %42, %44, %46, %32, %34, %48, %36, %38 in 0 : vector<4x8xf32>, vector<4x8xf32>, vector<4x8xf32>, vector<4x8xf32>, vector<4x8xf32>, vector<4x8xf32>, vector<4x8xf32>, vector<4x8xf32>, vector<4x8xf32> -> vector<36x8xf32>
    %cst_74 = arith.constant dense<0.000000e+00> : vector<4x8xf32>
    %50 = tpu.matmul %0, %49, %cst_74 {dimension_numbers = #tpu.dot_dimension_numbers<[1], [0], [0], [1], [0, 0, 1, 1], [], []>} : vector<4x36xf32>, vector<36x8xf32>, vector<4x8xf32> -> vector<4x8xf32>
    %51 = vector.broadcast %1 : vector<4x1xf32> to vector<4x8xf32>
    %52 = arith.addf %50, %51 : vector<4x8xf32>
    %53 = arith.maximumf %32, %34 : vector<4x8xf32>
    %54 = arith.maximumf %36, %38 : vector<4x8xf32>
    %55 = arith.maximumf %53, %54 : vector<4x8xf32>
    %56 = tpu.concatenate %52, %55 in 0 : vector<4x8xf32>, vector<4x8xf32> -> vector<8x8xf32>
    %c0_75 = arith.constant 0 : index
    %c0_76 = arith.constant 0 : index
    %c1_77 = arith.constant 1 : index
    %c0_78 = arith.constant 0 : index
    %57 = vector.load %arg6[%c0_75, %c0_76, %c1_77, %c0_78] : memref<1x8x8x8xf32, #tpu.memory_space<vmem>>, vector<1x8x1x8xf32>
    %58 = vector.shape_cast %57 : vector<1x8x1x8xf32> to vector<8x8xf32>
    %59 = vector.shape_cast %56 : vector<8x8xf32> to vector<1x8x1x8xf32>
    tpu.vector_store %arg6[%c0_75, %c0_76, %c1_77, %c0_78], %59 {strides = array<i32>} : memref<1x8x8x8xf32, #tpu.memory_space<vmem>>, vector<1x8x1x8xf32>,
    %c0_79 = arith.constant 0 : index
    %c12_80 = arith.constant 12 : index
    %c2_81 = arith.constant 2 : index
    %c0_82 = arith.constant 0 : index
    %60 = vector.load %arg2[%c0_79, %c12_80, %c2_81, %c0_82] : memref<1x16x8x9xf32, #tpu.memory_space<vmem>>, vector<1x4x1x8xf32>
    %61 = vector.shape_cast %60 : vector<1x4x1x8xf32> to vector<4x8xf32>
    %c0_83 = arith.constant 0 : index
    %c8_84 = arith.constant 8 : index
    %c2_85 = arith.constant 2 : index
    %c1_86 = arith.constant 1 : index
    %62 = vector.load %arg2[%c0_83, %c8_84, %c2_85, %c1_86] : memref<1x16x8x9xf32, #tpu.memory_space<vmem>>, vector<1x4x1x8xf32>
    %63 = vector.shape_cast %62 : vector<1x4x1x8xf32> to vector<4x8xf32>
    %c0_87 = arith.constant 0 : index
    %c4_88 = arith.constant 4 : index
    %c3 = arith.constant 3 : index
    %c0_89 = arith.constant 0 : index
    %64 = vector.load %arg2[%c0_87, %c4_88, %c3, %c0_89] : memref<1x16x8x9xf32, #tpu.memory_space<vmem>>, vector<1x4x1x8xf32>
    %65 = vector.shape_cast %64 : vector<1x4x1x8xf32> to vector<4x8xf32>
    %c0_90 = arith.constant 0 : index
    %c0_91 = arith.constant 0 : index
    %c3_92 = arith.constant 3 : index
    %c1_93 = arith.constant 1 : index
    %66 = vector.load %arg2[%c0_90, %c0_91, %c3_92, %c1_93] : memref<1x16x8x9xf32, #tpu.memory_space<vmem>>, vector<1x4x1x8xf32>
    %67 = vector.shape_cast %66 : vector<1x4x1x8xf32> to vector<4x8xf32>
    %c0_94 = arith.constant 0 : index
    %c0_95 = arith.constant 0 : index
    %c2_96 = arith.constant 2 : index
    %c0_97 = arith.constant 0 : index
    %68 = vector.load %arg2[%c0_94, %c0_95, %c2_96, %c0_97] : memref<1x16x8x9xf32, #tpu.memory_space<vmem>>, vector<1x4x1x8xf32>
    %69 = vector.shape_cast %68 : vector<1x4x1x8xf32> to vector<4x8xf32>
    %c0_98 = arith.constant 0 : index
    %c4_99 = arith.constant 4 : index
    %c2_100 = arith.constant 2 : index
    %c0_101 = arith.constant 0 : index
    %70 = vector.load %arg2[%c0_98, %c4_99, %c2_100, %c0_101] : memref<1x16x8x9xf32, #tpu.memory_space<vmem>>, vector<1x4x1x8xf32>
    %71 = vector.shape_cast %70 : vector<1x4x1x8xf32> to vector<4x8xf32>
    %c0_102 = arith.constant 0 : index
    %c0_103 = arith.constant 0 : index
    %c2_104 = arith.constant 2 : index
    %c1_105 = arith.constant 1 : index
    %72 = vector.load %arg2[%c0_102, %c0_103, %c2_104, %c1_105] : memref<1x16x8x9xf32, #tpu.memory_space<vmem>>, vector<1x4x1x8xf32>
    %73 = vector.shape_cast %72 : vector<1x4x1x8xf32> to vector<4x8xf32>
    %c0_106 = arith.constant 0 : index
    %c8_107 = arith.constant 8 : index
    %c2_108 = arith.constant 2 : index
    %c0_109 = arith.constant 0 : index
    %74 = vector.load %arg2[%c0_106, %c8_107, %c2_108, %c0_109] : memref<1x16x8x9xf32, #tpu.memory_space<vmem>>, vector<1x4x1x8xf32>
    %75 = vector.shape_cast %74 : vector<1x4x1x8xf32> to vector<4x8xf32>
    %c0_110 = arith.constant 0 : index
    %c0_111 = arith.constant 0 : index
    %c3_112 = arith.constant 3 : index
    %c0_113 = arith.constant 0 : index
    %76 = vector.load %arg2[%c0_110, %c0_111, %c3_112, %c0_113] : memref<1x16x8x9xf32, #tpu.memory_space<vmem>>, vector<1x4x1x8xf32>
    %77 = vector.shape_cast %76 : vector<1x4x1x8xf32> to vector<4x8xf32>
    %78 = tpu.concatenate %69, %71, %73, %75, %61, %63, %77, %65, %67 in 0 : vector<4x8xf32>, vector<4x8xf32>, vector<4x8xf32>, vector<4x8xf32>, vector<4x8xf32>, vector<4x8xf32>, vector<4x8xf32>, vector<4x8xf32>, vector<4x8xf32> -> vector<36x8xf32>
    %cst_114 = arith.constant dense<0.000000e+00> : vector<4x8xf32>
    %79 = tpu.matmul %0, %78, %cst_114 {dimension_numbers = #tpu.dot_dimension_numbers<[1], [0], [0], [1], [0, 0, 1, 1], [], []>} : vector<4x36xf32>, vector<36x8xf32>, vector<4x8xf32> -> vector<4x8xf32>
    %80 = vector.broadcast %1 : vector<4x1xf32> to vector<4x8xf32>
    %81 = arith.addf %79, %80 : vector<4x8xf32>
    %82 = arith.maximumf %61, %63 : vector<4x8xf32>
    %83 = arith.maximumf %65, %67 : vector<4x8xf32>
    %84 = arith.maximumf %82, %83 : vector<4x8xf32>
    %85 = tpu.concatenate %81, %84 in 0 : vector<4x8xf32>, vector<4x8xf32> -> vector<8x8xf32>
    %c0_115 = arith.constant 0 : index
    %c0_116 = arith.constant 0 : index
    %c2_117 = arith.constant 2 : index
    %c0_118 = arith.constant 0 : index
    %86 = vector.load %arg6[%c0_115, %c0_116, %c2_117, %c0_118] : memref<1x8x8x8xf32, #tpu.memory_space<vmem>>, vector<1x8x1x8xf32>
    %87 = vector.shape_cast %86 : vector<1x8x1x8xf32> to vector<8x8xf32>
    %88 = vector.shape_cast %85 : vector<8x8xf32> to vector<1x8x1x8xf32>
    tpu.vector_store %arg6[%c0_115, %c0_116, %c2_117, %c0_118], %88 {strides = array<i32>} : memref<1x8x8x8xf32, #tpu.memory_space<vmem>>, vector<1x8x1x8xf32>,
    %c0_119 = arith.constant 0 : index
    %c12_120 = arith.constant 12 : index
    %c3_121 = arith.constant 3 : index
    %c0_122 = arith.constant 0 : index
    %89 = vector.load %arg2[%c0_119, %c12_120, %c3_121, %c0_122] : memref<1x16x8x9xf32, #tpu.memory_space<vmem>>, vector<1x4x1x8xf32>
    %90 = vector.shape_cast %89 : vector<1x4x1x8xf32> to vector<4x8xf32>
    %c0_123 = arith.constant 0 : index
    %c8_124 = arith.constant 8 : index
    %c3_125 = arith.constant 3 : index
    %c1_126 = arith.constant 1 : index
    %91 = vector.load %arg2[%c0_123, %c8_124, %c3_125, %c1_126] : memref<1x16x8x9xf32, #tpu.memory_space<vmem>>, vector<1x4x1x8xf32>
    %92 = vector.shape_cast %91 : vector<1x4x1x8xf32> to vector<4x8xf32>
    %c0_127 = arith.constant 0 : index
    %c4_128 = arith.constant 4 : index
    %c4_129 = arith.constant 4 : index
    %c0_130 = arith.constant 0 : index
    %93 = vector.load %arg2[%c0_127, %c4_128, %c4_129, %c0_130] : memref<1x16x8x9xf32, #tpu.memory_space<vmem>>, vector<1x4x1x8xf32>
    %94 = vector.shape_cast %93 : vector<1x4x1x8xf32> to vector<4x8xf32>
    %c0_131 = arith.constant 0 : index
    %c0_132 = arith.constant 0 : index
    %c4_133 = arith.constant 4 : index
    %c1_134 = arith.constant 1 : index
    %95 = vector.load %arg2[%c0_131, %c0_132, %c4_133, %c1_134] : memref<1x16x8x9xf32, #tpu.memory_space<vmem>>, vector<1x4x1x8xf32>
    %96 = vector.shape_cast %95 : vector<1x4x1x8xf32> to vector<4x8xf32>
    %c0_135 = arith.constant 0 : index
    %c0_136 = arith.constant 0 : index
    %c3_137 = arith.constant 3 : index
    %c0_138 = arith.constant 0 : index
    %97 = vector.load %arg2[%c0_135, %c0_136, %c3_137, %c0_138] : memref<1x16x8x9xf32, #tpu.memory_space<vmem>>, vector<1x4x1x8xf32>
    %98 = vector.shape_cast %97 : vector<1x4x1x8xf32> to vector<4x8xf32>
    %c0_139 = arith.constant 0 : index
    %c4_140 = arith.constant 4 : index
    %c3_141 = arith.constant 3 : index
    %c0_142 = arith.constant 0 : index
    %99 = vector.load %arg2[%c0_139, %c4_140, %c3_141, %c0_142] : memref<1x16x8x9xf32, #tpu.memory_space<vmem>>, vector<1x4x1x8xf32>
    %100 = vector.shape_cast %99 : vector<1x4x1x8xf32> to vector<4x8xf32>
    %c0_143 = arith.constant 0 : index
    %c0_144 = arith.constant 0 : index
    %c3_145 = arith.constant 3 : index
    %c1_146 = arith.constant 1 : index
    %101 = vector.load %arg2[%c0_143, %c0_144, %c3_145, %c1_146] : memref<1x16x8x9xf32, #tpu.memory_space<vmem>>, vector<1x4x1x8xf32>
    %102 = vector.shape_cast %101 : vector<1x4x1x8xf32> to vector<4x8xf32>
    %c0_147 = arith.constant 0 : index
    %c8_148 = arith.constant 8 : index
    %c3_149 = arith.constant 3 : index
    %c0_150 = arith.constant 0 : index
    %103 = vector.load %arg2[%c0_147, %c8_148, %c3_149, %c0_150] : memref<1x16x8x9xf32, #tpu.memory_space<vmem>>, vector<1x4x1x8xf32>
    %104 = vector.shape_cast %103 : vector<1x4x1x8xf32> to vector<4x8xf32>
    %c0_151 = arith.constant 0 : index
    %c0_152 = arith.constant 0 : index
    %c4_153 = arith.constant 4 : index
    %c0_154 = arith.constant 0 : index
    %105 = vector.load %arg2[%c0_151, %c0_152, %c4_153, %c0_154] : memref<1x16x8x9xf32, #tpu.memory_space<vmem>>, vector<1x4x1x8xf32>
    %106 = vector.shape_cast %105 : vector<1x4x1x8xf32> to vector<4x8xf32>
    %107 = tpu.concatenate %98, %100, %102, %104, %90, %92, %106, %94, %96 in 0 : vector<4x8xf32>, vector<4x8xf32>, vector<4x8xf32>, vector<4x8xf32>, vector<4x8xf32>, vector<4x8xf32>, vector<4x8xf32>, vector<4x8xf32>, vector<4x8xf32> -> vector<36x8xf32>
    %cst_155 = arith.constant dense<0.000000e+00> : vector<4x8xf32>
    %108 = tpu.matmul %0, %107, %cst_155 {dimension_numbers = #tpu.dot_dimension_numbers<[1], [0], [0], [1], [0, 0, 1, 1], [], []>} : vector<4x36xf32>, vector<36x8xf32>, vector<4x8xf32> -> vector<4x8xf32>
    %109 = vector.broadcast %1 : vector<4x1xf32> to vector<4x8xf32>
    %110 = arith.addf %108, %109 : vector<4x8xf32>
    %111 = arith.maximumf %90, %92 : vector<4x8xf32>
    %112 = arith.maximumf %94, %96 : vector<4x8xf32>
    %113 = arith.maximumf %111, %112 : vector<4x8xf32>
    %114 = tpu.concatenate %110, %113 in 0 : vector<4x8xf32>, vector<4x8xf32> -> vector<8x8xf32>
    %c0_156 = arith.constant 0 : index
    %c0_157 = arith.constant 0 : index
    %c3_158 = arith.constant 3 : index
    %c0_159 = arith.constant 0 : index
    %115 = vector.load %arg6[%c0_156, %c0_157, %c3_158, %c0_159] : memref<1x8x8x8xf32, #tpu.memory_space<vmem>>, vector<1x8x1x8xf32>
    %116 = vector.shape_cast %115 : vector<1x8x1x8xf32> to vector<8x8xf32>
    %117 = vector.shape_cast %114 : vector<8x8xf32> to vector<1x8x1x8xf32>
    tpu.vector_store %arg6[%c0_156, %c0_157, %c3_158, %c0_159], %117 {strides = array<i32>} : memref<1x8x8x8xf32, #tpu.memory_space<vmem>>, vector<1x8x1x8xf32>,
    %c0_160 = arith.constant 0 : index
    %c12_161 = arith.constant 12 : index
    %c4_162 = arith.constant 4 : index
    %c0_163 = arith.constant 0 : index
    %118 = vector.load %arg2[%c0_160, %c12_161, %c4_162, %c0_163] : memref<1x16x8x9xf32, #tpu.memory_space<vmem>>, vector<1x4x1x8xf32>
    %119 = vector.shape_cast %118 : vector<1x4x1x8xf32> to vector<4x8xf32>
    %c0_164 = arith.constant 0 : index
    %c8_165 = arith.constant 8 : index
    %c4_166 = arith.constant 4 : index
    %c1_167 = arith.constant 1 : index
    %120 = vector.load %arg2[%c0_164, %c8_165, %c4_166, %c1_167] : memref<1x16x8x9xf32, #tpu.memory_space<vmem>>, vector<1x4x1x8xf32>
    %121 = vector.shape_cast %120 : vector<1x4x1x8xf32> to vector<4x8xf32>
    %c0_168 = arith.constant 0 : index
    %c4_169 = arith.constant 4 : index
    %c5 = arith.constant 5 : index
    %c0_170 = arith.constant 0 : index
    %122 = vector.load %arg2[%c0_168, %c4_169, %c5, %c0_170] : memref<1x16x8x9xf32, #tpu.memory_space<vmem>>, vector<1x4x1x8xf32>
    %123 = vector.shape_cast %122 : vector<1x4x1x8xf32> to vector<4x8xf32>
    %c0_171 = arith.constant 0 : index
    %c0_172 = arith.constant 0 : index
    %c5_173 = arith.constant 5 : index
    %c1_174 = arith.constant 1 : index
    %124 = vector.load %arg2[%c0_171, %c0_172, %c5_173, %c1_174] : memref<1x16x8x9xf32, #tpu.memory_space<vmem>>, vector<1x4x1x8xf32>
    %125 = vector.shape_cast %124 : vector<1x4x1x8xf32> to vector<4x8xf32>
    %c0_175 = arith.constant 0 : index
    %c0_176 = arith.constant 0 : index
    %c4_177 = arith.constant 4 : index
    %c0_178 = arith.constant 0 : index
    %126 = vector.load %arg2[%c0_175, %c0_176, %c4_177, %c0_178] : memref<1x16x8x9xf32, #tpu.memory_space<vmem>>, vector<1x4x1x8xf32>
    %127 = vector.shape_cast %126 : vector<1x4x1x8xf32> to vector<4x8xf32>
    %c0_179 = arith.constant 0 : index
    %c4_180 = arith.constant 4 : index
    %c4_181 = arith.constant 4 : index
    %c0_182 = arith.constant 0 : index
    %128 = vector.load %arg2[%c0_179, %c4_180, %c4_181, %c0_182] : memref<1x16x8x9xf32, #tpu.memory_space<vmem>>, vector<1x4x1x8xf32>
    %129 = vector.shape_cast %128 : vector<1x4x1x8xf32> to vector<4x8xf32>
    %c0_183 = arith.constant 0 : index
    %c0_184 = arith.constant 0 : index
    %c4_185 = arith.constant 4 : index
    %c1_186 = arith.constant 1 : index
    %130 = vector.load %arg2[%c0_183, %c0_184, %c4_185, %c1_186] : memref<1x16x8x9xf32, #tpu.memory_space<vmem>>, vector<1x4x1x8xf32>
    %131 = vector.shape_cast %130 : vector<1x4x1x8xf32> to vector<4x8xf32>
    %c0_187 = arith.constant 0 : index
    %c8_188 = arith.constant 8 : index
    %c4_189 = arith.constant 4 : index
    %c0_190 = arith.constant 0 : index
    %132 = vector.load %arg2[%c0_187, %c8_188, %c4_189, %c0_190] : memref<1x16x8x9xf32, #tpu.memory_space<vmem>>, vector<1x4x1x8xf32>
    %133 = vector.shape_cast %132 : vector<1x4x1x8xf32> to vector<4x8xf32>
    %c0_191 = arith.constant 0 : index
    %c0_192 = arith.constant 0 : index
    %c5_193 = arith.constant 5 : index
    %c0_194 = arith.constant 0 : index
    %134 = vector.load %arg2[%c0_191, %c0_192, %c5_193, %c0_194] : memref<1x16x8x9xf32, #tpu.memory_space<vmem>>, vector<1x4x1x8xf32>
    %135 = vector.shape_cast %134 : vector<1x4x1x8xf32> to vector<4x8xf32>
    %136 = tpu.concatenate %127, %129, %131, %133, %119, %121, %135, %123, %125 in 0 : vector<4x8xf32>, vector<4x8xf32>, vector<4x8xf32>, vector<4x8xf32>, vector<4x8xf32>, vector<4x8xf32>, vector<4x8xf32>, vector<4x8xf32>, vector<4x8xf32> -> vector<36x8xf32>
    %cst_195 = arith.constant dense<0.000000e+00> : vector<4x8xf32>
    %137 = tpu.matmul %0, %136, %cst_195 {dimension_numbers = #tpu.dot_dimension_numbers<[1], [0], [0], [1], [0, 0, 1, 1], [], []>} : vector<4x36xf32>, vector<36x8xf32>, vector<4x8xf32> -> vector<4x8xf32>
    %138 = vector.broadcast %1 : vector<4x1xf32> to vector<4x8xf32>
    %139 = arith.addf %137, %138 : vector<4x8xf32>
    %140 = arith.maximumf %119, %121 : vector<4x8xf32>
    %141 = arith.maximumf %123, %125 : vector<4x8xf32>
    %142 = arith.maximumf %140, %141 : vector<4x8xf32>
    %143 = tpu.concatenate %139, %142 in 0 : vector<4x8xf32>, vector<4x8xf32> -> vector<8x8xf32>
    %c0_196 = arith.constant 0 : index
    %c0_197 = arith.constant 0 : index
    %c4_198 = arith.constant 4 : index
    %c0_199 = arith.constant 0 : index
    %144 = vector.load %arg6[%c0_196, %c0_197, %c4_198, %c0_199] : memref<1x8x8x8xf32, #tpu.memory_space<vmem>>, vector<1x8x1x8xf32>
    %145 = vector.shape_cast %144 : vector<1x8x1x8xf32> to vector<8x8xf32>
    %146 = vector.shape_cast %143 : vector<8x8xf32> to vector<1x8x1x8xf32>
    tpu.vector_store %arg6[%c0_196, %c0_197, %c4_198, %c0_199], %146 {strides = array<i32>} : memref<1x8x8x8xf32, #tpu.memory_space<vmem>>, vector<1x8x1x8xf32>,
    %c0_200 = arith.constant 0 : index
    %c12_201 = arith.constant 12 : index
    %c5_202 = arith.constant 5 : index
    %c0_203 = arith.constant 0 : index
    %147 = vector.load %arg2[%c0_200, %c12_201, %c5_202, %c0_203] : memref<1x16x8x9xf32, #tpu.memory_space<vmem>>, vector<1x4x1x8xf32>
    %148 = vector.shape_cast %147 : vector<1x4x1x8xf32> to vector<4x8xf32>
    %c0_204 = arith.constant 0 : index
    %c8_205 = arith.constant 8 : index
    %c5_206 = arith.constant 5 : index
    %c1_207 = arith.constant 1 : index
    %149 = vector.load %arg2[%c0_204, %c8_205, %c5_206, %c1_207] : memref<1x16x8x9xf32, #tpu.memory_space<vmem>>, vector<1x4x1x8xf32>
    %150 = vector.shape_cast %149 : vector<1x4x1x8xf32> to vector<4x8xf32>
    %c0_208 = arith.constant 0 : index
    %c4_209 = arith.constant 4 : index
    %c6 = arith.constant 6 : index
    %c0_210 = arith.constant 0 : index
    %151 = vector.load %arg2[%c0_208, %c4_209, %c6, %c0_210] : memref<1x16x8x9xf32, #tpu.memory_space<vmem>>, vector<1x4x1x8xf32>
    %152 = vector.shape_cast %151 : vector<1x4x1x8xf32> to vector<4x8xf32>
    %c0_211 = arith.constant 0 : index
    %c0_212 = arith.constant 0 : index
    %c6_213 = arith.constant 6 : index
    %c1_214 = arith.constant 1 : index
    %153 = vector.load %arg2[%c0_211, %c0_212, %c6_213, %c1_214] : memref<1x16x8x9xf32, #tpu.memory_space<vmem>>, vector<1x4x1x8xf32>
    %154 = vector.shape_cast %153 : vector<1x4x1x8xf32> to vector<4x8xf32>
    %c0_215 = arith.constant 0 : index
    %c0_216 = arith.constant 0 : index
    %c5_217 = arith.constant 5 : index
    %c0_218 = arith.constant 0 : index
    %155 = vector.load %arg2[%c0_215, %c0_216, %c5_217, %c0_218] : memref<1x16x8x9xf32, #tpu.memory_space<vmem>>, vector<1x4x1x8xf32>
    %156 = vector.shape_cast %155 : vector<1x4x1x8xf32> to vector<4x8xf32>
    %c0_219 = arith.constant 0 : index
    %c4_220 = arith.constant 4 : index
    %c5_221 = arith.constant 5 : index
    %c0_222 = arith.constant 0 : index
    %157 = vector.load %arg2[%c0_219, %c4_220, %c5_221, %c0_222] : memref<1x16x8x9xf32, #tpu.memory_space<vmem>>, vector<1x4x1x8xf32>
    %158 = vector.shape_cast %157 : vector<1x4x1x8xf32> to vector<4x8xf32>
    %c0_223 = arith.constant 0 : index
    %c0_224 = arith.constant 0 : index
    %c5_225 = arith.constant 5 : index
    %c1_226 = arith.constant 1 : index
    %159 = vector.load %arg2[%c0_223, %c0_224, %c5_225, %c1_226] : memref<1x16x8x9xf32, #tpu.memory_space<vmem>>, vector<1x4x1x8xf32>
    %160 = vector.shape_cast %159 : vector<1x4x1x8xf32> to vector<4x8xf32>
    %c0_227 = arith.constant 0 : index
    %c8_228 = arith.constant 8 : index
    %c5_229 = arith.constant 5 : index
    %c0_230 = arith.constant 0 : index
    %161 = vector.load %arg2[%c0_227, %c8_228, %c5_229, %c0_230] : memref<1x16x8x9xf32, #tpu.memory_space<vmem>>, vector<1x4x1x8xf32>
    %162 = vector.shape_cast %161 : vector<1x4x1x8xf32> to vector<4x8xf32>
    %c0_231 = arith.constant 0 : index
    %c0_232 = arith.constant 0 : index
    %c6_233 = arith.constant 6 : index
    %c0_234 = arith.constant 0 : index
    %163 = vector.load %arg2[%c0_231, %c0_232, %c6_233, %c0_234] : memref<1x16x8x9xf32, #tpu.memory_space<vmem>>, vector<1x4x1x8xf32>
    %164 = vector.shape_cast %163 : vector<1x4x1x8xf32> to vector<4x8xf32>
    %165 = tpu.concatenate %156, %158, %160, %162, %148, %150, %164, %152, %154 in 0 : vector<4x8xf32>, vector<4x8xf32>, vector<4x8xf32>, vector<4x8xf32>, vector<4x8xf32>, vector<4x8xf32>, vector<4x8xf32>, vector<4x8xf32>, vector<4x8xf32> -> vector<36x8xf32>
    %cst_235 = arith.constant dense<0.000000e+00> : vector<4x8xf32>
    %166 = tpu.matmul %0, %165, %cst_235 {dimension_numbers = #tpu.dot_dimension_numbers<[1], [0], [0], [1], [0, 0, 1, 1], [], []>} : vector<4x36xf32>, vector<36x8xf32>, vector<4x8xf32> -> vector<4x8xf32>
    %167 = vector.broadcast %1 : vector<4x1xf32> to vector<4x8xf32>
    %168 = arith.addf %166, %167 : vector<4x8xf32>
    %169 = arith.maximumf %148, %150 : vector<4x8xf32>
    %170 = arith.maximumf %152, %154 : vector<4x8xf32>
    %171 = arith.maximumf %169, %170 : vector<4x8xf32>
    %172 = tpu.concatenate %168, %171 in 0 : vector<4x8xf32>, vector<4x8xf32> -> vector<8x8xf32>
    %c0_236 = arith.constant 0 : index
    %c0_237 = arith.constant 0 : index
    %c5_238 = arith.constant 5 : index
    %c0_239 = arith.constant 0 : index
    %173 = vector.load %arg6[%c0_236, %c0_237, %c5_238, %c0_239] : memref<1x8x8x8xf32, #tpu.memory_space<vmem>>, vector<1x8x1x8xf32>
    %174 = vector.shape_cast %173 : vector<1x8x1x8xf32> to vector<8x8xf32>
    %175 = vector.shape_cast %172 : vector<8x8xf32> to vector<1x8x1x8xf32>
    tpu.vector_store %arg6[%c0_236, %c0_237, %c5_238, %c0_239], %175 {strides = array<i32>} : memref<1x8x8x8xf32, #tpu.memory_space<vmem>>, vector<1x8x1x8xf32>,
    %c0_240 = arith.constant 0 : index
    %c12_241 = arith.constant 12 : index
    %c6_242 = arith.constant 6 : index
    %c0_243 = arith.constant 0 : index
    %176 = vector.load %arg2[%c0_240, %c12_241, %c6_242, %c0_243] : memref<1x16x8x9xf32, #tpu.memory_space<vmem>>, vector<1x4x1x8xf32>
    %177 = vector.shape_cast %176 : vector<1x4x1x8xf32> to vector<4x8xf32>
    %c0_244 = arith.constant 0 : index
    %c8_245 = arith.constant 8 : index
    %c6_246 = arith.constant 6 : index
    %c1_247 = arith.constant 1 : index
    %178 = vector.load %arg2[%c0_244, %c8_245, %c6_246, %c1_247] : memref<1x16x8x9xf32, #tpu.memory_space<vmem>>, vector<1x4x1x8xf32>
    %179 = vector.shape_cast %178 : vector<1x4x1x8xf32> to vector<4x8xf32>
    %c0_248 = arith.constant 0 : index
    %c4_249 = arith.constant 4 : index
    %c7 = arith.constant 7 : index
    %c0_250 = arith.constant 0 : index
    %180 = vector.load %arg2[%c0_248, %c4_249, %c7, %c0_250] : memref<1x16x8x9xf32, #tpu.memory_space<vmem>>, vector<1x4x1x8xf32>
    %181 = vector.shape_cast %180 : vector<1x4x1x8xf32> to vector<4x8xf32>
    %c0_251 = arith.constant 0 : index
    %c0_252 = arith.constant 0 : index
    %c7_253 = arith.constant 7 : index
    %c1_254 = arith.constant 1 : index
    %182 = vector.load %arg2[%c0_251, %c0_252, %c7_253, %c1_254] : memref<1x16x8x9xf32, #tpu.memory_space<vmem>>, vector<1x4x1x8xf32>
    %183 = vector.shape_cast %182 : vector<1x4x1x8xf32> to vector<4x8xf32>
    %c0_255 = arith.constant 0 : index
    %c0_256 = arith.constant 0 : index
    %c6_257 = arith.constant 6 : index
    %c0_258 = arith.constant 0 : index
    %184 = vector.load %arg2[%c0_255, %c0_256, %c6_257, %c0_258] : memref<1x16x8x9xf32, #tpu.memory_space<vmem>>, vector<1x4x1x8xf32>
    %185 = vector.shape_cast %184 : vector<1x4x1x8xf32> to vector<4x8xf32>
    %c0_259 = arith.constant 0 : index
    %c4_260 = arith.constant 4 : index
    %c6_261 = arith.constant 6 : index
    %c0_262 = arith.constant 0 : index
    %186 = vector.load %arg2[%c0_259, %c4_260, %c6_261, %c0_262] : memref<1x16x8x9xf32, #tpu.memory_space<vmem>>, vector<1x4x1x8xf32>
    %187 = vector.shape_cast %186 : vector<1x4x1x8xf32> to vector<4x8xf32>
    %c0_263 = arith.constant 0 : index
    %c0_264 = arith.constant 0 : index
    %c6_265 = arith.constant 6 : index
    %c1_266 = arith.constant 1 : index
    %188 = vector.load %arg2[%c0_263, %c0_264, %c6_265, %c1_266] : memref<1x16x8x9xf32, #tpu.memory_space<vmem>>, vector<1x4x1x8xf32>
    %189 = vector.shape_cast %188 : vector<1x4x1x8xf32> to vector<4x8xf32>
    %c0_267 = arith.constant 0 : index
    %c8_268 = arith.constant 8 : index
    %c6_269 = arith.constant 6 : index
    %c0_270 = arith.constant 0 : index
    %190 = vector.load %arg2[%c0_267, %c8_268, %c6_269, %c0_270] : memref<1x16x8x9xf32, #tpu.memory_space<vmem>>, vector<1x4x1x8xf32>
    %191 = vector.shape_cast %190 : vector<1x4x1x8xf32> to vector<4x8xf32>
    %c0_271 = arith.constant 0 : index
    %c0_272 = arith.constant 0 : index
    %c7_273 = arith.constant 7 : index
    %c0_274 = arith.constant 0 : index
    %192 = vector.load %arg2[%c0_271, %c0_272, %c7_273, %c0_274] : memref<1x16x8x9xf32, #tpu.memory_space<vmem>>, vector<1x4x1x8xf32>
    %193 = vector.shape_cast %192 : vector<1x4x1x8xf32> to vector<4x8xf32>
    %194 = tpu.concatenate %185, %187, %189, %191, %177, %179, %193, %181, %183 in 0 : vector<4x8xf32>, vector<4x8xf32>, vector<4x8xf32>, vector<4x8xf32>, vector<4x8xf32>, vector<4x8xf32>, vector<4x8xf32>, vector<4x8xf32>, vector<4x8xf32> -> vector<36x8xf32>
    %cst_275 = arith.constant dense<0.000000e+00> : vector<4x8xf32>
    %195 = tpu.matmul %0, %194, %cst_275 {dimension_numbers = #tpu.dot_dimension_numbers<[1], [0], [0], [1], [0, 0, 1, 1], [], []>} : vector<4x36xf32>, vector<36x8xf32>, vector<4x8xf32> -> vector<4x8xf32>
    %196 = vector.broadcast %1 : vector<4x1xf32> to vector<4x8xf32>
    %197 = arith.addf %195, %196 : vector<4x8xf32>
    %198 = arith.maximumf %177, %179 : vector<4x8xf32>
    %199 = arith.maximumf %181, %183 : vector<4x8xf32>
    %200 = arith.maximumf %198, %199 : vector<4x8xf32>
    %201 = tpu.concatenate %197, %200 in 0 : vector<4x8xf32>, vector<4x8xf32> -> vector<8x8xf32>
    %c0_276 = arith.constant 0 : index
    %c0_277 = arith.constant 0 : index
    %c6_278 = arith.constant 6 : index
    %c0_279 = arith.constant 0 : index
    %202 = vector.load %arg6[%c0_276, %c0_277, %c6_278, %c0_279] : memref<1x8x8x8xf32, #tpu.memory_space<vmem>>, vector<1x8x1x8xf32>
    %203 = vector.shape_cast %202 : vector<1x8x1x8xf32> to vector<8x8xf32>
    %204 = vector.shape_cast %201 : vector<8x8xf32> to vector<1x8x1x8xf32>
    tpu.vector_store %arg6[%c0_276, %c0_277, %c6_278, %c0_279], %204 {strides = array<i32>} : memref<1x8x8x8xf32, #tpu.memory_space<vmem>>, vector<1x8x1x8xf32>,
    %c0_280 = arith.constant 0 : index
    %c12_281 = arith.constant 12 : index
    %c7_282 = arith.constant 7 : index
    %c0_283 = arith.constant 0 : index
    %205 = vector.load %arg2[%c0_280, %c12_281, %c7_282, %c0_283] : memref<1x16x8x9xf32, #tpu.memory_space<vmem>>, vector<1x4x1x8xf32>
    %206 = vector.shape_cast %205 : vector<1x4x1x8xf32> to vector<4x8xf32>
    %c0_284 = arith.constant 0 : index
    %c8_285 = arith.constant 8 : index
    %c7_286 = arith.constant 7 : index
    %c1_287 = arith.constant 1 : index
    %207 = vector.load %arg2[%c0_284, %c8_285, %c7_286, %c1_287] : memref<1x16x8x9xf32, #tpu.memory_space<vmem>>, vector<1x4x1x8xf32>
    %208 = vector.shape_cast %207 : vector<1x4x1x8xf32> to vector<4x8xf32>
    %c0_288 = arith.constant 0 : index
    %c0_289 = arith.constant 0 : index
    %c4_290 = arith.constant 4 : index
    %c0_291 = arith.constant 0 : index
    %209 = vector.load %arg3[%c0_288, %c0_289, %c4_290, %c0_291] : memref<1x1x8x9xf32, #tpu.memory_space<vmem>>, vector<1x1x4x8xf32>
    %210 = vector.shape_cast %209 : vector<1x1x4x8xf32> to vector<4x8xf32>
    %c0_292 = arith.constant 0 : index
    %c0_293 = arith.constant 0 : index
    %c0_294 = arith.constant 0 : index
    %c1_295 = arith.constant 1 : index
    %211 = vector.load %arg3[%c0_292, %c0_293, %c0_294, %c1_295] : memref<1x1x8x9xf32, #tpu.memory_space<vmem>>, vector<1x1x4x8xf32>
    %212 = vector.shape_cast %211 : vector<1x1x4x8xf32> to vector<4x8xf32>
    %c0_296 = arith.constant 0 : index
    %c0_297 = arith.constant 0 : index
    %c7_298 = arith.constant 7 : index
    %c0_299 = arith.constant 0 : index
    %213 = vector.load %arg2[%c0_296, %c0_297, %c7_298, %c0_299] : memref<1x16x8x9xf32, #tpu.memory_space<vmem>>, vector<1x4x1x8xf32>
    %214 = vector.shape_cast %213 : vector<1x4x1x8xf32> to vector<4x8xf32>
    %c0_300 = arith.constant 0 : index
    %c4_301 = arith.constant 4 : index
    %c7_302 = arith.constant 7 : index
    %c0_303 = arith.constant 0 : index
    %215 = vector.load %arg2[%c0_300, %c4_301, %c7_302, %c0_303] : memref<1x16x8x9xf32, #tpu.memory_space<vmem>>, vector<1x4x1x8xf32>
    %216 = vector.shape_cast %215 : vector<1x4x1x8xf32> to vector<4x8xf32>
    %c0_304 = arith.constant 0 : index
    %c0_305 = arith.constant 0 : index
    %c7_306 = arith.constant 7 : index
    %c1_307 = arith.constant 1 : index
    %217 = vector.load %arg2[%c0_304, %c0_305, %c7_306, %c1_307] : memref<1x16x8x9xf32, #tpu.memory_space<vmem>>, vector<1x4x1x8xf32>
    %218 = vector.shape_cast %217 : vector<1x4x1x8xf32> to vector<4x8xf32>
    %c0_308 = arith.constant 0 : index
    %c8_309 = arith.constant 8 : index
    %c7_310 = arith.constant 7 : index
    %c0_311 = arith.constant 0 : index
    %219 = vector.load %arg2[%c0_308, %c8_309, %c7_310, %c0_311] : memref<1x16x8x9xf32, #tpu.memory_space<vmem>>, vector<1x4x1x8xf32>
    %220 = vector.shape_cast %219 : vector<1x4x1x8xf32> to vector<4x8xf32>
    %c0_312 = arith.constant 0 : index
    %c0_313 = arith.constant 0 : index
    %c0_314 = arith.constant 0 : index
    %c0_315 = arith.constant 0 : index
    %221 = vector.load %arg3[%c0_312, %c0_313, %c0_314, %c0_315] : memref<1x1x8x9xf32, #tpu.memory_space<vmem>>, vector<1x1x4x8xf32>
    %222 = vector.shape_cast %221 : vector<1x1x4x8xf32> to vector<4x8xf32>
    %223 = tpu.concatenate %214, %216, %218, %220, %206, %208, %222, %210, %212 in 0 : vector<4x8xf32>, vector<4x8xf32>, vector<4x8xf32>, vector<4x8xf32>, vector<4x8xf32>, vector<4x8xf32>, vector<4x8xf32>, vector<4x8xf32>, vector<4x8xf32> -> vector<36x8xf32>
    %cst_316 = arith.constant dense<0.000000e+00> : vector<4x8xf32>
    %224 = tpu.matmul %0, %223, %cst_316 {dimension_numbers = #tpu.dot_dimension_numbers<[1], [0], [0], [1], [0, 0, 1, 1], [], []>} : vector<4x36xf32>, vector<36x8xf32>, vector<4x8xf32> -> vector<4x8xf32>
    %225 = vector.broadcast %1 : vector<4x1xf32> to vector<4x8xf32>
    %226 = arith.addf %224, %225 : vector<4x8xf32>
    %227 = arith.maximumf %206, %208 : vector<4x8xf32>
    %228 = arith.maximumf %210, %212 : vector<4x8xf32>
    %229 = arith.maximumf %227, %228 : vector<4x8xf32>
    %230 = tpu.concatenate %226, %229 in 0 : vector<4x8xf32>, vector<4x8xf32> -> vector<8x8xf32>
    %c0_317 = arith.constant 0 : index
    %c0_318 = arith.constant 0 : index
    %c7_319 = arith.constant 7 : index
    %c0_320 = arith.constant 0 : index
    %231 = vector.load %arg6[%c0_317, %c0_318, %c7_319, %c0_320] : memref<1x8x8x8xf32, #tpu.memory_space<vmem>>, vector<1x8x1x8xf32>
    %232 = vector.shape_cast %231 : vector<1x8x1x8xf32> to vector<8x8xf32>
    %233 = vector.shape_cast %230 : vector<8x8xf32> to vector<1x8x1x8xf32>
    tpu.vector_store %arg6[%c0_317, %c0_318, %c7_319, %c0_320], %233 {strides = array<i32>} : memref<1x8x8x8xf32, #tpu.memory_space<vmem>>, vector<1x8x1x8xf32>,
    %c0_321 = arith.constant 0 : index
    %c0_322 = arith.constant 0 : index
    %c0_323 = arith.constant 0 : index
    %c0_324 = arith.constant 0 : index
    %234 = vector.load %arg6[%c0_321, %c0_322, %c0_323, %c0_324] : memref<1x8x8x8xf32, #tpu.memory_space<vmem>>, vector<1x8x8x8xf32>
    %235 = vector.shape_cast %234 : vector<1x8x8x8xf32> to vector<8x8x8xf32>
    %c8_i32 = arith.constant 8 : i32
    %236 = arith.muli %arg1, %c8_i32 : i32
    %c8_i32_325 = arith.constant 8 : i32
    %237 = arith.subi %c8_i32_325, %236 : i32
    %c8_i32_326 = arith.constant 8 : i32
    %238 = arith.minsi %c8_i32_326, %237 : i32
    %c8_i32_327 = arith.constant 8 : i32
    %239 = arith.cmpi eq, %238, %c8_i32_327 : i32
    %240 = arith.extui %239 : i1 to i32
    %c0_i32 = arith.constant 0 : i32
    %241 = arith.cmpi ne, %240, %c0_i32 : i32
    scf.if %241 {
      %cst_330 = arith.constant dense<0.000000e+00> : vector<8x8xf32>
      %245 = vector.multi_reduction <add>, %235, %cst_330 [2] : vector<8x8x8xf32> to vector<8x8xf32>
      %cst_331 = arith.constant dense<0.000000e+00> : vector<8xf32>
      %246 = vector.multi_reduction <add>, %245, %cst_331 [1] : vector<8x8xf32> to vector<8xf32>
      %cst_332 = arith.constant 1.562500e-02 : f32
      %247 = vector.broadcast %cst_332 : f32 to vector<8xf32>
      %248 = arith.mulf %246, %247 : vector<8xf32>
      %249 = vector.shape_cast %248 : vector<8xf32> to vector<8x1x1xf32>
      %250 = vector.broadcast %249 : vector<8x1x1xf32> to vector<8x8x8xf32>
      %251 = arith.subf %235, %250 : vector<8x8x8xf32>
      %252 = arith.mulf %251, %251 : vector<8x8x8xf32>
      %cst_333 = arith.constant dense<0.000000e+00> : vector<8x8xf32>
      %253 = vector.multi_reduction <add>, %252, %cst_333 [2] : vector<8x8x8xf32> to vector<8x8xf32>
      %cst_334 = arith.constant dense<0.000000e+00> : vector<8xf32>
      %254 = vector.multi_reduction <add>, %253, %cst_334 [1] : vector<8x8xf32> to vector<8xf32>
      %255 = vector.shape_cast %246 : vector<8xf32> to vector<1x8xf32>
      %c0_335 = arith.constant 0 : index
      %c0_336 = arith.constant 0 : index
      %c0_337 = arith.constant 0 : index
      %c0_338 = arith.constant 0 : index
      %256 = vector.load %arg7[%c0_335, %c0_336, %c0_337, %c0_338] : memref<1x1x1x8xf32, #tpu.memory_space<vmem>>, vector<1x1x1x8xf32>
      %257 = vector.shape_cast %256 : vector<1x1x1x8xf32> to vector<1x8xf32>
      %258 = vector.shape_cast %255 : vector<1x8xf32> to vector<1x1x1x8xf32>
      tpu.vector_store %arg7[%c0_335, %c0_336, %c0_337, %c0_338], %258 {strides = array<i32>} : memref<1x1x1x8xf32, #tpu.memory_space<vmem>>, vector<1x1x1x8xf32>,
      %259 = vector.shape_cast %254 : vector<8xf32> to vector<1x8xf32>
      %c0_339 = arith.constant 0 : index
      %c0_340 = arith.constant 0 : index
      %c0_341 = arith.constant 0 : index
      %c0_342 = arith.constant 0 : index
      %260 = vector.load %arg8[%c0_339, %c0_340, %c0_341, %c0_342] : memref<1x1x1x8xf32, #tpu.memory_space<vmem>>, vector<1x1x1x8xf32>
      %261 = vector.shape_cast %260 : vector<1x1x1x8xf32> to vector<1x8xf32>
      %262 = vector.shape_cast %259 : vector<1x8xf32> to vector<1x1x1x8xf32>
      tpu.vector_store %arg8[%c0_339, %c0_340, %c0_341, %c0_342], %262 {strides = array<i32>} : memref<1x1x1x8xf32, #tpu.memory_space<vmem>>, vector<1x1x1x8xf32>,
    } else {
    }
    %c8_i32_328 = arith.constant 8 : i32
    %242 = arith.cmpi slt, %238, %c8_i32_328 : i32
    %243 = arith.extui %242 : i1 to i32
    %c0_i32_329 = arith.constant 0 : i32
    %244 = arith.cmpi ne, %243, %c0_i32_329 : i32
    scf.if %244 {
      %245 = tpu.iota {dimensions = array<i32: 1>} : vector<1x8x1xi32>
      %246 = vector.broadcast %238 : i32 to vector<1x8x1xi32>
      %247 = arith.cmpi slt, %245, %246 : vector<1x8x1xi32>
      %c8_i32_330 = arith.constant 8 : i32
      %248 = arith.muli %238, %c8_i32_330 : i32
      %249 = arith.sitofp %248 : i32 to f32
      %cst_331 = arith.constant 0.000000e+00 : f32
      %250 = vector.shape_cast %247 : vector<1x8x1xi1> to vector<1x8x1xi1>
      %251 = vector.broadcast %250 : vector<1x8x1xi1> to vector<8x8x8xi1>
      %252 = vector.broadcast %cst_331 : f32 to vector<8x8x8xf32>
      %253 = arith.select %251, %235, %252 : vector<8x8x8xi1>, vector<8x8x8xf32>
      %cst_332 = arith.constant dense<0.000000e+00> : vector<8x8xf32>
      %254 = vector.multi_reduction <add>, %253, %cst_332 [2] : vector<8x8x8xf32> to vector<8x8xf32>
      %cst_333 = arith.constant dense<0.000000e+00> : vector<8xf32>
      %255 = vector.multi_reduction <add>, %254, %cst_333 [1] : vector<8x8xf32> to vector<8xf32>
      %256 = vector.broadcast %249 : f32 to vector<8xf32>
      %257 = arith.divf %255, %256 : vector<8xf32>
      %258 = vector.shape_cast %257 : vector<8xf32> to vector<8x1x1xf32>
      %259 = vector.broadcast %258 : vector<8x1x1xf32> to vector<8x8x8xf32>
      %260 = arith.subf %235, %259 : vector<8x8x8xf32>
      %cst_334 = arith.constant 0.000000e+00 : f32
      %261 = vector.shape_cast %247 : vector<1x8x1xi1> to vector<1x8x1xi1>
      %262 = vector.broadcast %261 : vector<1x8x1xi1> to vector<8x8x8xi1>
      %263 = vector.broadcast %cst_334 : f32 to vector<8x8x8xf32>
      %264 = arith.select %262, %260, %263 : vector<8x8x8xi1>, vector<8x8x8xf32>
      %265 = arith.mulf %264, %264 : vector<8x8x8xf32>
      %cst_335 = arith.constant dense<0.000000e+00> : vector<8x8xf32>
      %266 = vector.multi_reduction <add>, %265, %cst_335 [2] : vector<8x8x8xf32> to vector<8x8xf32>
      %cst_336 = arith.constant dense<0.000000e+00> : vector<8xf32>
      %267 = vector.multi_reduction <add>, %266, %cst_336 [1] : vector<8x8xf32> to vector<8xf32>
      %268 = vector.shape_cast %255 : vector<8xf32> to vector<1x8xf32>
      %c0_337 = arith.constant 0 : index
      %c0_338 = arith.constant 0 : index
      %c0_339 = arith.constant 0 : index
      %c0_340 = arith.constant 0 : index
      %269 = vector.load %arg7[%c0_337, %c0_338, %c0_339, %c0_340] : memref<1x1x1x8xf32, #tpu.memory_space<vmem>>, vector<1x1x1x8xf32>
      %270 = vector.shape_cast %269 : vector<1x1x1x8xf32> to vector<1x8xf32>
      %271 = vector.shape_cast %268 : vector<1x8xf32> to vector<1x1x1x8xf32>
      tpu.vector_store %arg7[%c0_337, %c0_338, %c0_339, %c0_340], %271 {strides = array<i32>} : memref<1x1x1x8xf32, #tpu.memory_space<vmem>>, vector<1x1x1x8xf32>,
      %272 = vector.shape_cast %267 : vector<8xf32> to vector<1x8xf32>
      %c0_341 = arith.constant 0 : index
      %c0_342 = arith.constant 0 : index
      %c0_343 = arith.constant 0 : index
      %c0_344 = arith.constant 0 : index
      %273 = vector.load %arg8[%c0_341, %c0_342, %c0_343, %c0_344] : memref<1x1x1x8xf32, #tpu.memory_space<vmem>>, vector<1x1x1x8xf32>
      %274 = vector.shape_cast %273 : vector<1x1x1x8xf32> to vector<1x8xf32>
      %275 = vector.shape_cast %272 : vector<1x8xf32> to vector<1x1x1x8xf32>
      tpu.vector_store %arg8[%c0_341, %c0_342, %c0_343, %c0_344], %275 {strides = array<i32>} : memref<1x1x1x8xf32, #tpu.memory_space<vmem>>, vector<1x1x1x8xf32>,
    } else {
    }
    return
  }
  func.func @transform_0(%arg0: i32, %arg1: i32) -> (i32, i32, i32, i32) {
    %c0_i32 = arith.constant 0 : i32
    %c0_i32_0 = arith.constant 0 : i32
    %c0_i32_1 = arith.constant 0 : i32
    return %arg0, %c0_i32, %arg1, %c0_i32_0 : i32, i32, i32, i32
  }
  func.func @transform_1(%arg0: i32, %arg1: i32) -> (i32, i32, i32, i32) {
    %c0_i32 = arith.constant 0 : i32
    %c0_i32_0 = arith.constant 0 : i32
    %c0_i32_1 = arith.constant 0 : i32
    return %arg0, %arg1, %c0_i32, %c0_i32_0 : i32, i32, i32, i32
  }
  func.func @transform_2(%arg0: i32, %arg1: i32) -> (i32, i32) {
    %c0_i32 = arith.constant 0 : i32
    %c0_i32_0 = arith.constant 0 : i32
    %c0_i32_1 = arith.constant 0 : i32
    return %c0_i32, %c0_i32_0 : i32, i32
  }
  func.func @transform_3(%arg0: i32, %arg1: i32) -> (i32, i32) {
    %c0_i32 = arith.constant 0 : i32
    %c0_i32_0 = arith.constant 0 : i32
    %c0_i32_1 = arith.constant 0 : i32
    return %c0_i32, %c0_i32_0 : i32, i32
  }
  func.func @transform_4(%arg0: i32, %arg1: i32) -> (i32, i32, i32, i32) {
    %c0_i32 = arith.constant 0 : i32
    %c0_i32_0 = arith.constant 0 : i32
    %c0_i32_1 = arith.constant 0 : i32
    return %arg0, %c0_i32, %arg1, %c0_i32_0 : i32, i32, i32, i32
  }
  func.func @transform_5(%arg0: i32, %arg1: i32) -> (i32, i32, i32, i32) {
    %c0_i32 = arith.constant 0 : i32
    %c0_i32_0 = arith.constant 0 : i32
    %c0_i32_1 = arith.constant 0 : i32
    return %arg0, %arg1, %c0_i32, %c0_i32_0 : i32, i32, i32, i32
  }
  func.func @transform_6(%arg0: i32, %arg1: i32) -> (i32, i32, i32, i32) {
    %c0_i32 = arith.constant 0 : i32
    %c0_i32_0 = arith.constant 0 : i32
    %c0_i32_1 = arith.constant 0 : i32
    return %arg0, %arg1, %c0_i32, %c0_i32_0 : i32, i32, i32, i32
  }
}

module attributes {stable_mosaic.version = 11 : i64} {
  func.func @pass2_kernel(%arg0: i32, %arg1: i32, %arg2: memref<1x8x8x8xf32, #tpu.memory_space<vmem>>, %arg3: memref<8x1x1xf32, #tpu.memory_space<vmem>>, %arg4: memref<8x1x1xf32, #tpu.memory_space<vmem>>, %arg5: memref<1x8x8x8xf32, #tpu.memory_space<vmem>>) attributes {dimension_semantics = [#tpu.dimension_semantics<parallel>, #tpu.dimension_semantics<parallel>], iteration_bounds = array<i64: 2, 1>, scalar_prefetch = 0 : i64, scratch_operands = 0 : i64, tpu.core_type = #tpu.core_type<tc>, window_params = [{transform_indices = @transform_0, window_bounds = array<i64: 1, 8, 8, 8>}, {pipeline_mode = #tpu.pipeline_mode<synchronous>, transform_indices = @transform_1, window_bounds = array<i64: 8, 1, 1>}, {pipeline_mode = #tpu.pipeline_mode<synchronous>, transform_indices = @transform_2, window_bounds = array<i64: 8, 1, 1>}, {transform_indices = @transform_3, window_bounds = array<i64: 1, 8, 8, 8>}]} {
    %c0 = arith.constant 0 : index
    %c0_0 = arith.constant 0 : index
    %c0_1 = arith.constant 0 : index
    %c0_2 = arith.constant 0 : index
    %0 = vector.load %arg2[%c0, %c0_0, %c0_1, %c0_2] : memref<1x8x8x8xf32, #tpu.memory_space<vmem>>, vector<1x8x8x8xf32>
    %1 = vector.shape_cast %0 : vector<1x8x8x8xf32> to vector<8x8x8xf32>
    %c0_3 = arith.constant 0 : index
    %c0_4 = arith.constant 0 : index
    %c0_5 = arith.constant 0 : index
    %2 = vector.load %arg3[%c0_3, %c0_4, %c0_5] : memref<8x1x1xf32, #tpu.memory_space<vmem>>, vector<8x1x1xf32>
    %3 = vector.broadcast %2 : vector<8x1x1xf32> to vector<8x8x8xf32>
    %4 = arith.mulf %1, %3 : vector<8x8x8xf32>
    %c0_6 = arith.constant 0 : index
    %c0_7 = arith.constant 0 : index
    %c0_8 = arith.constant 0 : index
    %5 = vector.load %arg4[%c0_6, %c0_7, %c0_8] : memref<8x1x1xf32, #tpu.memory_space<vmem>>, vector<8x1x1xf32>
    %6 = vector.broadcast %5 : vector<8x1x1xf32> to vector<8x8x8xf32>
    %7 = arith.addf %4, %6 : vector<8x8x8xf32>
    %cst = arith.constant 0.000000e+00 : f32
    %8 = vector.broadcast %cst : f32 to vector<8x8x8xf32>
    %9 = arith.maximumf %7, %8 : vector<8x8x8xf32>
    %c0_9 = arith.constant 0 : index
    %c0_10 = arith.constant 0 : index
    %c0_11 = arith.constant 0 : index
    %c0_12 = arith.constant 0 : index
    %10 = vector.load %arg5[%c0_9, %c0_10, %c0_11, %c0_12] : memref<1x8x8x8xf32, #tpu.memory_space<vmem>>, vector<1x8x8x8xf32>
    %11 = vector.shape_cast %10 : vector<1x8x8x8xf32> to vector<8x8x8xf32>
    %12 = vector.shape_cast %9 : vector<8x8x8xf32> to vector<1x8x8x8xf32>
    tpu.vector_store %arg5[%c0_9, %c0_10, %c0_11, %c0_12], %12 {strides = array<i32>} : memref<1x8x8x8xf32, #tpu.memory_space<vmem>>, vector<1x8x8x8xf32>,
    return
  }
  func.func @transform_0(%arg0: i32, %arg1: i32) -> (i32, i32, i32, i32) {
    %c0_i32 = arith.constant 0 : i32
    %c0_i32_0 = arith.constant 0 : i32
    %c0_i32_1 = arith.constant 0 : i32
    return %arg0, %c0_i32, %arg1, %c0_i32_0 : i32, i32, i32, i32
  }
  func.func @transform_1(%arg0: i32, %arg1: i32) -> (i32, i32, i32) {
    %c0_i32 = arith.constant 0 : i32
    %c0_i32_0 = arith.constant 0 : i32
    %c0_i32_1 = arith.constant 0 : i32
    %c0_i32_2 = arith.constant 0 : i32
    return %c0_i32, %c0_i32_0, %c0_i32_1 : i32, i32, i32
  }
  func.func @transform_2(%arg0: i32, %arg1: i32) -> (i32, i32, i32) {
    %c0_i32 = arith.constant 0 : i32
    %c0_i32_0 = arith.constant 0 : i32
    %c0_i32_1 = arith.constant 0 : i32
    %c0_i32_2 = arith.constant 0 : i32
    return %c0_i32, %c0_i32_0, %c0_i32_1 : i32, i32, i32
  }
  func.func @transform_3(%arg0: i32, %arg1: i32) -> (i32, i32, i32, i32) {
    %c0_i32 = arith.constant 0 : i32
    %c0_i32_0 = arith.constant 0 : i32
    %c0_i32_1 = arith.constant 0 : i32
    return %arg0, %c0_i32, %arg1, %c0_i32_0 : i32, i32, i32, i32
  }
}

</mosaic_0001>

<llo_original>
// kernel: downsampler_block.3
$region0: #{downsampler_block.3}
  #allocation0 [shape = 'u32[]', space=smem, size = 0x4, offset = 0x4, fixed_abs, tag = 'smem constant byte address 0x4 - core index']
  #allocation1 [shape = 'u32[144,128]{1,0:T(1,128)}', space=vmem, size = 0x12000, scoped, tag = 'internal scratch']
  %s0 = inlined_call_operand.hbm [shape: f32[2,8,8,8], index: 0, kind: input, shape index: {}, may-alias: {0,3}]
  %s1 = inlined_call_operand.vmem [shape: f32[8,1,1], index: 1, kind: input, shape index: {}]
  %s2 = inlined_call_operand.vmem [shape: f32[8,1,1], index: 2, kind: input, shape index: {}]
  %s3 = inlined_call_operand.hbm [shape: f32[2,8,8,8], index: 3, kind: output, shape index: {}, may-alias: {0,3}]
  %s4 = sld [smem:[#allocation0]]
  $region49: #{downsampler_block.3} parent=0
    _
  %s6 = ssub.s32 1, %s4
  %s7 = scalar_select 0, %s6, %s4
  $region1: #{downsampler_block.3} parent=0
    #allocation2 [shape = 'u8[65536]{0}', space=vmem, size = 0x10000, scoped, tag = 'input window, operand 0']
    #allocation3 [shape = 's32[2]{0}', space=sflag, size = 0x8, scoped, tag = 'scoped memory for downsampler_block.3']
    #allocation4 [shape = 's32[2]{0}', space=sflag, size = 0x8, scoped, tag = 'scoped memory for downsampler_block.3']
    #allocation5 [shape = 'u8[65536]{0}', space=vmem, size = 0x10000, scoped, tag = 'output window, operand 0']
    %8 = vsyncpa [#allocation3], 0
    %s9 = scalar_lea.sflag [#allocation3], 1
    %10 = vsyncpa %s9, 0
    %11 = vsyncpa [#allocation4], 0
    %s12 = scalar_lea.sflag [#allocation4], 1
    %13 = vsyncpa %s12, 0
    loop: start=0, step=1, limit=4
    $region2: #{downsampler_block.3} parent=1 // loop_pre_header
      _
    $region3: #{downsampler_block.3} parent=1 // loop_header
      %s15 = sphi 0, %s19
      %p16 = scmp.ge.s32.totalorder %s15, 4
      %s22 = sphi 0, %s34
      %s23 = sphi 0, %s30
      %s24 = sphi 0, %s22
      %s25 = sphi 0, %s23
      %s26 = sphi 0, %s24
      %s27 = sphi 0, %s25
      %s39 = sphi 0, %s41
      %s42 = sphi 0, %s39
      %s43 = sphi 0, %s42
      %s59 = sphi 0, %s43
      %s63 = sphi 0, %s63
      %s65 = sphi 0, %s63
      %s66 = sphi 0, %s65
      %s80 = sphi 0, %s66
      %s84 = sphi 0, %s84
      %s86 = sphi 0, %s84
      %s87 = sphi 0, %s86
      %s101 = sphi 0, %s87
      %s109 = sphi 0, %s111
      %s112 = sphi 0, %s109
      %s113 = sphi 0, %s112
      %s129 = sphi 0, %s113
    $region4: #{downsampler_block.3} parent=1 // loop_header_branch
      %18 = sbr.rel (%p16) target = $region8
    $region5: #{downsampler_block.3} parent=1 // loop_body
      %s20 = ssub.s32 %s15, 1
      %s21 = ssub.s32 %s15, 2
      %s28 = sadd.s32 1, %s23
      %p29 = scmp.ge.s32.totalorder %s28, 1
      %s30 = scalar_select %p29, 0, %s28
      %s31 = sadd.s32 1, %s22
      %s32 = scalar_select %p29, %s31, %s22
      %p33 = scmp.ge.s32.totalorder %s32, 2
      %s34 = scalar_select %p33, 0, %s32
      %s35 = ssub.s32 %s22, %s34
      %s36 = ssub.s32 %s23, %s30
      %s37 = sor.u32 %s35, %s36
      %p38 = scmp.eq.s32.totalorder %s37, 0
      %s40 = sadd.s32 %s39, 1
      %s41 = scalar_select %p38, %s39, %s40
      %p44 = pneg %p38
      %p45 = scmp.eq.s32.totalorder %s15, 1
      %p46 = por %p44, %p45
      %p47 = scmp.ne.s32.totalorder %s39, %s42
      %p48 = scmp.eq.s32.totalorder %s15, 0
      %p49 = por %p47, %p48
      %p50 = scmp.ne.s32.totalorder %s39, %s42
      %p51 = scmp.eq.s32.totalorder %s20, 1
      %p52 = por %p50, %p51
      %p53 = scmp.ne.s32.totalorder %s42, %s43
      %p54 = scmp.eq.s32.totalorder %s20, 0
      %p55 = por %p53, %p54
      %p56 = scmp.ne.s32.totalorder %s42, %s43
      %p57 = scmp.eq.s32.totalorder %s21, 1
      %p58 = por %p56, %p57
      %p60 = scmp.ne.s32.totalorder %s43, %s59
      %p61 = scmp.eq.s32.totalorder %s21, 0
      %p62 = por %p60, %p61
      %s64 = sadd.s32 %s63, 1
      %p67 = scmp.eq.s32.totalorder %s15, 1
      %p68 = scmp.ne.s32.totalorder %s63, %s65
      %p69 = scmp.eq.s32.totalorder %s15, 0
      %p70 = por %p68, %p69
      %p71 = scmp.ne.s32.totalorder %s63, %s65
      %p72 = scmp.eq.s32.totalorder %s20, 1
      %p73 = por %p71, %p72
      %p74 = scmp.ne.s32.totalorder %s65, %s66
      %p75 = scmp.eq.s32.totalorder %s20, 0
      %p76 = por %p74, %p75
      %p77 = scmp.ne.s32.totalorder %s65, %s66
      %p78 = scmp.eq.s32.totalorder %s21, 1
      %p79 = por %p77, %p78
      %p81 = scmp.ne.s32.totalorder %s66, %s80
      %p82 = scmp.eq.s32.totalorder %s21, 0
      %p83 = por %p81, %p82
      %s85 = sadd.s32 %s84, 1
      %p88 = scmp.eq.s32.totalorder %s15, 1
      %p89 = scmp.ne.s32.totalorder %s84, %s86
      %p90 = scmp.eq.s32.totalorder %s15, 0
      %p91 = por %p89, %p90
      %p92 = scmp.ne.s32.totalorder %s84, %s86
      %p93 = scmp.eq.s32.totalorder %s20, 1
      %p94 = por %p92, %p93
      %p95 = scmp.ne.s32.totalorder %s86, %s87
      %p96 = scmp.eq.s32.totalorder %s20, 0
      %p97 = por %p95, %p96
      %p98 = scmp.ne.s32.totalorder %s86, %s87
      %p99 = scmp.eq.s32.totalorder %s21, 1
      %p100 = por %p98, %p99
      %p102 = scmp.ne.s32.totalorder %s87, %s101
      %p103 = scmp.eq.s32.totalorder %s21, 0
      %p104 = por %p102, %p103
      %s105 = ssub.s32 %s22, %s34
      %s106 = ssub.s32 %s23, %s30
      %s107 = sor.u32 %s105, %s106
      %p108 = scmp.eq.s32.totalorder %s107, 0
      %s110 = sadd.s32 %s109, 1
      %s111 = scalar_select %p108, %s109, %s110
      %p114 = pneg %p108
      %p115 = scmp.eq.s32.totalorder %s15, 1
      %p116 = por %p114, %p115
      %p117 = scmp.ne.s32.totalorder %s109, %s112
      %p118 = scmp.eq.s32.totalorder %s15, 0
      %p119 = por %p117, %p118
      %p120 = scmp.ne.s32.totalorder %s109, %s112
      %p121 = scmp.eq.s32.totalorder %s20, 1
      %p122 = por %p120, %p121
      %p123 = scmp.ne.s32.totalorder %s112, %s113
      %p124 = scmp.eq.s32.totalorder %s20, 0
      %p125 = por %p123, %p124
      %p126 = scmp.ne.s32.totalorder %s112, %s113
      %p127 = scmp.eq.s32.totalorder %s21, 1
      %p128 = por %p126, %p127
      %p130 = scmp.ne.s32.totalorder %s113, %s129
      %p131 = scmp.eq.s32.totalorder %s21, 0
      %p132 = por %p130, %p131
      %p133 = scmp.le.s32.totalorder 1, %s15
      %p134 = scmp.lt.s32.totalorder %s15, 3
      %p135 = pnand %p133, %p134
      %p136 = pneg %p135
      // Predicated region
      $region9: #{downsampler_block.3} parent=5 // pred_check
        _
      $region10: #{downsampler_block.3} parent=5 // pred_check_branch
        %138 = sbr.rel (%p135) target = $region12
      $region11: #{downsampler_block.3} parent=5 // pred_region
        %s139 = ssub.s32 %s15, 1
        // Predicated region
        $region13: #{downsampler_block.3} parent=11 // pred_check
          %p140 = pneg %p76
        $region14: #{downsampler_block.3} parent=11 // pred_check_branch
          %142 = sbr.rel (%p140) target = $region16
        $region15: #{downsampler_block.3} parent=11 // pred_region
          _
        $region16: #{downsampler_block.3} parent=11 // pred_fallthru
          _
        // Predicated region
        $region17: #{downsampler_block.3} parent=11 // pred_check
          %p143 = pneg %p97
        $region18: #{downsampler_block.3} parent=11 // pred_check_branch
          %145 = sbr.rel (%p143) target = $region20
        $region19: #{downsampler_block.3} parent=11 // pred_region
          _
        $region20: #{downsampler_block.3} parent=11 // pred_fallthru
          _
      $region12: #{downsampler_block.3} parent=5 // pred_fallthru
        _
      %p146 = scmp.lt.s32.totalorder %s15, 2
      // Predicated region
      $region21: #{downsampler_block.3} parent=5 // pred_check
        %p147 = pneg %p146
      $region22: #{downsampler_block.3} parent=5 // pred_check_branch
        %149 = sbr.rel (%p147) target = $region24
      $region23: #{downsampler_block.3} parent=5 // pred_region
        // Predicated region
        $region25: #{downsampler_block.3} parent=23 // pred_check
          %p150 = pneg %p49
        $region26: #{downsampler_block.3} parent=23 // pred_check_branch
          %152 = sbr.rel (%p150) target = $region28
        $region27: #{downsampler_block.3} parent=23 // pred_region
          %s153 = sand.u32 %s39, 1
          %s154 = scalar_lea.sflag [#allocation3], %s153
          %s155 = sand.u32 %s39, 1
          %s156 = smul.addr %s155, 64
          %s157 = scalar_lea.vmem [#allocation2], %s156
          %s159 = ssub.s32 1024, 1024
          %160 = vsyncadd %s154, %s159
          %s161 = smul.addr %s22, 8
          %s162 = sadd.s32 %s23, %s161
          %s163 = smul.addr %s162, 128
          %s164 = scalar_lea.hbm %s0, %s163
          %s165 = sshll.u32 %s157, 4
          %s166 = int_to_ptr.vmem [resolvable:$true] %s165
          %171 = dma.hbm_to_vmem [thread:$0]  %s164, 1024, %s166, %s154, 128, 128, 8
        $region28: #{downsampler_block.3} parent=23 // pred_fallthru
          _
      $region24: #{downsampler_block.3} parent=5 // pred_fallthru
        _
      %p172 = scmp.le.s32.totalorder 1, %s15
      %p173 = scmp.lt.s32.totalorder %s15, 3
      %p174 = pnand %p172, %p173
      %p175 = pneg %p174
      // Predicated region
      $region29: #{downsampler_block.3} parent=5 // pred_check
        _
      $region30: #{downsampler_block.3} parent=5 // pred_check_branch
        %177 = sbr.rel (%p174) target = $region32
      $region31: #{downsampler_block.3} parent=5 // pred_region
        %s178 = ssub.s32 %s15, 1
        %s179 = sand.u32 %s42, 1
        %s180 = scalar_lea.sflag [#allocation3], %s179
        %s181 = sand.u32 %s42, 1
        %s182 = smul.addr %s181, 64
        %s183 = scalar_lea.vmem [#allocation2], %s182
        // Predicated region
        $region33: #{downsampler_block.3} parent=31 // pred_check
          %p184 = pneg %p55
        $region34: #{downsampler_block.3} parent=31 // pred_check_branch
          %186 = sbr.rel (%p184) target = $region36
        $region35: #{downsampler_block.3} parent=31 // pred_region
          %187 = dma.done %s180, 1024
        $region36: #{downsampler_block.3} parent=31 // pred_fallthru
          _
        %s188 = sand.u32 %s42, 1
        %s189 = scalar_lea.sflag [#allocation3], %s188
        %s190 = sand.u32 %s42, 1
        %s191 = smul.addr %s190, 64
        %s192 = scalar_lea.vmem [#allocation2], %s191
        %p193 = pneg %p55
        %p194 = pneg %p52
        %p195 = pneg %p76
        %p196 = pneg %p73
        %p197 = pneg %p97
        %p198 = pneg %p94
        %p199 = pneg %p125
        %p200 = pneg %p122
        %s201 = sand.u32 %s112, 1
        %s202 = scalar_lea.sflag [#allocation4], %s201
        %s203 = sand.u32 %s112, 1
        %s204 = smul.addr %s203, 64
        %s205 = scalar_lea.vmem [#allocation5], %s204
        %v206 = vld [vmem:[%s183] sm:$0xff]
        %v207 = vld [vmem:[%s183 + $0x8] sm:$0xff]
        %v208 = vld [vmem:[%s183 + $0x10] sm:$0xff]
        %v209 = vld [vmem:[%s183 + $0x18] sm:$0xff]
        %v210 = vld [vmem:[%s183 + $0x20] sm:$0xff]
        %v211 = vld [vmem:[%s183 + $0x28] sm:$0xff]
        %v212 = vld [vmem:[%s183 + $0x30] sm:$0xff]
        %v213 = vld [vmem:[%s183 + $0x38] sm:$0xff]
        %v214 = vld [vmem:[%s1] sm:$0x1]
        %v215 = vld [vmem:[%s1 + $0x1] sm:$0x1]
        %v216 = vld [vmem:[%s1 + $0x2] sm:$0x1]
        %v217 = vld [vmem:[%s1 + $0x3] sm:$0x1]
        %v218 = vld [vmem:[%s1 + $0x4] sm:$0x1]
        %v219 = vld [vmem:[%s1 + $0x5] sm:$0x1]
        %v220 = vld [vmem:[%s1 + $0x6] sm:$0x1]
        %v221 = vld [vmem:[%s1 + $0x7] sm:$0x1]
        %v230 = vlaneseq
        %v231 = vshrl.u32 %v230, 7
        %v232 = vsub.s32 0, %v231
        %v233 = vrot.slane %v214, %v232
        %v234 = vlaneseq
        %v235 = vshrl.u32 %v234, 7
        %v236 = vsub.s32 0, %v235
        %v237 = vrot.slane %v215, %v236
        %v238 = vlaneseq
        %v239 = vshrl.u32 %v238, 7
        %v240 = vsub.s32 0, %v239
        %v241 = vrot.slane %v216, %v240
        %v242 = vlaneseq
        %v243 = vshrl.u32 %v242, 7
        %v244 = vsub.s32 0, %v243
        %v245 = vrot.slane %v217, %v244
        %v246 = vlaneseq
        %v247 = vshrl.u32 %v246, 7
        %v248 = vsub.s32 0, %v247
        %v249 = vrot.slane %v218, %v248
        %v250 = vlaneseq
        %v251 = vshrl.u32 %v250, 7
        %v252 = vsub.s32 0, %v251
        %v253 = vrot.slane %v219, %v252
        %v254 = vlaneseq
        %v255 = vshrl.u32 %v254, 7
        %v256 = vsub.s32 0, %v255
        %v257 = vrot.slane %v220, %v256
        %v258 = vlaneseq
        %v259 = vshrl.u32 %v258, 7
        %v260 = vsub.s32 0, %v259
        %v261 = vrot.slane %v221, %v260
        %262 = vset.pattern.permute.xlu0 0
        %263 = vperm.xlu0 %262, %v233
        %v264 = vpop.permute.xlu0 %263
        %266 = vset.pattern.permute.xlu0 0
        %267 = vperm.xlu0 %266, %v237
        %v268 = vpop.permute.xlu0 %267
        %270 = vset.pattern.permute.xlu0 0
        %271 = vperm.xlu0 %270, %v241
        %v272 = vpop.permute.xlu0 %271
        %274 = vset.pattern.permute.xlu0 0
        %275 = vperm.xlu0 %274, %v245
        %v276 = vpop.permute.xlu0 %275
        %278 = vset.pattern.permute.xlu0 0
        %279 = vperm.xlu0 %278, %v249
        %v280 = vpop.permute.xlu0 %279
        %282 = vset.pattern.permute.xlu0 0
        %283 = vperm.xlu0 %282, %v253
        %v284 = vpop.permute.xlu0 %283
        %286 = vset.pattern.permute.xlu0 0
        %287 = vperm.xlu0 %286, %v257
        %v288 = vpop.permute.xlu0 %287
        %290 = vset.pattern.permute.xlu0 0
        %291 = vperm.xlu0 %290, %v261
        %v292 = vpop.permute.xlu0 %291
        %v294 = vmul.f32 %v206, %v264
        %v295 = vmul.f32 %v207, %v268
        %v296 = vmul.f32 %v208, %v272
        %v297 = vmul.f32 %v209, %v276
        %v298 = vmul.f32 %v210, %v280
        %v299 = vmul.f32 %v211, %v284
        %v300 = vmul.f32 %v212, %v288
        %v301 = vmul.f32 %v213, %v292
        %v302 = vld [vmem:[%s2] sm:$0x1]
        %v303 = vld [vmem:[%s2 + $0x1] sm:$0x1]
        %v304 = vld [vmem:[%s2 + $0x2] sm:$0x1]
        %v305 = vld [vmem:[%s2 + $0x3] sm:$0x1]
        %v306 = vld [vmem:[%s2 + $0x4] sm:$0x1]
        %v307 = vld [vmem:[%s2 + $0x5] sm:$0x1]
        %v308 = vld [vmem:[%s2 + $0x6] sm:$0x1]
        %v309 = vld [vmem:[%s2 + $0x7] sm:$0x1]
        %v318 = vlaneseq
        %v319 = vshrl.u32 %v318, 7
        %v320 = vsub.s32 0, %v319
        %v321 = vrot.slane %v302, %v320
        %v322 = vlaneseq
        %v323 = vshrl.u32 %v322, 7
        %v324 = vsub.s32 0, %v323
        %v325 = vrot.slane %v303, %v324
        %v326 = vlaneseq
        %v327 = vshrl.u32 %v326, 7
        %v328 = vsub.s32 0, %v327
        %v329 = vrot.slane %v304, %v328
        %v330 = vlaneseq
        %v331 = vshrl.u32 %v330, 7
        %v332 = vsub.s32 0, %v331
        %v333 = vrot.slane %v305, %v332
        %v334 = vlaneseq
        %v335 = vshrl.u32 %v334, 7
        %v336 = vsub.s32 0, %v335
        %v337 = vrot.slane %v306, %v336
        %v338 = vlaneseq
        %v339 = vshrl.u32 %v338, 7
        %v340 = vsub.s32 0, %v339
        %v341 = vrot.slane %v307, %v340
        %v342 = vlaneseq
        %v343 = vshrl.u32 %v342, 7
        %v344 = vsub.s32 0, %v343
        %v345 = vrot.slane %v308, %v344
        %v346 = vlaneseq
        %v347 = vshrl.u32 %v346, 7
        %v348 = vsub.s32 0, %v347
        %v349 = vrot.slane %v309, %v348
        %350 = vset.pattern.permute.xlu0 0
        %351 = vperm.xlu0 %350, %v321
        %v352 = vpop.permute.xlu0 %351
        %354 = vset.pattern.permute.xlu0 0
        %355 = vperm.xlu0 %354, %v325
        %v356 = vpop.permute.xlu0 %355
        %358 = vset.pattern.permute.xlu0 0
        %359 = vperm.xlu0 %358, %v329
        %v360 = vpop.permute.xlu0 %359
        %362 = vset.pattern.permute.xlu0 0
        %363 = vperm.xlu0 %362, %v333
        %v364 = vpop.permute.xlu0 %363
        %366 = vset.pattern.permute.xlu0 0
        %367 = vperm.xlu0 %366, %v337
        %v368 = vpop.permute.xlu0 %367
        %370 = vset.pattern.permute.xlu0 0
        %371 = vperm.xlu0 %370, %v341
        %v372 = vpop.permute.xlu0 %371
        %374 = vset.pattern.permute.xlu0 0
        %375 = vperm.xlu0 %374, %v345
        %v376 = vpop.permute.xlu0 %375
        %378 = vset.pattern.permute.xlu0 0
        %379 = vperm.xlu0 %378, %v349
        %v380 = vpop.permute.xlu0 %379
        %v382 = vadd.f32 %v294, %v352
        %v383 = vadd.f32 %v295, %v356
        %v384 = vadd.f32 %v296, %v360
        %v385 = vadd.f32 %v297, %v364
        %v386 = vadd.f32 %v298, %v368
        %v387 = vadd.f32 %v299, %v372
        %v388 = vadd.f32 %v300, %v376
        %v389 = vadd.f32 %v301, %v380
        %v390 = vmax.f32 %v382, 0.0
        %v391 = vmax.f32 %v383, 0.0
        %v392 = vmax.f32 %v384, 0.0
        %v393 = vmax.f32 %v385, 0.0
        %v394 = vmax.f32 %v386, 0.0
        %v395 = vmax.f32 %v387, 0.0
        %v396 = vmax.f32 %v388, 0.0
        %v397 = vmax.f32 %v389, 0.0
        %vm398 = vcmask 64512
        %399 = vst.msk [vmem:[%s205] sm:$0xff] %vm398, %v390
        %400 = vst.msk [vmem:[%s205 + $0x8] sm:$0xff] %vm398, %v391
        %401 = vst.msk [vmem:[%s205 + $0x10] sm:$0xff] %vm398, %v392
        %402 = vst.msk [vmem:[%s205 + $0x18] sm:$0xff] %vm398, %v393
        %403 = vst.msk [vmem:[%s205 + $0x20] sm:$0xff] %vm398, %v394
        %404 = vst.msk [vmem:[%s205 + $0x28] sm:$0xff] %vm398, %v395
        %405 = vst.msk [vmem:[%s205 + $0x30] sm:$0xff] %vm398, %v396
        %406 = vst.msk [vmem:[%s205 + $0x38] sm:$0xff] %vm398, %v397
        %s407 = sand.u32 %s112, 1
        %s408 = scalar_lea.sflag [#allocation4], %s407
        %s409 = sand.u32 %s112, 1
        %s410 = smul.addr %s409, 64
        %s411 = scalar_lea.vmem [#allocation5], %s410
        // Predicated region
        $region37: #{downsampler_block.3} parent=31 // pred_check
          %p412 = pneg %p122
        $region38: #{downsampler_block.3} parent=31 // pred_check_branch
          %414 = sbr.rel (%p412) target = $region40
        $region39: #{downsampler_block.3} parent=31 // pred_region
          %s416 = ssub.s32 1024, 1024
          %417 = vsyncadd %s408, %s416
          %s418 = smul.addr %s24, 8
          %s419 = sadd.s32 %s25, %s418
          %s420 = smul.addr %s419, 128
          %s421 = scalar_lea.hbm %s3, %s420
          %s422 = sshll.u32 %s411, 4
          %s423 = int_to_ptr.vmem [resolvable:$true] %s422
          %428 = dma.vmem_to_hbm [thread:$0]  %s423, 1024, %s421, %s408, 128, 128, 8
        $region40: #{downsampler_block.3} parent=31 // pred_fallthru
          _
      $region32: #{downsampler_block.3} parent=5 // pred_fallthru
        _
      %p429 = scmp.le.s32.totalorder 2, %s15
      // Predicated region
      $region41: #{downsampler_block.3} parent=5 // pred_check
        %p430 = pneg %p429
      $region42: #{downsampler_block.3} parent=5 // pred_check_branch
        %432 = sbr.rel (%p430) target = $region44
      $region43: #{downsampler_block.3} parent=5 // pred_region
        %s433 = ssub.s32 %s15, 2
        // Predicated region
        $region45: #{downsampler_block.3} parent=43 // pred_check
          %p434 = pneg %p128
        $region46: #{downsampler_block.3} parent=43 // pred_check_branch
          %436 = sbr.rel (%p434) target = $region48
        $region47: #{downsampler_block.3} parent=43 // pred_region
          %s437 = sand.u32 %s113, 1
          %s438 = scalar_lea.sflag [#allocation4], %s437
          %s439 = sand.u32 %s113, 1
          %s440 = smul.addr %s439, 64
          %s441 = scalar_lea.vmem [#allocation5], %s440
          %442 = dma.done %s438, 1024
        $region48: #{downsampler_block.3} parent=43 // pred_fallthru
          _
      $region44: #{downsampler_block.3} parent=5 // pred_fallthru
        _
    $region6: #{downsampler_block.3} parent=1 // loop_footer
      %s19 = sadd.s32 1, %s15
    $region7: #{downsampler_block.3} parent=1 // loop_footer_branch
      %14 = sbr.rel target = $region3
    $region8: #{downsampler_block.3} parent=1 // loop_exit
      _
    %443 = vsyncpa [#allocation3], 1
    %s444 = scalar_lea.sflag [#allocation3], 1
    %445 = vsyncpa %s444, 1
    %446 = vsyncpa [#allocation4], 1
    %s447 = scalar_lea.sflag [#allocation4], 1
    %448 = vsyncpa %s447, 1

// kernel: downsampler_block.2
$region0: #{downsampler_block.2}
  #allocation0 [shape = 'u32[]', space=smem, size = 0x4, offset = 0x4, fixed_abs, tag = 'smem constant byte address 0x4 - core index']
  #allocation1 [shape = 'u32[144,128]{1,0:T(1,128)}', space=vmem, size = 0x12000, scoped, tag = 'internal scratch']
  %s0 = inlined_call_operand.vmem [shape: f32[2,16,8,9], index: 0, kind: input, shape index: {}]
  %s1 = inlined_call_operand.vmem [shape: f32[2,1,8,9], index: 1, kind: input, shape index: {}]
  %s2 = inlined_call_operand.vmem [shape: f32[4,36], index: 2, kind: input, shape index: {}]
  %s3 = inlined_call_operand.vmem [shape: f32[4,1], index: 3, kind: input, shape index: {}]
  %s4 = inlined_call_operand.hbm [shape: f32[2,8,8,8], index: 4, kind: output, shape index: {0}]
  %s5 = inlined_call_operand.vmem [shape: f32[2,1,1,8], index: 5, kind: output, shape index: {1}]
  %s6 = inlined_call_operand.vmem [shape: f32[2,1,1,8], index: 6, kind: output, shape index: {2}]
  %7 = xla_tuple %s4, %s5, %s6
  %s8 = sld [smem:[#allocation0]]
  $region73: #{downsampler_block.2} parent=0
    _
  %s10 = ssub.s32 1, %s8
  %s11 = scalar_select 0, %s10, %s8
  $region1: #{downsampler_block.2} parent=0
    #allocation2 [shape = 'u8[65536]{0}', space=vmem, size = 0x10000, scoped, tag = 'output window, operand 0']
    #allocation3 [shape = 's32[2]{0}', space=sflag, size = 0x8, scoped, tag = 'scoped memory for downsampler_block.2']
    %12 = vsyncpa [#allocation3], 0
    %s13 = scalar_lea.sflag [#allocation3], 1
    %14 = vsyncpa %s13, 0
    loop: start=0, step=1, limit=4
    $region2: #{downsampler_block.2} parent=1 // loop_pre_header
      _
    $region3: #{downsampler_block.2} parent=1 // loop_header
      %s16 = sphi 0, %s20
      %p17 = scmp.ge.s32.totalorder %s16, 4
      %s23 = sphi 0, %s35
      %s24 = sphi 0, %s31
      %s25 = sphi 0, %s23
      %s26 = sphi 0, %s24
      %s27 = sphi 0, %s25
      %s28 = sphi 0, %s26
      %s40 = sphi 0, %s42
      %s43 = sphi 0, %s40
      %s44 = sphi 0, %s43
      %s60 = sphi 0, %s44
      %s68 = sphi 0, %s70
      %s71 = sphi 0, %s68
      %s72 = sphi 0, %s71
      %s88 = sphi 0, %s72
      %s92 = sphi 0, %s92
      %s94 = sphi 0, %s92
      %s95 = sphi 0, %s94
      %s109 = sphi 0, %s95
      %s113 = sphi 0, %s113
      %s115 = sphi 0, %s113
      %s116 = sphi 0, %s115
      %s130 = sphi 0, %s116
      %s138 = sphi 0, %s140
      %s141 = sphi 0, %s138
      %s142 = sphi 0, %s141
      %s158 = sphi 0, %s142
      %s166 = sphi 0, %s168
      %s169 = sphi 0, %s166
      %s170 = sphi 0, %s169
      %s186 = sphi 0, %s170
      %s194 = sphi 0, %s196
      %s197 = sphi 0, %s194
      %s198 = sphi 0, %s197
      %s214 = sphi 0, %s198
    $region4: #{downsampler_block.2} parent=1 // loop_header_branch
      %19 = sbr.rel (%p17) target = $region8
    $region5: #{downsampler_block.2} parent=1 // loop_body
      %s21 = ssub.s32 %s16, 1
      %s22 = ssub.s32 %s16, 2
      %s29 = sadd.s32 1, %s24
      %p30 = scmp.ge.s32.totalorder %s29, 1
      %s31 = scalar_select %p30, 0, %s29
      %s32 = sadd.s32 1, %s23
      %s33 = scalar_select %p30, %s32, %s23
      %p34 = scmp.ge.s32.totalorder %s33, 2
      %s35 = scalar_select %p34, 0, %s33
      %s36 = ssub.s32 %s23, %s35
      %s37 = ssub.s32 %s24, %s31
      %s38 = sor.u32 %s36, %s37
      %p39 = scmp.eq.s32.totalorder %s38, 0
      %s41 = sadd.s32 %s40, 1
      %s42 = scalar_select %p39, %s40, %s41
      %p45 = pneg %p39
      %p46 = scmp.eq.s32.totalorder %s16, 1
      %p47 = por %p45, %p46
      %p48 = scmp.ne.s32.totalorder %s40, %s43
      %p49 = scmp.eq.s32.totalorder %s16, 0
      %p50 = por %p48, %p49
      %p51 = scmp.ne.s32.totalorder %s40, %s43
      %p52 = scmp.eq.s32.totalorder %s21, 1
      %p53 = por %p51, %p52
      %p54 = scmp.ne.s32.totalorder %s43, %s44
      %p55 = scmp.eq.s32.totalorder %s21, 0
      %p56 = por %p54, %p55
      %p57 = scmp.ne.s32.totalorder %s43, %s44
      %p58 = scmp.eq.s32.totalorder %s22, 1
      %p59 = por %p57, %p58
      %p61 = scmp.ne.s32.totalorder %s44, %s60
      %p62 = scmp.eq.s32.totalorder %s22, 0
      %p63 = por %p61, %p62
      %s64 = ssub.s32 %s23, %s35
      %s65 = ssub.s32 %s24, %s31
      %s66 = sor.u32 %s64, %s65
      %p67 = scmp.eq.s32.totalorder %s66, 0
      %s69 = sadd.s32 %s68, 1
      %s70 = scalar_select %p67, %s68, %s69
      %p73 = pneg %p67
      %p74 = scmp.eq.s32.totalorder %s16, 1
      %p75 = por %p73, %p74
      %p76 = scmp.ne.s32.totalorder %s68, %s71
      %p77 = scmp.eq.s32.totalorder %s16, 0
      %p78 = por %p76, %p77
      %p79 = scmp.ne.s32.totalorder %s68, %s71
      %p80 = scmp.eq.s32.totalorder %s21, 1
      %p81 = por %p79, %p80
      %p82 = scmp.ne.s32.totalorder %s71, %s72
      %p83 = scmp.eq.s32.totalorder %s21, 0
      %p84 = por %p82, %p83
      %p85 = scmp.ne.s32.totalorder %s71, %s72
      %p86 = scmp.eq.s32.totalorder %s22, 1
      %p87 = por %p85, %p86
      %p89 = scmp.ne.s32.totalorder %s72, %s88
      %p90 = scmp.eq.s32.totalorder %s22, 0
      %p91 = por %p89, %p90
      %s93 = sadd.s32 %s92, 1
      %p96 = scmp.eq.s32.totalorder %s16, 1
      %p97 = scmp.ne.s32.totalorder %s92, %s94
      %p98 = scmp.eq.s32.totalorder %s16, 0
      %p99 = por %p97, %p98
      %p100 = scmp.ne.s32.totalorder %s92, %s94
      %p101 = scmp.eq.s32.totalorder %s21, 1
      %p102 = por %p100, %p101
      %p103 = scmp.ne.s32.totalorder %s94, %s95
      %p104 = scmp.eq.s32.totalorder %s21, 0
      %p105 = por %p103, %p104
      %p106 = scmp.ne.s32.totalorder %s94, %s95
      %p107 = scmp.eq.s32.totalorder %s22, 1
      %p108 = por %p106, %p107
      %p110 = scmp.ne.s32.totalorder %s95, %s109
      %p111 = scmp.eq.s32.totalorder %s22, 0
      %p112 = por %p110, %p111
      %s114 = sadd.s32 %s113, 1
      %p117 = scmp.eq.s32.totalorder %s16, 1
      %p118 = scmp.ne.s32.totalorder %s113, %s115
      %p119 = scmp.eq.s32.totalorder %s16, 0
      %p120 = por %p118, %p119
      %p121 = scmp.ne.s32.totalorder %s113, %s115
      %p122 = scmp.eq.s32.totalorder %s21, 1
      %p123 = por %p121, %p122
      %p124 = scmp.ne.s32.totalorder %s115, %s116
      %p125 = scmp.eq.s32.totalorder %s21, 0
      %p126 = por %p124, %p125
      %p127 = scmp.ne.s32.totalorder %s115, %s116
      %p128 = scmp.eq.s32.totalorder %s22, 1
      %p129 = por %p127, %p128
      %p131 = scmp.ne.s32.totalorder %s116, %s130
      %p132 = scmp.eq.s32.totalorder %s22, 0
      %p133 = por %p131, %p132
      %s134 = ssub.s32 %s23, %s35
      %s135 = ssub.s32 %s24, %s31
      %s136 = sor.u32 %s134, %s135
      %p137 = scmp.eq.s32.totalorder %s136, 0
      %s139 = sadd.s32 %s138, 1
      %s140 = scalar_select %p137, %s138, %s139
      %p143 = pneg %p137
      %p144 = scmp.eq.s32.totalorder %s16, 1
      %p145 = por %p143, %p144
      %p146 = scmp.ne.s32.totalorder %s138, %s141
      %p147 = scmp.eq.s32.totalorder %s16, 0
      %p148 = por %p146, %p147
      %p149 = scmp.ne.s32.totalorder %s138, %s141
      %p150 = scmp.eq.s32.totalorder %s21, 1
      %p151 = por %p149, %p150
      %p152 = scmp.ne.s32.totalorder %s141, %s142
      %p153 = scmp.eq.s32.totalorder %s21, 0
      %p154 = por %p152, %p153
      %p155 = scmp.ne.s32.totalorder %s141, %s142
      %p156 = scmp.eq.s32.totalorder %s22, 1
      %p157 = por %p155, %p156
      %p159 = scmp.ne.s32.totalorder %s142, %s158
      %p160 = scmp.eq.s32.totalorder %s22, 0
      %p161 = por %p159, %p160
      %s162 = ssub.s32 %s23, %s35
      %s163 = ssub.s32 %s24, %s31
      %s164 = sor.u32 %s162, %s163
      %p165 = scmp.eq.s32.totalorder %s164, 0
      %s167 = sadd.s32 %s166, 1
      %s168 = scalar_select %p165, %s166, %s167
      %p171 = pneg %p165
      %p172 = scmp.eq.s32.totalorder %s16, 1
      %p173 = por %p171, %p172
      %p174 = scmp.ne.s32.totalorder %s166, %s169
      %p175 = scmp.eq.s32.totalorder %s16, 0
      %p176 = por %p174, %p175
      %p177 = scmp.ne.s32.totalorder %s166, %s169
      %p178 = scmp.eq.s32.totalorder %s21, 1
      %p179 = por %p177, %p178
      %p180 = scmp.ne.s32.totalorder %s169, %s170
      %p181 = scmp.eq.s32.totalorder %s21, 0
      %p182 = por %p180, %p181
      %p183 = scmp.ne.s32.totalorder %s169, %s170
      %p184 = scmp.eq.s32.totalorder %s22, 1
      %p185 = por %p183, %p184
      %p187 = scmp.ne.s32.totalorder %s170, %s186
      %p188 = scmp.eq.s32.totalorder %s22, 0
      %p189 = por %p187, %p188
      %s190 = ssub.s32 %s23, %s35
      %s191 = ssub.s32 %s24, %s31
      %s192 = sor.u32 %s190, %s191
      %p193 = scmp.eq.s32.totalorder %s192, 0
      %s195 = sadd.s32 %s194, 1
      %s196 = scalar_select %p193, %s194, %s195
      %p199 = pneg %p193
      %p200 = scmp.eq.s32.totalorder %s16, 1
      %p201 = por %p199, %p200
      %p202 = scmp.ne.s32.totalorder %s194, %s197
      %p203 = scmp.eq.s32.totalorder %s16, 0
      %p204 = por %p202, %p203
      %p205 = scmp.ne.s32.totalorder %s194, %s197
      %p206 = scmp.eq.s32.totalorder %s21, 1
      %p207 = por %p205, %p206
      %p208 = scmp.ne.s32.totalorder %s197, %s198
      %p209 = scmp.eq.s32.totalorder %s21, 0
      %p210 = por %p208, %p209
      %p211 = scmp.ne.s32.totalorder %s197, %s198
      %p212 = scmp.eq.s32.totalorder %s22, 1
      %p213 = por %p211, %p212
      %p215 = scmp.ne.s32.totalorder %s198, %s214
      %p216 = scmp.eq.s32.totalorder %s22, 0
      %p217 = por %p215, %p216
      %p218 = scmp.le.s32.totalorder 1, %s16
      %p219 = scmp.lt.s32.totalorder %s16, 3
      %p220 = pnand %p218, %p219
      %p221 = pneg %p220
      // Predicated region
      $region9: #{downsampler_block.2} parent=5 // pred_check
        _
      $region10: #{downsampler_block.2} parent=5 // pred_check_branch
        %223 = sbr.rel (%p220) target = $region12
      $region11: #{downsampler_block.2} parent=5 // pred_region
        %s224 = ssub.s32 %s16, 1
        // Predicated region
        $region13: #{downsampler_block.2} parent=11 // pred_check
          %p225 = pneg %p105
        $region14: #{downsampler_block.2} parent=11 // pred_check_branch
          %227 = sbr.rel (%p225) target = $region16
        $region15: #{downsampler_block.2} parent=11 // pred_region
          _
        $region16: #{downsampler_block.2} parent=11 // pred_fallthru
          _
        // Predicated region
        $region17: #{downsampler_block.2} parent=11 // pred_check
          %p228 = pneg %p126
        $region18: #{downsampler_block.2} parent=11 // pred_check_branch
          %230 = sbr.rel (%p228) target = $region20
        $region19: #{downsampler_block.2} parent=11 // pred_region
          _
        $region20: #{downsampler_block.2} parent=11 // pred_fallthru
          _
      $region12: #{downsampler_block.2} parent=5 // pred_fallthru
        _
      %p231 = scmp.lt.s32.totalorder %s16, 2
      // Predicated region
      $region21: #{downsampler_block.2} parent=5 // pred_check
        %p232 = pneg %p231
      $region22: #{downsampler_block.2} parent=5 // pred_check_branch
        %234 = sbr.rel (%p232) target = $region24
      $region23: #{downsampler_block.2} parent=5 // pred_region
        // Predicated region
        $region25: #{downsampler_block.2} parent=23 // pred_check
          %p235 = pneg %p50
        $region26: #{downsampler_block.2} parent=23 // pred_check_branch
          %237 = sbr.rel (%p235) target = $region28
        $region27: #{downsampler_block.2} parent=23 // pred_region
          %p238 = scmp.lt.s32.totalorder %s23, 1
          %s239 = scalar_select %p238, %s23, 1
          %p240 = scmp.lt.s32.totalorder %s24, 0
          %s241 = scalar_select %p240, %s24, 0
          %s242 = smul.addr %s239, 16
          %s243 = sadd.s32 %s241, %s242
          %s244 = smul.addr %s243, 8
          %s245 = scalar_lea.vmem %s0, %s244
        $region28: #{downsampler_block.2} parent=23 // pred_fallthru
          _
        // Predicated region
        $region29: #{downsampler_block.2} parent=23 // pred_check
          %p246 = pneg %p78
        $region30: #{downsampler_block.2} parent=23 // pred_check_branch
          %248 = sbr.rel (%p246) target = $region32
        $region31: #{downsampler_block.2} parent=23 // pred_region
          %p249 = scmp.lt.s32.totalorder %s23, 1
          %s250 = scalar_select %p249, %s23, 1
          %p251 = scmp.lt.s32.totalorder %s24, 0
          %s252 = scalar_select %p251, %s24, 0
          %s253 = sadd.s32 %s252, %s250
          %s254 = smul.addr %s253, 8
          %s255 = scalar_lea.vmem %s1, %s254
        $region32: #{downsampler_block.2} parent=23 // pred_fallthru
          _
      $region24: #{downsampler_block.2} parent=5 // pred_fallthru
        _
      %p256 = scmp.le.s32.totalorder 1, %s16
      %p257 = scmp.lt.s32.totalorder %s16, 3
      %p258 = pnand %p256, %p257
      %p259 = pneg %p258
      // Predicated region
      $region33: #{downsampler_block.2} parent=5 // pred_check
        _
      $region34: #{downsampler_block.2} parent=5 // pred_check_branch
        %261 = sbr.rel (%p258) target = $region36
      $region35: #{downsampler_block.2} parent=5 // pred_region
        %s262 = ssub.s32 %s16, 1
        %p263 = scmp.lt.s32.totalorder %s25, 1
        %s264 = scalar_select %p263, %s25, 1
        %p265 = scmp.lt.s32.totalorder %s26, 0
        %s266 = scalar_select %p265, %s26, 0
        %s267 = smul.addr %s264, 16
        %s268 = sadd.s32 %s266, %s267
        %s269 = smul.addr %s268, 8
        %s270 = scalar_lea.vmem %s0, %s269
        %p271 = pneg %p56
        %p272 = pneg %p53
        %p273 = scmp.lt.s32.totalorder %s25, 1
        %s274 = scalar_select %p273, %s25, 1
        %p275 = scmp.lt.s32.totalorder %s26, 0
        %s276 = scalar_select %p275, %s26, 0
        %s277 = sadd.s32 %s276, %s274
        %s278 = smul.addr %s277, 8
        %s279 = scalar_lea.vmem %s1, %s278
        %p280 = pneg %p84
        %p281 = pneg %p81
        %p282 = pneg %p105
        %p283 = pneg %p102
        %p284 = pneg %p126
        %p285 = pneg %p123
        %p286 = pneg %p154
        %p287 = pneg %p151
        %s288 = sand.u32 %s141, 1
        %s289 = scalar_lea.sflag [#allocation3], %s288
        %s290 = sand.u32 %s141, 1
        %s291 = smul.addr %s290, 64
        %s292 = scalar_lea.vmem [#allocation2], %s291
        %p293 = pneg %p182
        %p294 = pneg %p179
        %p295 = scmp.lt.s32.totalorder %s25, 1
        %s296 = scalar_select %p295, %s25, 1
        %p297 = scmp.lt.s32.totalorder %s26, 0
        %s298 = scalar_select %p297, %s26, 0
        %s299 = sadd.s32 %s298, %s296
        %s300 = scalar_lea.vmem %s5, %s299
        %p301 = pneg %p210
        %p302 = pneg %p207
        %p303 = scmp.lt.s32.totalorder %s25, 1
        %s304 = scalar_select %p303, %s25, 1
        %p305 = scmp.lt.s32.totalorder %s26, 0
        %s306 = scalar_select %p305, %s26, 0
        %s307 = sadd.s32 %s306, %s304
        %s308 = scalar_lea.vmem %s6, %s307
        %p309 = scmp.lt.s32.totalorder %s25, 1
        %s310 = scalar_select %p309, %s25, 1
        %p311 = scmp.lt.s32.totalorder %s26, 0
        %s312 = scalar_select %p311, %s26, 0
        %s313 = smul.addr %s310, 16
        %s314 = sadd.s32 %s312, %s313
        %s315 = smul.addr %s314, 8
        %s316 = scalar_lea.vmem %s0, %s315
        %p317 = scmp.lt.s32.totalorder %s25, 1
        %s318 = scalar_select %p317, %s25, 1
        %p319 = scmp.lt.s32.totalorder %s26, 0
        %s320 = scalar_select %p319, %s26, 0
        %s321 = sadd.s32 %s320, %s318
        %s322 = smul.addr %s321, 8
        %s323 = scalar_lea.vmem %s1, %s322
        %p324 = scmp.lt.s32.totalorder %s25, 1
        %s325 = scalar_select %p324, %s25, 1
        %p326 = scmp.lt.s32.totalorder %s26, 0
        %s327 = scalar_select %p326, %s26, 0
        %s328 = sadd.s32 %s327, %s325
        %s329 = scalar_lea.vmem %s5, %s328
        %p330 = scmp.lt.s32.totalorder %s25, 1
        %s331 = scalar_select %p330, %s25, 1
        %p332 = scmp.lt.s32.totalorder %s26, 0
        %s333 = scalar_select %p332, %s26, 0
        %s334 = sadd.s32 %s333, %s331
        %s335 = scalar_lea.vmem %s6, %s334
        %v336 = vld [vmem:[%s2] sm:$0xf]
        %v337 = vld [vmem:[%s3] sm:$0xf]
        %s338 = scalar_lea.vmem %s316, 96
        %v339 = vld [vmem:[%s338] sm:$0x1]
        %v340 = vld [vmem:[%s338 + $0x8] sm:$0x1]
        %v341 = vld [vmem:[%s338 + $0x10] sm:$0x1]
        %v342 = vld [vmem:[%s338 + $0x18] sm:$0x1]
        %s343 = scalar_lea.vmem %s316, 64
        %v344 = vld [vmem:[%s343] sm:$0x1]
        %v345 = vld [vmem:[%s343 + $0x8] sm:$0x1]
        %v346 = vld [vmem:[%s343 + $0x10] sm:$0x1]
        %v347 = vld [vmem:[%s343 + $0x18] sm:$0x1]
        %s348 = scalar_lea.vmem %s316, 32
        %v349 = vld [vmem:[%s348 + $0x1] sm:$0x1]
        %v350 = vld [vmem:[%s348 + $0x9] sm:$0x1]
        %v351 = vld [vmem:[%s348 + $0x11] sm:$0x1]
        %v352 = vld [vmem:[%s348 + $0x19] sm:$0x1]
        %v353 = vld [vmem:[%s316 + $0x1] sm:$0x1]
        %v354 = vld [vmem:[%s316 + $0x9] sm:$0x1]
        %v355 = vld [vmem:[%s316 + $0x11] sm:$0x1]
        %v356 = vld [vmem:[%s316 + $0x19] sm:$0x1]
        %v357 = vld [vmem:[%s316] sm:$0x1]
        %v358 = vld [vmem:[%s316 + $0x8] sm:$0x1]
        %v359 = vld [vmem:[%s316 + $0x10] sm:$0x1]
        %v360 = vld [vmem:[%s316 + $0x18] sm:$0x1]
        %v361 = vld [vmem:[%s348] sm:$0x1]
        %v362 = vld [vmem:[%s348 + $0x8] sm:$0x1]
        %v363 = vld [vmem:[%s348 + $0x10] sm:$0x1]
        %v364 = vld [vmem:[%s348 + $0x18] sm:$0x1]
        %v369 = vrot.slane %v358, 7
        %vm370 = vcmask 1041409
        %v371 = vsel %vm370, %v369, %v357
        %v372 = vrot.slane %v359, 6
        %vm373 = vcmask 1042434
        %v374 = vsel %vm373, %v372, %v371
        %v375 = vrot.slane %v360, 5
        %vm376 = vcmask 1043459
        %v377 = vsel %vm376, %v375, %v374
        %v383 = vrot.slane %v361, 4
        %v384 = vrot.slane %v362, 3
        %vm385 = vcmask 1045509
        %v386 = vsel %vm385, %v384, %v383
        %v387 = vrot.slane %v363, 2
        %vm388 = vcmask 1046534
        %v389 = vsel %vm388, %v387, %v386
        %v390 = vrot.slane %v364, 1
        %vm391 = vcmask 1047559
        %v392 = vsel %vm391, %v390, %v389
        %394 = vrot.lane.b32.xlu0 %v377, 127
        %v395 = vpop.permute.xlu0 %394
        %v401 = vrot.slane %v344, 4
        %v402 = vrot.slane %v345, 3
        %v403 = vsel %vm385, %v402, %v401
        %v404 = vrot.slane %v346, 2
        %v405 = vsel %vm388, %v404, %v403
        %v406 = vrot.slane %v347, 1
        %v407 = vsel %vm391, %v406, %v405
        %v413 = vrot.slane %v340, 7
        %v414 = vsel %vm370, %v413, %v339
        %v415 = vrot.slane %v341, 6
        %v416 = vsel %vm373, %v415, %v414
        %v417 = vrot.slane %v342, 5
        %v418 = vsel %vm376, %v417, %v416
        %420 = vrot.lane.b32.xlu0 %v407, 127
        %v421 = vpop.permute.xlu0 %420
        %v427 = vrot.slane %v354, 7
        %v428 = vsel %vm370, %v427, %v353
        %v429 = vrot.slane %v355, 6
        %v430 = vsel %vm373, %v429, %v428
        %v431 = vrot.slane %v356, 5
        %v432 = vsel %vm376, %v431, %v430
        %v438 = vrot.slane %v349, 4
        %v439 = vrot.slane %v350, 3
        %v440 = vsel %vm385, %v439, %v438
        %v441 = vrot.slane %v351, 2
        %v442 = vsel %vm388, %v441, %v440
        %v443 = vrot.slane %v352, 1
        %v444 = vsel %vm391, %v443, %v442
        %446 = vrot.lane.b32.xlu0 %v432, 127
        %v447 = vpop.permute.xlu0 %446
        %vm448 = vcmask 1043456
        %v449 = vsel %vm448, %v377, %v392
        %v450 = vsel %vm448, %v395, %v407
        %v451 = vsel %vm448, %v418, %v421
        %v452 = vsel %vm448, %v432, %v444
        %454 = vset.pattern.permute.xlu0 0
        %455 = vperm.xlu0 %454, %v337
        %v456 = vpop.permute.xlu0 %455
        %vm458 = vcmask 293888
        %v460 = vsel %vm458, %v336, 0
        %v462 = vsel %vm448, %v447, 0
        %464 = vmatprep.subr.mxu0 0.0
        %465 = vmatpush1.msra.mxu0 %v449
        %466 = vmatprep.subr.mxu0 0.0
        %467 = vmatpush1.msra.mxu0 %v450
        %468 = vmatprep.subr.mxu0 0.0
        %469 = vmatpush1.msra.mxu0 %v451
        %470 = vmatprep.subr.mxu0 0.0
        %471 = vmatpush1.msra.mxu0 %v452
        %472 = vmatprep.subr.mxu0 0.0
        %473 = vmatpush1.msra.mxu0 %v462
        %474 = vmatprep.subr.mxu0 0.0
        %475 = vmatpush1.msra.mxu0 0.0
        %476 = vmatprep.subr.mxu0 0.0
        %477 = vmatpush1.msra.mxu0 0.0
        %478 = vmatprep.subr.mxu0 0.0
        %479 = vmatpush1.msra.mxu0 0.0
        %480 = vmatprep.subr.mxu0 0.0
        %481 = vmatpush1.msra.mxu0 0.0
        %482 = vmatprep.subr.mxu0 0.0
        %483 = vmatpush1.msra.mxu0 0.0
        %484 = vmatprep.subr.mxu0 0.0
        %485 = vmatpush1.msra.mxu0 0.0
        %486 = vmatprep.subr.mxu0 0.0
        %487 = vmatpush1.msra.mxu0 0.0
        %488 = vmatprep.subr.mxu0 0.0
        %489 = vmatpush1.msra.mxu0 0.0
        %490 = vmatprep.subr.mxu0 0.0
        %491 = vmatpush1.msra.mxu0 0.0
        %492 = vmatprep.subr.mxu0 0.0
        %493 = vmatpush1.msra.mxu0 0.0
        %494 = vmatprep.subr.mxu0 0.0
        %495 = vmatpush1.msra.mxu0 0.0
        %496 = vmatprep.subr.mxu0 0.0
        %497 = vmatpush1.msra.mxu0 0.0
        %498 = vmatprep.subr.mxu0 0.0
        %499 = vmatpush1.msra.mxu0 0.0
        %500 = vmatprep.subr.mxu0 0.0
        %501 = vmatpush1.msra.mxu0 0.0
        %502 = vmatprep.subr.mxu0 0.0
        %503 = vmatpush1.msra.mxu0 0.0
        %504 = vmatprep.subr.mxu0 0.0
        %505 = vmatpush1.msra.mxu0 0.0
        %506 = vmatprep.subr.mxu0 0.0
        %507 = vmatpush1.msra.mxu0 0.0
        %508 = vmatprep.subr.mxu0 0.0
        %509 = vmatpush1.msra.mxu0 0.0
        %510 = vmatprep.subr.mxu0 0.0
        %511 = vmatpush1.msra.mxu0 0.0
        %512 = vmatprep.subr.mxu0 0.0
        %513 = vmatpush1.msra.mxu0 0.0
        %514 = vmatprep.subr.mxu0 0.0
        %515 = vmatpush1.msra.mxu0 0.0
        %516 = vmatprep.subr.mxu0 0.0
        %517 = vmatpush1.msra.mxu0 0.0
        %518 = vmatprep.subr.mxu0 0.0
        %519 = vmatpush1.msra.mxu0 0.0
        %520 = vmatprep.subr.mxu0 0.0
        %521 = vmatpush1.msra.mxu0 0.0
        %522 = vmatprep.subr.mxu0 0.0
        %523 = vmatpush1.msra.mxu0 0.0
        %524 = vmatprep.subr.mxu0 0.0
        %525 = vmatpush1.msra.mxu0 0.0
        %526 = vmatprep.subr.mxu0 0.0
        %527 = vmatpush1.msra.mxu0 0.0
        %528 = vmatprep.mubr.f32.mxu0 0.0
        %529 = vmatmul.mubr.f32.gmra.mrb[0].mxu0 %v460
        %v530 = vpop.f32.mrb[0].mxu0
        %v531 = vadd.f32 %v456, %v530
        %v532 = vpop.f32.mrb[0].mxu0
        %533 = vdwg.mxu0
        %534 = vrot.lane.b32.xlu0 %v344, 127
        %v535 = vpop.permute.xlu0 %534
        %536 = vrot.lane.b32.xlu0 %v345, 127
        %v537 = vpop.permute.xlu0 %536
        %538 = vrot.lane.b32.xlu0 %v346, 127
        %v539 = vpop.permute.xlu0 %538
        %540 = vrot.lane.b32.xlu0 %v347, 127
        %v541 = vpop.permute.xlu0 %540
        %v546 = vmax.f32 %v339, %v535
        %v547 = vmax.f32 %v340, %v537
        %v548 = vmax.f32 %v341, %v539
        %v549 = vmax.f32 %v342, %v541
        %550 = vrot.lane.b32.xlu0 %v353, 127
        %v551 = vpop.permute.xlu0 %550
        %552 = vrot.lane.b32.xlu0 %v354, 127
        %v553 = vpop.permute.xlu0 %552
        %554 = vrot.lane.b32.xlu0 %v355, 127
        %v555 = vpop.permute.xlu0 %554
        %556 = vrot.lane.b32.xlu0 %v356, 127
        %v557 = vpop.permute.xlu0 %556
        %v562 = vmax.f32 %v349, %v551
        %v563 = vmax.f32 %v350, %v553
        %v564 = vmax.f32 %v351, %v555
        %v565 = vmax.f32 %v352, %v557
        %v566 = vmax.f32 %v546, %v562
        %v567 = vmax.f32 %v547, %v563
        %v568 = vmax.f32 %v548, %v564
        %v569 = vmax.f32 %v549, %v565
        %v574 = vrot.slane %v566, 4
        %v575 = vrot.slane %v567, 3
        %v576 = vsel %vm385, %v575, %v574
        %v577 = vrot.slane %v568, 2
        %v578 = vsel %vm388, %v577, %v576
        %v579 = vrot.slane %v569, 1
        %v580 = vsel %vm391, %v579, %v578
        %v582 = vsel %vm448, %v531, %v580
        %v584 = vcombine.high %v582, %v582
        %v586 = vunpack.c.l.s4 1966171168
        %v587 = vunpack.c.0.s8 %v586
        %v588 = vlaneseq
        %v589 = vshrl.u32 %v588, 7
        %v590 = vsub.s32 %v587, %v589
        %v591 = vrot.slane %v582, %v590
        %v593 = vunpack.c.l.s4 1966171168
        %v594 = vunpack.c.0.s8 %v593
        %v595 = vlaneseq
        %v596 = vshrl.u32 %v595, 7
        %v597 = vsub.s32 %v594, %v596
        %v598 = vrot.slane %v584, %v597
        %v599 = vcombine.high %v591, %v591
        %v600 = vcombine.high %v598, %v598
        %v602 = vunpack.c.l.s4 1966171168
        %v603 = vunpack.c.0.s8 %v602
        %v604 = vlaneseq
        %v605 = vshrl.u32 %v604, 7
        %v606 = vsub.s32 %v603, %v605
        %v607 = vrot.slane %v591, %v606
        %v609 = vunpack.c.l.s4 1966171168
        %v610 = vunpack.c.0.s8 %v609
        %v611 = vlaneseq
        %v612 = vshrl.u32 %v611, 7
        %v613 = vsub.s32 %v610, %v612
        %v614 = vrot.slane %v598, %v613
        %v616 = vunpack.c.l.s4 1966171168
        %v617 = vunpack.c.0.s8 %v616
        %v618 = vlaneseq
        %v619 = vshrl.u32 %v618, 7
        %v620 = vsub.s32 %v617, %v619
        %v621 = vrot.slane %v599, %v620
        %v623 = vunpack.c.l.s4 1966171168
        %v624 = vunpack.c.0.s8 %v623
        %v625 = vlaneseq
        %v626 = vshrl.u32 %v625, 7
        %v627 = vsub.s32 %v624, %v626
        %v628 = vrot.slane %v600, %v627
        %v629 = vcombine.high %v607, %v607
        %v630 = vcombine.high %v614, %v614
        %v631 = vcombine.high %v621, %v621
        %v632 = vcombine.high %v628, %v628
        %vm641 = vcmask 57344
        %642 = vst.msk [vmem:[%s292] sm:$0x1] %vm641, %v607
        %643 = vst.msk [vmem:[%s292 + $0x8] sm:$0x1] %vm641, %v621
        %644 = vst.msk [vmem:[%s292 + $0x10] sm:$0x1] %vm641, %v629
        %645 = vst.msk [vmem:[%s292 + $0x18] sm:$0x1] %vm641, %v631
        %646 = vst.msk [vmem:[%s292 + $0x20] sm:$0x1] %vm641, %v614
        %647 = vst.msk [vmem:[%s292 + $0x28] sm:$0x1] %vm641, %v628
        %648 = vst.msk [vmem:[%s292 + $0x30] sm:$0x1] %vm641, %v630
        %649 = vst.msk [vmem:[%s292 + $0x38] sm:$0x1] %vm641, %v632
        %v650 = vld [vmem:[%s338 + $0x1] sm:$0x1]
        %v651 = vld [vmem:[%s338 + $0x9] sm:$0x1]
        %v652 = vld [vmem:[%s338 + $0x11] sm:$0x1]
        %v653 = vld [vmem:[%s338 + $0x19] sm:$0x1]
        %v654 = vld [vmem:[%s343 + $0x1] sm:$0x1]
        %v655 = vld [vmem:[%s343 + $0x9] sm:$0x1]
        %v656 = vld [vmem:[%s343 + $0x11] sm:$0x1]
        %v657 = vld [vmem:[%s343 + $0x19] sm:$0x1]
        %v658 = vld [vmem:[%s348 + $0x2] sm:$0x1]
        %v659 = vld [vmem:[%s348 + $0xa] sm:$0x1]
        %v660 = vld [vmem:[%s348 + $0x12] sm:$0x1]
        %v661 = vld [vmem:[%s348 + $0x1a] sm:$0x1]
        %v662 = vld [vmem:[%s316 + $0x2] sm:$0x1]
        %v663 = vld [vmem:[%s316 + $0xa] sm:$0x1]
        %v664 = vld [vmem:[%s316 + $0x12] sm:$0x1]
        %v665 = vld [vmem:[%s316 + $0x1a] sm:$0x1]
        %v666 = vld [vmem:[%s316 + $0x1] sm:$0x1]
        %v667 = vld [vmem:[%s316 + $0x9] sm:$0x1]
        %v668 = vld [vmem:[%s316 + $0x11] sm:$0x1]
        %v669 = vld [vmem:[%s316 + $0x19] sm:$0x1]
        %v670 = vld [vmem:[%s348 + $0x1] sm:$0x1]
        %v671 = vld [vmem:[%s348 + $0x9] sm:$0x1]
        %v672 = vld [vmem:[%s348 + $0x11] sm:$0x1]
        %v673 = vld [vmem:[%s348 + $0x19] sm:$0x1]
        %v678 = vrot.slane %v667, 7
        %v679 = vsel %vm370, %v678, %v666
        %v680 = vrot.slane %v668, 6
        %v681 = vsel %vm373, %v680, %v679
        %v682 = vrot.slane %v669, 5
        %v683 = vsel %vm376, %v682, %v681
        %v689 = vrot.slane %v670, 4
        %v690 = vrot.slane %v671, 3
        %v691 = vsel %vm385, %v690, %v689
        %v692 = vrot.slane %v672, 2
        %v693 = vsel %vm388, %v692, %v691
        %v694 = vrot.slane %v673, 1
        %v695 = vsel %vm391, %v694, %v693
        %697 = vrot.lane.b32.xlu0 %v683, 127
        %v698 = vpop.permute.xlu0 %697
        %v704 = vrot.slane %v654, 4
        %v705 = vrot.slane %v655, 3
        %v706 = vsel %vm385, %v705, %v704
        %v707 = vrot.slane %v656, 2
        %v708 = vsel %vm388, %v707, %v706
        %v709 = vrot.slane %v657, 1
        %v710 = vsel %vm391, %v709, %v708
        %v716 = vrot.slane %v651, 7
        %v717 = vsel %vm370, %v716, %v650
        %v718 = vrot.slane %v652, 6
        %v719 = vsel %vm373, %v718, %v717
        %v720 = vrot.slane %v653, 5
        %v721 = vsel %vm376, %v720, %v719
        %723 = vrot.lane.b32.xlu0 %v710, 127
        %v724 = vpop.permute.xlu0 %723
        %v730 = vrot.slane %v663, 7
        %v731 = vsel %vm370, %v730, %v662
        %v732 = vrot.slane %v664, 6
        %v733 = vsel %vm373, %v732, %v731
        %v734 = vrot.slane %v665, 5
        %v735 = vsel %vm376, %v734, %v733
        %v741 = vrot.slane %v658, 4
        %v742 = vrot.slane %v659, 3
        %v743 = vsel %vm385, %v742, %v741
        %v744 = vrot.slane %v660, 2
        %v745 = vsel %vm388, %v744, %v743
        %v746 = vrot.slane %v661, 1
        %v747 = vsel %vm391, %v746, %v745
        %749 = vrot.lane.b32.xlu0 %v735, 127
        %v750 = vpop.permute.xlu0 %749
        %v751 = vsel %vm448, %v683, %v695
        %v752 = vsel %vm448, %v698, %v710
        %v753 = vsel %vm448, %v721, %v724
        %v754 = vsel %vm448, %v735, %v747
        %v755 = vsel %vm448, %v750, 0
        %757 = vmatprep.subr.mxu0 0.0
        %758 = vmatpush1.msra.mxu0 %v751
        %759 = vmatprep.subr.mxu0 0.0
        %760 = vmatpush1.msra.mxu0 %v752
        %761 = vmatprep.subr.mxu0 0.0
        %762 = vmatpush1.msra.mxu0 %v753
        %763 = vmatprep.subr.mxu0 0.0
        %764 = vmatpush1.msra.mxu0 %v754
        %765 = vmatprep.subr.mxu0 0.0
        %766 = vmatpush1.msra.mxu0 %v755
        %767 = vmatprep.subr.mxu0 0.0
        %768 = vmatpush1.msra.mxu0 0.0
        %769 = vmatprep.subr.mxu0 0.0
        %770 = vmatpush1.msra.mxu0 0.0
        %771 = vmatprep.subr.mxu0 0.0
        %772 = vmatpush1.msra.mxu0 0.0
        %773 = vmatprep.subr.mxu0 0.0
        %774 = vmatpush1.msra.mxu0 0.0
        %775 = vmatprep.subr.mxu0 0.0
        %776 = vmatpush1.msra.mxu0 0.0
        %777 = vmatprep.subr.mxu0 0.0
        %778 = vmatpush1.msra.mxu0 0.0
        %779 = vmatprep.subr.mxu0 0.0
        %780 = vmatpush1.msra.mxu0 0.0
        %781 = vmatprep.subr.mxu0 0.0
        %782 = vmatpush1.msra.mxu0 0.0
        %783 = vmatprep.subr.mxu0 0.0
        %784 = vmatpush1.msra.mxu0 0.0
        %785 = vmatprep.subr.mxu0 0.0
        %786 = vmatpush1.msra.mxu0 0.0
        %787 = vmatprep.subr.mxu0 0.0
        %788 = vmatpush1.msra.mxu0 0.0
        %789 = vmatprep.subr.mxu0 0.0
        %790 = vmatpush1.msra.mxu0 0.0
        %791 = vmatprep.subr.mxu0 0.0
        %792 = vmatpush1.msra.mxu0 0.0
        %793 = vmatprep.subr.mxu0 0.0
        %794 = vmatpush1.msra.mxu0 0.0
        %795 = vmatprep.subr.mxu0 0.0
        %796 = vmatpush1.msra.mxu0 0.0
        %797 = vmatprep.subr.mxu0 0.0
        %798 = vmatpush1.msra.mxu0 0.0
        %799 = vmatprep.subr.mxu0 0.0
        %800 = vmatpush1.msra.mxu0 0.0
        %801 = vmatprep.subr.mxu0 0.0
        %802 = vmatpush1.msra.mxu0 0.0
        %803 = vmatprep.subr.mxu0 0.0
        %804 = vmatpush1.msra.mxu0 0.0
        %805 = vmatprep.subr.mxu0 0.0
        %806 = vmatpush1.msra.mxu0 0.0
        %807 = vmatprep.subr.mxu0 0.0
        %808 = vmatpush1.msra.mxu0 0.0
        %809 = vmatprep.subr.mxu0 0.0
        %810 = vmatpush1.msra.mxu0 0.0
        %811 = vmatprep.subr.mxu0 0.0
        %812 = vmatpush1.msra.mxu0 0.0
        %813 = vmatprep.subr.mxu0 0.0
        %814 = vmatpush1.msra.mxu0 0.0
        %815 = vmatprep.subr.mxu0 0.0
        %816 = vmatpush1.msra.mxu0 0.0
        %817 = vmatprep.subr.mxu0 0.0
        %818 = vmatpush1.msra.mxu0 0.0
        %819 = vmatprep.subr.mxu0 0.0
        %820 = vmatpush1.msra.mxu0 0.0
        %821 = vmatprep.mubr.f32.mxu0 0.0
        %822 = vmatmul.mubr.f32.gmra.mrb[0].mxu0 %v460
        %v823 = vpop.f32.mrb[0].mxu0
        %v824 = vadd.f32 %v456, %v823
        %v825 = vpop.f32.mrb[0].mxu0
        %826 = vdwg.mxu0
        %827 = vrot.lane.b32.xlu0 %v654, 127
        %v828 = vpop.permute.xlu0 %827
        %829 = vrot.lane.b32.xlu0 %v655, 127
        %v830 = vpop.permute.xlu0 %829
        %831 = vrot.lane.b32.xlu0 %v656, 127
        %v832 = vpop.permute.xlu0 %831
        %833 = vrot.lane.b32.xlu0 %v657, 127
        %v834 = vpop.permute.xlu0 %833
        %v839 = vmax.f32 %v650, %v828
        %v840 = vmax.f32 %v651, %v830
        %v841 = vmax.f32 %v652, %v832
        %v842 = vmax.f32 %v653, %v834
        %843 = vrot.lane.b32.xlu0 %v662, 127
        %v844 = vpop.permute.xlu0 %843
        %845 = vrot.lane.b32.xlu0 %v663, 127
        %v846 = vpop.permute.xlu0 %845
        %847 = vrot.lane.b32.xlu0 %v664, 127
        %v848 = vpop.permute.xlu0 %847
        %849 = vrot.lane.b32.xlu0 %v665, 127
        %v850 = vpop.permute.xlu0 %849
        %v855 = vmax.f32 %v658, %v844
        %v856 = vmax.f32 %v659, %v846
        %v857 = vmax.f32 %v660, %v848
        %v858 = vmax.f32 %v661, %v850
        %v859 = vmax.f32 %v839, %v855
        %v860 = vmax.f32 %v840, %v856
        %v861 = vmax.f32 %v841, %v857
        %v862 = vmax.f32 %v842, %v858
        %v867 = vrot.slane %v859, 4
        %v868 = vrot.slane %v860, 3
        %v869 = vsel %vm385, %v868, %v867
        %v870 = vrot.slane %v861, 2
        %v871 = vsel %vm388, %v870, %v869
        %v872 = vrot.slane %v862, 1
        %v873 = vsel %vm391, %v872, %v871
        %v875 = vsel %vm448, %v824, %v873
        %v877 = vcombine.high %v875, %v875
        %v879 = vunpack.c.l.s4 1966171168
        %v880 = vunpack.c.0.s8 %v879
        %v881 = vlaneseq
        %v882 = vshrl.u32 %v881, 7
        %v883 = vsub.s32 %v880, %v882
        %v884 = vrot.slane %v875, %v883
        %v886 = vunpack.c.l.s4 1966171168
        %v887 = vunpack.c.0.s8 %v886
        %v888 = vlaneseq
        %v889 = vshrl.u32 %v888, 7
        %v890 = vsub.s32 %v887, %v889
        %v891 = vrot.slane %v877, %v890
        %v892 = vcombine.high %v884, %v884
        %v893 = vcombine.high %v891, %v891
        %v895 = vunpack.c.l.s4 1966171168
        %v896 = vunpack.c.0.s8 %v895
        %v897 = vlaneseq
        %v898 = vshrl.u32 %v897, 7
        %v899 = vsub.s32 %v896, %v898
        %v900 = vrot.slane %v884, %v899
        %v902 = vunpack.c.l.s4 1966171168
        %v903 = vunpack.c.0.s8 %v902
        %v904 = vlaneseq
        %v905 = vshrl.u32 %v904, 7
        %v906 = vsub.s32 %v903, %v905
        %v907 = vrot.slane %v891, %v906
        %v909 = vunpack.c.l.s4 1966171168
        %v910 = vunpack.c.0.s8 %v909
        %v911 = vlaneseq
        %v912 = vshrl.u32 %v911, 7
        %v913 = vsub.s32 %v910, %v912
        %v914 = vrot.slane %v892, %v913
        %v916 = vunpack.c.l.s4 1966171168
        %v917 = vunpack.c.0.s8 %v916
        %v918 = vlaneseq
        %v919 = vshrl.u32 %v918, 7
        %v920 = vsub.s32 %v917, %v919
        %v921 = vrot.slane %v893, %v920
        %v922 = vcombine.high %v900, %v900
        %v923 = vcombine.high %v907, %v907
        %v924 = vcombine.high %v914, %v914
        %v925 = vcombine.high %v921, %v921
        %934 = vst.msk [vmem:[%s292 + $0x1] sm:$0x1] %vm641, %v900
        %935 = vst.msk [vmem:[%s292 + $0x9] sm:$0x1] %vm641, %v914
        %936 = vst.msk [vmem:[%s292 + $0x11] sm:$0x1] %vm641, %v922
        %937 = vst.msk [vmem:[%s292 + $0x19] sm:$0x1] %vm641, %v924
        %938 = vst.msk [vmem:[%s292 + $0x21] sm:$0x1] %vm641, %v907
        %939 = vst.msk [vmem:[%s292 + $0x29] sm:$0x1] %vm641, %v921
        %940 = vst.msk [vmem:[%s292 + $0x31] sm:$0x1] %vm641, %v923
        %941 = vst.msk [vmem:[%s292 + $0x39] sm:$0x1] %vm641, %v925
        %v942 = vld [vmem:[%s338 + $0x2] sm:$0x1]
        %v943 = vld [vmem:[%s338 + $0xa] sm:$0x1]
        %v944 = vld [vmem:[%s338 + $0x12] sm:$0x1]
        %v945 = vld [vmem:[%s338 + $0x1a] sm:$0x1]
        %v946 = vld [vmem:[%s343 + $0x2] sm:$0x1]
        %v947 = vld [vmem:[%s343 + $0xa] sm:$0x1]
        %v948 = vld [vmem:[%s343 + $0x12] sm:$0x1]
        %v949 = vld [vmem:[%s343 + $0x1a] sm:$0x1]
        %v950 = vld [vmem:[%s348 + $0x3] sm:$0x1]
        %v951 = vld [vmem:[%s348 + $0xb] sm:$0x1]
        %v952 = vld [vmem:[%s348 + $0x13] sm:$0x1]
        %v953 = vld [vmem:[%s348 + $0x1b] sm:$0x1]
        %v954 = vld [vmem:[%s316 + $0x3] sm:$0x1]
        %v955 = vld [vmem:[%s316 + $0xb] sm:$0x1]
        %v956 = vld [vmem:[%s316 + $0x13] sm:$0x1]
        %v957 = vld [vmem:[%s316 + $0x1b] sm:$0x1]
        %v958 = vld [vmem:[%s316 + $0x2] sm:$0x1]
        %v959 = vld [vmem:[%s316 + $0xa] sm:$0x1]
        %v960 = vld [vmem:[%s316 + $0x12] sm:$0x1]
        %v961 = vld [vmem:[%s316 + $0x1a] sm:$0x1]
        %v962 = vld [vmem:[%s348 + $0x2] sm:$0x1]
        %v963 = vld [vmem:[%s348 + $0xa] sm:$0x1]
        %v964 = vld [vmem:[%s348 + $0x12] sm:$0x1]
        %v965 = vld [vmem:[%s348 + $0x1a] sm:$0x1]
        %v970 = vrot.slane %v959, 7
        %v971 = vsel %vm370, %v970, %v958
        %v972 = vrot.slane %v960, 6
        %v973 = vsel %vm373, %v972, %v971
        %v974 = vrot.slane %v961, 5
        %v975 = vsel %vm376, %v974, %v973
        %v981 = vrot.slane %v962, 4
        %v982 = vrot.slane %v963, 3
        %v983 = vsel %vm385, %v982, %v981
        %v984 = vrot.slane %v964, 2
        %v985 = vsel %vm388, %v984, %v983
        %v986 = vrot.slane %v965, 1
        %v987 = vsel %vm391, %v986, %v985
        %989 = vrot.lane.b32.xlu0 %v975, 127
        %v990 = vpop.permute.xlu0 %989
        %v996 = vrot.slane %v946, 4
        %v997 = vrot.slane %v947, 3
        %v998 = vsel %vm385, %v997, %v996
        %v999 = vrot.slane %v948, 2
        %v1000 = vsel %vm388, %v999, %v998
        %v1001 = vrot.slane %v949, 1
        %v1002 = vsel %vm391, %v1001, %v1000
        %v1008 = vrot.slane %v943, 7
        %v1009 = vsel %vm370, %v1008, %v942
        %v1010 = vrot.slane %v944, 6
        %v1011 = vsel %vm373, %v1010, %v1009
        %v1012 = vrot.slane %v945, 5
        %v1013 = vsel %vm376, %v1012, %v1011
        %1015 = vrot.lane.b32.xlu0 %v1002, 127
        %v1016 = vpop.permute.xlu0 %1015
        %v1022 = vrot.slane %v955, 7
        %v1023 = vsel %vm370, %v1022, %v954
        %v1024 = vrot.slane %v956, 6
        %v1025 = vsel %vm373, %v1024, %v1023
        %v1026 = vrot.slane %v957, 5
        %v1027 = vsel %vm376, %v1026, %v1025
        %v1033 = vrot.slane %v950, 4
        %v1034 = vrot.slane %v951, 3
        %v1035 = vsel %vm385, %v1034, %v1033
        %v1036 = vrot.slane %v952, 2
        %v1037 = vsel %vm388, %v1036, %v1035
        %v1038 = vrot.slane %v953, 1
        %v1039 = vsel %vm391, %v1038, %v1037
        %1041 = vrot.lane.b32.xlu0 %v1027, 127
        %v1042 = vpop.permute.xlu0 %1041
        %v1043 = vsel %vm448, %v975, %v987
        %v1044 = vsel %vm448, %v990, %v1002
        %v1045 = vsel %vm448, %v1013, %v1016
        %v1046 = vsel %vm448, %v1027, %v1039
        %v1047 = vsel %vm448, %v1042, 0
        %1049 = vmatprep.subr.mxu0 0.0
        %1050 = vmatpush1.msra.mxu0 %v1043
        %1051 = vmatprep.subr.mxu0 0.0
        %1052 = vmatpush1.msra.mxu0 %v1044
        %1053 = vmatprep.subr.mxu0 0.0
        %1054 = vmatpush1.msra.mxu0 %v1045
        %1055 = vmatprep.subr.mxu0 0.0
        %1056 = vmatpush1.msra.mxu0 %v1046
        %1057 = vmatprep.subr.mxu0 0.0
        %1058 = vmatpush1.msra.mxu0 %v1047
        %1059 = vmatprep.subr.mxu0 0.0
        %1060 = vmatpush1.msra.mxu0 0.0
        %1061 = vmatprep.subr.mxu0 0.0
        %1062 = vmatpush1.msra.mxu0 0.0
        %1063 = vmatprep.subr.mxu0 0.0
        %1064 = vmatpush1.msra.mxu0 0.0
        %1065 = vmatprep.subr.mxu0 0.0
        %1066 = vmatpush1.msra.mxu0 0.0
        %1067 = vmatprep.subr.mxu0 0.0
        %1068 = vmatpush1.msra.mxu0 0.0
        %1069 = vmatprep.subr.mxu0 0.0
        %1070 = vmatpush1.msra.mxu0 0.0
        %1071 = vmatprep.subr.mxu0 0.0
        %1072 = vmatpush1.msra.mxu0 0.0
        %1073 = vmatprep.subr.mxu0 0.0
        %1074 = vmatpush1.msra.mxu0 0.0
        %1075 = vmatprep.subr.mxu0 0.0
        %1076 = vmatpush1.msra.mxu0 0.0
        %1077 = vmatprep.subr.mxu0 0.0
        %1078 = vmatpush1.msra.mxu0 0.0
        %1079 = vmatprep.subr.mxu0 0.0
        %1080 = vmatpush1.msra.mxu0 0.0
        %1081 = vmatprep.subr.mxu0 0.0
        %1082 = vmatpush1.msra.mxu0 0.0
        %1083 = vmatprep.subr.mxu0 0.0
        %1084 = vmatpush1.msra.mxu0 0.0
        %1085 = vmatprep.subr.mxu0 0.0
        %1086 = vmatpush1.msra.mxu0 0.0
        %1087 = vmatprep.subr.mxu0 0.0
        %1088 = vmatpush1.msra.mxu0 0.0
        %1089 = vmatprep.subr.mxu0 0.0
        %1090 = vmatpush1.msra.mxu0 0.0
        %1091 = vmatprep.subr.mxu0 0.0
        %1092 = vmatpush1.msra.mxu0 0.0
        %1093 = vmatprep.subr.mxu0 0.0
        %1094 = vmatpush1.msra.mxu0 0.0
        %1095 = vmatprep.subr.mxu0 0.0
        %1096 = vmatpush1.msra.mxu0 0.0
        %1097 = vmatprep.subr.mxu0 0.0
        %1098 = vmatpush1.msra.mxu0 0.0
        %1099 = vmatprep.subr.mxu0 0.0
        %1100 = vmatpush1.msra.mxu0 0.0
        %1101 = vmatprep.subr.mxu0 0.0
        %1102 = vmatpush1.msra.mxu0 0.0
        %1103 = vmatprep.subr.mxu0 0.0
        %1104 = vmatpush1.msra.mxu0 0.0
        %1105 = vmatprep.subr.mxu0 0.0
        %1106 = vmatpush1.msra.mxu0 0.0
        %1107 = vmatprep.subr.mxu0 0.0
        %1108 = vmatpush1.msra.mxu0 0.0
        %1109 = vmatprep.subr.mxu0 0.0
        %1110 = vmatpush1.msra.mxu0 0.0
        %1111 = vmatprep.subr.mxu0 0.0
        %1112 = vmatpush1.msra.mxu0 0.0
        %1113 = vmatprep.mubr.f32.mxu0 0.0
        %1114 = vmatmul.mubr.f32.gmra.mrb[0].mxu0 %v460
        %v1115 = vpop.f32.mrb[0].mxu0
        %v1116 = vadd.f32 %v456, %v1115
        %v1117 = vpop.f32.mrb[0].mxu0
        %1118 = vdwg.mxu0
        %1119 = vrot.lane.b32.xlu0 %v946, 127
        %v1120 = vpop.permute.xlu0 %1119
        %1121 = vrot.lane.b32.xlu0 %v947, 127
        %v1122 = vpop.permute.xlu0 %1121
        %1123 = vrot.lane.b32.xlu0 %v948, 127
        %v1124 = vpop.permute.xlu0 %1123
        %1125 = vrot.lane.b32.xlu0 %v949, 127
        %v1126 = vpop.permute.xlu0 %1125
        %v1131 = vmax.f32 %v942, %v1120
        %v1132 = vmax.f32 %v943, %v1122
        %v1133 = vmax.f32 %v944, %v1124
        %v1134 = vmax.f32 %v945, %v1126
        %1135 = vrot.lane.b32.xlu0 %v954, 127
        %v1136 = vpop.permute.xlu0 %1135
        %1137 = vrot.lane.b32.xlu0 %v955, 127
        %v1138 = vpop.permute.xlu0 %1137
        %1139 = vrot.lane.b32.xlu0 %v956, 127
        %v1140 = vpop.permute.xlu0 %1139
        %1141 = vrot.lane.b32.xlu0 %v957, 127
        %v1142 = vpop.permute.xlu0 %1141
        %v1147 = vmax.f32 %v950, %v1136
        %v1148 = vmax.f32 %v951, %v1138
        %v1149 = vmax.f32 %v952, %v1140
        %v1150 = vmax.f32 %v953, %v1142
        %v1151 = vmax.f32 %v1131, %v1147
        %v1152 = vmax.f32 %v1132, %v1148
        %v1153 = vmax.f32 %v1133, %v1149
        %v1154 = vmax.f32 %v1134, %v1150
        %v1159 = vrot.slane %v1151, 4
        %v1160 = vrot.slane %v1152, 3
        %v1161 = vsel %vm385, %v1160, %v1159
        %v1162 = vrot.slane %v1153, 2
        %v1163 = vsel %vm388, %v1162, %v1161
        %v1164 = vrot.slane %v1154, 1
        %v1165 = vsel %vm391, %v1164, %v1163
        %v1167 = vsel %vm448, %v1116, %v1165
        %v1169 = vcombine.high %v1167, %v1167
        %v1171 = vunpack.c.l.s4 1966171168
        %v1172 = vunpack.c.0.s8 %v1171
        %v1173 = vlaneseq
        %v1174 = vshrl.u32 %v1173, 7
        %v1175 = vsub.s32 %v1172, %v1174
        %v1176 = vrot.slane %v1167, %v1175
        %v1178 = vunpack.c.l.s4 1966171168
        %v1179 = vunpack.c.0.s8 %v1178
        %v1180 = vlaneseq
        %v1181 = vshrl.u32 %v1180, 7
        %v1182 = vsub.s32 %v1179, %v1181
        %v1183 = vrot.slane %v1169, %v1182
        %v1184 = vcombine.high %v1176, %v1176
        %v1185 = vcombine.high %v1183, %v1183
        %v1187 = vunpack.c.l.s4 1966171168
        %v1188 = vunpack.c.0.s8 %v1187
        %v1189 = vlaneseq
        %v1190 = vshrl.u32 %v1189, 7
        %v1191 = vsub.s32 %v1188, %v1190
        %v1192 = vrot.slane %v1176, %v1191
        %v1194 = vunpack.c.l.s4 1966171168
        %v1195 = vunpack.c.0.s8 %v1194
        %v1196 = vlaneseq
        %v1197 = vshrl.u32 %v1196, 7
        %v1198 = vsub.s32 %v1195, %v1197
        %v1199 = vrot.slane %v1183, %v1198
        %v1201 = vunpack.c.l.s4 1966171168
        %v1202 = vunpack.c.0.s8 %v1201
        %v1203 = vlaneseq
        %v1204 = vshrl.u32 %v1203, 7
        %v1205 = vsub.s32 %v1202, %v1204
        %v1206 = vrot.slane %v1184, %v1205
        %v1208 = vunpack.c.l.s4 1966171168
        %v1209 = vunpack.c.0.s8 %v1208
        %v1210 = vlaneseq
        %v1211 = vshrl.u32 %v1210, 7
        %v1212 = vsub.s32 %v1209, %v1211
        %v1213 = vrot.slane %v1185, %v1212
        %v1214 = vcombine.high %v1192, %v1192
        %v1215 = vcombine.high %v1199, %v1199
        %v1216 = vcombine.high %v1206, %v1206
        %v1217 = vcombine.high %v1213, %v1213
        %1226 = vst.msk [vmem:[%s292 + $0x2] sm:$0x1] %vm641, %v1192
        %1227 = vst.msk [vmem:[%s292 + $0xa] sm:$0x1] %vm641, %v1206
        %1228 = vst.msk [vmem:[%s292 + $0x12] sm:$0x1] %vm641, %v1214
        %1229 = vst.msk [vmem:[%s292 + $0x1a] sm:$0x1] %vm641, %v1216
        %1230 = vst.msk [vmem:[%s292 + $0x22] sm:$0x1] %vm641, %v1199
        %1231 = vst.msk [vmem:[%s292 + $0x2a] sm:$0x1] %vm641, %v1213
        %1232 = vst.msk [vmem:[%s292 + $0x32] sm:$0x1] %vm641, %v1215
        %1233 = vst.msk [vmem:[%s292 + $0x3a] sm:$0x1] %vm641, %v1217
        %v1234 = vld [vmem:[%s338 + $0x3] sm:$0x1]
        %v1235 = vld [vmem:[%s338 + $0xb] sm:$0x1]
        %v1236 = vld [vmem:[%s338 + $0x13] sm:$0x1]
        %v1237 = vld [vmem:[%s338 + $0x1b] sm:$0x1]
        %v1238 = vld [vmem:[%s343 + $0x3] sm:$0x1]
        %v1239 = vld [vmem:[%s343 + $0xb] sm:$0x1]
        %v1240 = vld [vmem:[%s343 + $0x13] sm:$0x1]
        %v1241 = vld [vmem:[%s343 + $0x1b] sm:$0x1]
        %v1242 = vld [vmem:[%s348 + $0x4] sm:$0x1]
        %v1243 = vld [vmem:[%s348 + $0xc] sm:$0x1]
        %v1244 = vld [vmem:[%s348 + $0x14] sm:$0x1]
        %v1245 = vld [vmem:[%s348 + $0x1c] sm:$0x1]
        %v1246 = vld [vmem:[%s316 + $0x4] sm:$0x1]
        %v1247 = vld [vmem:[%s316 + $0xc] sm:$0x1]
        %v1248 = vld [vmem:[%s316 + $0x14] sm:$0x1]
        %v1249 = vld [vmem:[%s316 + $0x1c] sm:$0x1]
        %v1250 = vld [vmem:[%s316 + $0x3] sm:$0x1]
        %v1251 = vld [vmem:[%s316 + $0xb] sm:$0x1]
        %v1252 = vld [vmem:[%s316 + $0x13] sm:$0x1]
        %v1253 = vld [vmem:[%s316 + $0x1b] sm:$0x1]
        %v1254 = vld [vmem:[%s348 + $0x3] sm:$0x1]
        %v1255 = vld [vmem:[%s348 + $0xb] sm:$0x1]
        %v1256 = vld [vmem:[%s348 + $0x13] sm:$0x1]
        %v1257 = vld [vmem:[%s348 + $0x1b] sm:$0x1]
        %v1262 = vrot.slane %v1251, 7
        %v1263 = vsel %vm370, %v1262, %v1250
        %v1264 = vrot.slane %v1252, 6
        %v1265 = vsel %vm373, %v1264, %v1263
        %v1266 = vrot.slane %v1253, 5
        %v1267 = vsel %vm376, %v1266, %v1265
        %v1273 = vrot.slane %v1254, 4
        %v1274 = vrot.slane %v1255, 3
        %v1275 = vsel %vm385, %v1274, %v1273
        %v1276 = vrot.slane %v1256, 2
        %v1277 = vsel %vm388, %v1276, %v1275
        %v1278 = vrot.slane %v1257, 1
        %v1279 = vsel %vm391, %v1278, %v1277
        %1281 = vrot.lane.b32.xlu0 %v1267, 127
        %v1282 = vpop.permute.xlu0 %1281
        %v1288 = vrot.slane %v1238, 4
        %v1289 = vrot.slane %v1239, 3
        %v1290 = vsel %vm385, %v1289, %v1288
        %v1291 = vrot.slane %v1240, 2
        %v1292 = vsel %vm388, %v1291, %v1290
        %v1293 = vrot.slane %v1241, 1
        %v1294 = vsel %vm391, %v1293, %v1292
        %v1300 = vrot.slane %v1235, 7
        %v1301 = vsel %vm370, %v1300, %v1234
        %v1302 = vrot.slane %v1236, 6
        %v1303 = vsel %vm373, %v1302, %v1301
        %v1304 = vrot.slane %v1237, 5
        %v1305 = vsel %vm376, %v1304, %v1303
        %1307 = vrot.lane.b32.xlu0 %v1294, 127
        %v1308 = vpop.permute.xlu0 %1307
        %v1314 = vrot.slane %v1247, 7
        %v1315 = vsel %vm370, %v1314, %v1246
        %v1316 = vrot.slane %v1248, 6
        %v1317 = vsel %vm373, %v1316, %v1315
        %v1318 = vrot.slane %v1249, 5
        %v1319 = vsel %vm376, %v1318, %v1317
        %v1325 = vrot.slane %v1242, 4
        %v1326 = vrot.slane %v1243, 3
        %v1327 = vsel %vm385, %v1326, %v1325
        %v1328 = vrot.slane %v1244, 2
        %v1329 = vsel %vm388, %v1328, %v1327
        %v1330 = vrot.slane %v1245, 1
        %v1331 = vsel %vm391, %v1330, %v1329
        %1333 = vrot.lane.b32.xlu0 %v1319, 127
        %v1334 = vpop.permute.xlu0 %1333
        %v1335 = vsel %vm448, %v1267, %v1279
        %v1336 = vsel %vm448, %v1282, %v1294
        %v1337 = vsel %vm448, %v1305, %v1308
        %v1338 = vsel %vm448, %v1319, %v1331
        %v1339 = vsel %vm448, %v1334, 0
        %1341 = vmatprep.subr.mxu0 0.0
        %1342 = vmatpush1.msra.mxu0 %v1335
        %1343 = vmatprep.subr.mxu0 0.0
        %1344 = vmatpush1.msra.mxu0 %v1336
        %1345 = vmatprep.subr.mxu0 0.0
        %1346 = vmatpush1.msra.mxu0 %v1337
        %1347 = vmatprep.subr.mxu0 0.0
        %1348 = vmatpush1.msra.mxu0 %v1338
        %1349 = vmatprep.subr.mxu0 0.0
        %1350 = vmatpush1.msra.mxu0 %v1339
        %1351 = vmatprep.subr.mxu0 0.0
        %1352 = vmatpush1.msra.mxu0 0.0
        %1353 = vmatprep.subr.mxu0 0.0
        %1354 = vmatpush1.msra.mxu0 0.0
        %1355 = vmatprep.subr.mxu0 0.0
        %1356 = vmatpush1.msra.mxu0 0.0
        %1357 = vmatprep.subr.mxu0 0.0
        %1358 = vmatpush1.msra.mxu0 0.0
        %1359 = vmatprep.subr.mxu0 0.0
        %1360 = vmatpush1.msra.mxu0 0.0
        %1361 = vmatprep.subr.mxu0 0.0
        %1362 = vmatpush1.msra.mxu0 0.0
        %1363 = vmatprep.subr.mxu0 0.0
        %1364 = vmatpush1.msra.mxu0 0.0
        %1365 = vmatprep.subr.mxu0 0.0
        %1366 = vmatpush1.msra.mxu0 0.0
        %1367 = vmatprep.subr.mxu0 0.0
        %1368 = vmatpush1.msra.mxu0 0.0
        %1369 = vmatprep.subr.mxu0 0.0
        %1370 = vmatpush1.msra.mxu0 0.0
        %1371 = vmatprep.subr.mxu0 0.0
        %1372 = vmatpush1.msra.mxu0 0.0
        %1373 = vmatprep.subr.mxu0 0.0
        %1374 = vmatpush1.msra.mxu0 0.0
        %1375 = vmatprep.subr.mxu0 0.0
        %1376 = vmatpush1.msra.mxu0 0.0
        %1377 = vmatprep.subr.mxu0 0.0
        %1378 = vmatpush1.msra.mxu0 0.0
        %1379 = vmatprep.subr.mxu0 0.0
        %1380 = vmatpush1.msra.mxu0 0.0
        %1381 = vmatprep.subr.mxu0 0.0
        %1382 = vmatpush1.msra.mxu0 0.0
        %1383 = vmatprep.subr.mxu0 0.0
        %1384 = vmatpush1.msra.mxu0 0.0
        %1385 = vmatprep.subr.mxu0 0.0
        %1386 = vmatpush1.msra.mxu0 0.0
        %1387 = vmatprep.subr.mxu0 0.0
        %1388 = vmatpush1.msra.mxu0 0.0
        %1389 = vmatprep.subr.mxu0 0.0
        %1390 = vmatpush1.msra.mxu0 0.0
        %1391 = vmatprep.subr.mxu0 0.0
        %1392 = vmatpush1.msra.mxu0 0.0
        %1393 = vmatprep.subr.mxu0 0.0
        %1394 = vmatpush1.msra.mxu0 0.0
        %1395 = vmatprep.subr.mxu0 0.0
        %1396 = vmatpush1.msra.mxu0 0.0
        %1397 = vmatprep.subr.mxu0 0.0
        %1398 = vmatpush1.msra.mxu0 0.0
        %1399 = vmatprep.subr.mxu0 0.0
        %1400 = vmatpush1.msra.mxu0 0.0
        %1401 = vmatprep.subr.mxu0 0.0
        %1402 = vmatpush1.msra.mxu0 0.0
        %1403 = vmatprep.subr.mxu0 0.0
        %1404 = vmatpush1.msra.mxu0 0.0
        %1405 = vmatprep.mubr.f32.mxu0 0.0
        %1406 = vmatmul.mubr.f32.gmra.mrb[0].mxu0 %v460
        %v1407 = vpop.f32.mrb[0].mxu0
        %v1408 = vadd.f32 %v456, %v1407
        %v1409 = vpop.f32.mrb[0].mxu0
        %1410 = vdwg.mxu0
        %1411 = vrot.lane.b32.xlu0 %v1238, 127
        %v1412 = vpop.permute.xlu0 %1411
        %1413 = vrot.lane.b32.xlu0 %v1239, 127
        %v1414 = vpop.permute.xlu0 %1413
        %1415 = vrot.lane.b32.xlu0 %v1240, 127
        %v1416 = vpop.permute.xlu0 %1415
        %1417 = vrot.lane.b32.xlu0 %v1241, 127
        %v1418 = vpop.permute.xlu0 %1417
        %v1423 = vmax.f32 %v1234, %v1412
        %v1424 = vmax.f32 %v1235, %v1414
        %v1425 = vmax.f32 %v1236, %v1416
        %v1426 = vmax.f32 %v1237, %v1418
        %1427 = vrot.lane.b32.xlu0 %v1246, 127
        %v1428 = vpop.permute.xlu0 %1427
        %1429 = vrot.lane.b32.xlu0 %v1247, 127
        %v1430 = vpop.permute.xlu0 %1429
        %1431 = vrot.lane.b32.xlu0 %v1248, 127
        %v1432 = vpop.permute.xlu0 %1431
        %1433 = vrot.lane.b32.xlu0 %v1249, 127
        %v1434 = vpop.permute.xlu0 %1433
        %v1439 = vmax.f32 %v1242, %v1428
        %v1440 = vmax.f32 %v1243, %v1430
        %v1441 = vmax.f32 %v1244, %v1432
        %v1442 = vmax.f32 %v1245, %v1434
        %v1443 = vmax.f32 %v1423, %v1439
        %v1444 = vmax.f32 %v1424, %v1440
        %v1445 = vmax.f32 %v1425, %v1441
        %v1446 = vmax.f32 %v1426, %v1442
        %v1451 = vrot.slane %v1443, 4
        %v1452 = vrot.slane %v1444, 3
        %v1453 = vsel %vm385, %v1452, %v1451
        %v1454 = vrot.slane %v1445, 2
        %v1455 = vsel %vm388, %v1454, %v1453
        %v1456 = vrot.slane %v1446, 1
        %v1457 = vsel %vm391, %v1456, %v1455
        %v1459 = vsel %vm448, %v1408, %v1457
        %v1461 = vcombine.high %v1459, %v1459
        %v1463 = vunpack.c.l.s4 1966171168
        %v1464 = vunpack.c.0.s8 %v1463
        %v1465 = vlaneseq
        %v1466 = vshrl.u32 %v1465, 7
        %v1467 = vsub.s32 %v1464, %v1466
        %v1468 = vrot.slane %v1459, %v1467
        %v1470 = vunpack.c.l.s4 1966171168
        %v1471 = vunpack.c.0.s8 %v1470
        %v1472 = vlaneseq
        %v1473 = vshrl.u32 %v1472, 7
        %v1474 = vsub.s32 %v1471, %v1473
        %v1475 = vrot.slane %v1461, %v1474
        %v1476 = vcombine.high %v1468, %v1468
        %v1477 = vcombine.high %v1475, %v1475
        %v1479 = vunpack.c.l.s4 1966171168
        %v1480 = vunpack.c.0.s8 %v1479
        %v1481 = vlaneseq
        %v1482 = vshrl.u32 %v1481, 7
        %v1483 = vsub.s32 %v1480, %v1482
        %v1484 = vrot.slane %v1468, %v1483
        %v1486 = vunpack.c.l.s4 1966171168
        %v1487 = vunpack.c.0.s8 %v1486
        %v1488 = vlaneseq
        %v1489 = vshrl.u32 %v1488, 7
        %v1490 = vsub.s32 %v1487, %v1489
        %v1491 = vrot.slane %v1475, %v1490
        %v1493 = vunpack.c.l.s4 1966171168
        %v1494 = vunpack.c.0.s8 %v1493
        %v1495 = vlaneseq
        %v1496 = vshrl.u32 %v1495, 7
        %v1497 = vsub.s32 %v1494, %v1496
        %v1498 = vrot.slane %v1476, %v1497
        %v1500 = vunpack.c.l.s4 1966171168
        %v1501 = vunpack.c.0.s8 %v1500
        %v1502 = vlaneseq
        %v1503 = vshrl.u32 %v1502, 7
        %v1504 = vsub.s32 %v1501, %v1503
        %v1505 = vrot.slane %v1477, %v1504
        %v1506 = vcombine.high %v1484, %v1484
        %v1507 = vcombine.high %v1491, %v1491
        %v1508 = vcombine.high %v1498, %v1498
        %v1509 = vcombine.high %v1505, %v1505
        %1518 = vst.msk [vmem:[%s292 + $0x3] sm:$0x1] %vm641, %v1484
        %1519 = vst.msk [vmem:[%s292 + $0xb] sm:$0x1] %vm641, %v1498
        %1520 = vst.msk [vmem:[%s292 + $0x13] sm:$0x1] %vm641, %v1506
        %1521 = vst.msk [vmem:[%s292 + $0x1b] sm:$0x1] %vm641, %v1508
        %1522 = vst.msk [vmem:[%s292 + $0x23] sm:$0x1] %vm641, %v1491
        %1523 = vst.msk [vmem:[%s292 + $0x2b] sm:$0x1] %vm641, %v1505
        %1524 = vst.msk [vmem:[%s292 + $0x33] sm:$0x1] %vm641, %v1507
        %1525 = vst.msk [vmem:[%s292 + $0x3b] sm:$0x1] %vm641, %v1509
        %v1526 = vld [vmem:[%s338 + $0x4] sm:$0x1]
        %v1527 = vld [vmem:[%s338 + $0xc] sm:$0x1]
        %v1528 = vld [vmem:[%s338 + $0x14] sm:$0x1]
        %v1529 = vld [vmem:[%s338 + $0x1c] sm:$0x1]
        %v1530 = vld [vmem:[%s343 + $0x4] sm:$0x1]
        %v1531 = vld [vmem:[%s343 + $0xc] sm:$0x1]
        %v1532 = vld [vmem:[%s343 + $0x14] sm:$0x1]
        %v1533 = vld [vmem:[%s343 + $0x1c] sm:$0x1]
        %v1534 = vld [vmem:[%s348 + $0x5] sm:$0x1]
        %v1535 = vld [vmem:[%s348 + $0xd] sm:$0x1]
        %v1536 = vld [vmem:[%s348 + $0x15] sm:$0x1]
        %v1537 = vld [vmem:[%s348 + $0x1d] sm:$0x1]
        %v1538 = vld [vmem:[%s316 + $0x5] sm:$0x1]
        %v1539 = vld [vmem:[%s316 + $0xd] sm:$0x1]
        %v1540 = vld [vmem:[%s316 + $0x15] sm:$0x1]
        %v1541 = vld [vmem:[%s316 + $0x1d] sm:$0x1]
        %v1542 = vld [vmem:[%s316 + $0x4] sm:$0x1]
        %v1543 = vld [vmem:[%s316 + $0xc] sm:$0x1]
        %v1544 = vld [vmem:[%s316 + $0x14] sm:$0x1]
        %v1545 = vld [vmem:[%s316 + $0x1c] sm:$0x1]
        %v1546 = vld [vmem:[%s348 + $0x4] sm:$0x1]
        %v1547 = vld [vmem:[%s348 + $0xc] sm:$0x1]
        %v1548 = vld [vmem:[%s348 + $0x14] sm:$0x1]
        %v1549 = vld [vmem:[%s348 + $0x1c] sm:$0x1]
        %v1554 = vrot.slane %v1543, 7
        %v1555 = vsel %vm370, %v1554, %v1542
        %v1556 = vrot.slane %v1544, 6
        %v1557 = vsel %vm373, %v1556, %v1555
        %v1558 = vrot.slane %v1545, 5
        %v1559 = vsel %vm376, %v1558, %v1557
        %v1565 = vrot.slane %v1546, 4
        %v1566 = vrot.slane %v1547, 3
        %v1567 = vsel %vm385, %v1566, %v1565
        %v1568 = vrot.slane %v1548, 2
        %v1569 = vsel %vm388, %v1568, %v1567
        %v1570 = vrot.slane %v1549, 1
        %v1571 = vsel %vm391, %v1570, %v1569
        %1573 = vrot.lane.b32.xlu0 %v1559, 127
        %v1574 = vpop.permute.xlu0 %1573
        %v1580 = vrot.slane %v1530, 4
        %v1581 = vrot.slane %v1531, 3
        %v1582 = vsel %vm385, %v1581, %v1580
        %v1583 = vrot.slane %v1532, 2
        %v1584 = vsel %vm388, %v1583, %v1582
        %v1585 = vrot.slane %v1533, 1
        %v1586 = vsel %vm391, %v1585, %v1584
        %v1592 = vrot.slane %v1527, 7
        %v1593 = vsel %vm370, %v1592, %v1526
        %v1594 = vrot.slane %v1528, 6
        %v1595 = vsel %vm373, %v1594, %v1593
        %v1596 = vrot.slane %v1529, 5
        %v1597 = vsel %vm376, %v1596, %v1595
        %1599 = vrot.lane.b32.xlu0 %v1586, 127
        %v1600 = vpop.permute.xlu0 %1599
        %v1606 = vrot.slane %v1539, 7
        %v1607 = vsel %vm370, %v1606, %v1538
        %v1608 = vrot.slane %v1540, 6
        %v1609 = vsel %vm373, %v1608, %v1607
        %v1610 = vrot.slane %v1541, 5
        %v1611 = vsel %vm376, %v1610, %v1609
        %v1617 = vrot.slane %v1534, 4
        %v1618 = vrot.slane %v1535, 3
        %v1619 = vsel %vm385, %v1618, %v1617
        %v1620 = vrot.slane %v1536, 2
        %v1621 = vsel %vm388, %v1620, %v1619
        %v1622 = vrot.slane %v1537, 1
        %v1623 = vsel %vm391, %v1622, %v1621
        %1625 = vrot.lane.b32.xlu0 %v1611, 127
        %v1626 = vpop.permute.xlu0 %1625
        %v1627 = vsel %vm448, %v1559, %v1571
        %v1628 = vsel %vm448, %v1574, %v1586
        %v1629 = vsel %vm448, %v1597, %v1600
        %v1630 = vsel %vm448, %v1611, %v1623
        %v1631 = vsel %vm448, %v1626, 0
        %1633 = vmatprep.subr.mxu0 0.0
        %1634 = vmatpush1.msra.mxu0 %v1627
        %1635 = vmatprep.subr.mxu0 0.0
        %1636 = vmatpush1.msra.mxu0 %v1628
        %1637 = vmatprep.subr.mxu0 0.0
        %1638 = vmatpush1.msra.mxu0 %v1629
        %1639 = vmatprep.subr.mxu0 0.0
        %1640 = vmatpush1.msra.mxu0 %v1630
        %1641 = vmatprep.subr.mxu0 0.0
        %1642 = vmatpush1.msra.mxu0 %v1631
        %1643 = vmatprep.subr.mxu0 0.0
        %1644 = vmatpush1.msra.mxu0 0.0
        %1645 = vmatprep.subr.mxu0 0.0
        %1646 = vmatpush1.msra.mxu0 0.0
        %1647 = vmatprep.subr.mxu0 0.0
        %1648 = vmatpush1.msra.mxu0 0.0
        %1649 = vmatprep.subr.mxu0 0.0
        %1650 = vmatpush1.msra.mxu0 0.0
        %1651 = vmatprep.subr.mxu0 0.0
        %1652 = vmatpush1.msra.mxu0 0.0
        %1653 = vmatprep.subr.mxu0 0.0
        %1654 = vmatpush1.msra.mxu0 0.0
        %1655 = vmatprep.subr.mxu0 0.0
        %1656 = vmatpush1.msra.mxu0 0.0
        %1657 = vmatprep.subr.mxu0 0.0
        %1658 = vmatpush1.msra.mxu0 0.0
        %1659 = vmatprep.subr.mxu0 0.0
        %1660 = vmatpush1.msra.mxu0 0.0
        %1661 = vmatprep.subr.mxu0 0.0
        %1662 = vmatpush1.msra.mxu0 0.0
        %1663 = vmatprep.subr.mxu0 0.0
        %1664 = vmatpush1.msra.mxu0 0.0
        %1665 = vmatprep.subr.mxu0 0.0
        %1666 = vmatpush1.msra.mxu0 0.0
        %1667 = vmatprep.subr.mxu0 0.0
        %1668 = vmatpush1.msra.mxu0 0.0
        %1669 = vmatprep.subr.mxu0 0.0
        %1670 = vmatpush1.msra.mxu0 0.0
        %1671 = vmatprep.subr.mxu0 0.0
        %1672 = vmatpush1.msra.mxu0 0.0
        %1673 = vmatprep.subr.mxu0 0.0
        %1674 = vmatpush1.msra.mxu0 0.0
        %1675 = vmatprep.subr.mxu0 0.0
        %1676 = vmatpush1.msra.mxu0 0.0
        %1677 = vmatprep.subr.mxu0 0.0
        %1678 = vmatpush1.msra.mxu0 0.0
        %1679 = vmatprep.subr.mxu0 0.0
        %1680 = vmatpush1.msra.mxu0 0.0
        %1681 = vmatprep.subr.mxu0 0.0
        %1682 = vmatpush1.msra.mxu0 0.0
        %1683 = vmatprep.subr.mxu0 0.0
        %1684 = vmatpush1.msra.mxu0 0.0
        %1685 = vmatprep.subr.mxu0 0.0
        %1686 = vmatpush1.msra.mxu0 0.0
        %1687 = vmatprep.subr.mxu0 0.0
        %1688 = vmatpush1.msra.mxu0 0.0
        %1689 = vmatprep.subr.mxu0 0.0
        %1690 = vmatpush1.msra.mxu0 0.0
        %1691 = vmatprep.subr.mxu0 0.0
        %1692 = vmatpush1.msra.mxu0 0.0
        %1693 = vmatprep.subr.mxu0 0.0
        %1694 = vmatpush1.msra.mxu0 0.0
        %1695 = vmatprep.subr.mxu0 0.0
        %1696 = vmatpush1.msra.mxu0 0.0
        %1697 = vmatprep.mubr.f32.mxu0 0.0
        %1698 = vmatmul.mubr.f32.gmra.mrb[0].mxu0 %v460
        %v1699 = vpop.f32.mrb[0].mxu0
        %v1700 = vadd.f32 %v456, %v1699
        %v1701 = vpop.f32.mrb[0].mxu0
        %1702 = vdwg.mxu0
        %1703 = vrot.lane.b32.xlu0 %v1530, 127
        %v1704 = vpop.permute.xlu0 %1703
        %1705 = vrot.lane.b32.xlu0 %v1531, 127
        %v1706 = vpop.permute.xlu0 %1705
        %1707 = vrot.lane.b32.xlu0 %v1532, 127
        %v1708 = vpop.permute.xlu0 %1707
        %1709 = vrot.lane.b32.xlu0 %v1533, 127
        %v1710 = vpop.permute.xlu0 %1709
        %v1715 = vmax.f32 %v1526, %v1704
        %v1716 = vmax.f32 %v1527, %v1706
        %v1717 = vmax.f32 %v1528, %v1708
        %v1718 = vmax.f32 %v1529, %v1710
        %1719 = vrot.lane.b32.xlu0 %v1538, 127
        %v1720 = vpop.permute.xlu0 %1719
        %1721 = vrot.lane.b32.xlu0 %v1539, 127
        %v1722 = vpop.permute.xlu0 %1721
        %1723 = vrot.lane.b32.xlu0 %v1540, 127
        %v1724 = vpop.permute.xlu0 %1723
        %1725 = vrot.lane.b32.xlu0 %v1541, 127
        %v1726 = vpop.permute.xlu0 %1725
        %v1731 = vmax.f32 %v1534, %v1720
        %v1732 = vmax.f32 %v1535, %v1722
        %v1733 = vmax.f32 %v1536, %v1724
        %v1734 = vmax.f32 %v1537, %v1726
        %v1735 = vmax.f32 %v1715, %v1731
        %v1736 = vmax.f32 %v1716, %v1732
        %v1737 = vmax.f32 %v1717, %v1733
        %v1738 = vmax.f32 %v1718, %v1734
        %v1743 = vrot.slane %v1735, 4
        %v1744 = vrot.slane %v1736, 3
        %v1745 = vsel %vm385, %v1744, %v1743
        %v1746 = vrot.slane %v1737, 2
        %v1747 = vsel %vm388, %v1746, %v1745
        %v1748 = vrot.slane %v1738, 1
        %v1749 = vsel %vm391, %v1748, %v1747
        %v1751 = vsel %vm448, %v1700, %v1749
        %v1753 = vcombine.high %v1751, %v1751
        %v1755 = vunpack.c.l.s4 1966171168
        %v1756 = vunpack.c.0.s8 %v1755
        %v1757 = vlaneseq
        %v1758 = vshrl.u32 %v1757, 7
        %v1759 = vsub.s32 %v1756, %v1758
        %v1760 = vrot.slane %v1751, %v1759
        %v1762 = vunpack.c.l.s4 1966171168
        %v1763 = vunpack.c.0.s8 %v1762
        %v1764 = vlaneseq
        %v1765 = vshrl.u32 %v1764, 7
        %v1766 = vsub.s32 %v1763, %v1765
        %v1767 = vrot.slane %v1753, %v1766
        %v1768 = vcombine.high %v1760, %v1760
        %v1769 = vcombine.high %v1767, %v1767
        %v1771 = vunpack.c.l.s4 1966171168
        %v1772 = vunpack.c.0.s8 %v1771
        %v1773 = vlaneseq
        %v1774 = vshrl.u32 %v1773, 7
        %v1775 = vsub.s32 %v1772, %v1774
        %v1776 = vrot.slane %v1760, %v1775
        %v1778 = vunpack.c.l.s4 1966171168
        %v1779 = vunpack.c.0.s8 %v1778
        %v1780 = vlaneseq
        %v1781 = vshrl.u32 %v1780, 7
        %v1782 = vsub.s32 %v1779, %v1781
        %v1783 = vrot.slane %v1767, %v1782
        %v1785 = vunpack.c.l.s4 1966171168
        %v1786 = vunpack.c.0.s8 %v1785
        %v1787 = vlaneseq
        %v1788 = vshrl.u32 %v1787, 7
        %v1789 = vsub.s32 %v1786, %v1788
        %v1790 = vrot.slane %v1768, %v1789
        %v1792 = vunpack.c.l.s4 1966171168
        %v1793 = vunpack.c.0.s8 %v1792
        %v1794 = vlaneseq
        %v1795 = vshrl.u32 %v1794, 7
        %v1796 = vsub.s32 %v1793, %v1795
        %v1797 = vrot.slane %v1769, %v1796
        %v1798 = vcombine.high %v1776, %v1776
        %v1799 = vcombine.high %v1783, %v1783
        %v1800 = vcombine.high %v1790, %v1790
        %v1801 = vcombine.high %v1797, %v1797
        %1810 = vst.msk [vmem:[%s292 + $0x4] sm:$0x1] %vm641, %v1776
        %1811 = vst.msk [vmem:[%s292 + $0xc] sm:$0x1] %vm641, %v1790
        %1812 = vst.msk [vmem:[%s292 + $0x14] sm:$0x1] %vm641, %v1798
        %1813 = vst.msk [vmem:[%s292 + $0x1c] sm:$0x1] %vm641, %v1800
        %1814 = vst.msk [vmem:[%s292 + $0x24] sm:$0x1] %vm641, %v1783
        %1815 = vst.msk [vmem:[%s292 + $0x2c] sm:$0x1] %vm641, %v1797
        %1816 = vst.msk [vmem:[%s292 + $0x34] sm:$0x1] %vm641, %v1799
        %1817 = vst.msk [vmem:[%s292 + $0x3c] sm:$0x1] %vm641, %v1801
        %v1818 = vld [vmem:[%s338 + $0x5] sm:$0x1]
        %v1819 = vld [vmem:[%s338 + $0xd] sm:$0x1]
        %v1820 = vld [vmem:[%s338 + $0x15] sm:$0x1]
        %v1821 = vld [vmem:[%s338 + $0x1d] sm:$0x1]
        %v1822 = vld [vmem:[%s343 + $0x5] sm:$0x1]
        %v1823 = vld [vmem:[%s343 + $0xd] sm:$0x1]
        %v1824 = vld [vmem:[%s343 + $0x15] sm:$0x1]
        %v1825 = vld [vmem:[%s343 + $0x1d] sm:$0x1]
        %v1826 = vld [vmem:[%s348 + $0x6] sm:$0x1]
        %v1827 = vld [vmem:[%s348 + $0xe] sm:$0x1]
        %v1828 = vld [vmem:[%s348 + $0x16] sm:$0x1]
        %v1829 = vld [vmem:[%s348 + $0x1e] sm:$0x1]
        %v1830 = vld [vmem:[%s316 + $0x6] sm:$0x1]
        %v1831 = vld [vmem:[%s316 + $0xe] sm:$0x1]
        %v1832 = vld [vmem:[%s316 + $0x16] sm:$0x1]
        %v1833 = vld [vmem:[%s316 + $0x1e] sm:$0x1]
        %v1834 = vld [vmem:[%s316 + $0x5] sm:$0x1]
        %v1835 = vld [vmem:[%s316 + $0xd] sm:$0x1]
        %v1836 = vld [vmem:[%s316 + $0x15] sm:$0x1]
        %v1837 = vld [vmem:[%s316 + $0x1d] sm:$0x1]
        %v1838 = vld [vmem:[%s348 + $0x5] sm:$0x1]
        %v1839 = vld [vmem:[%s348 + $0xd] sm:$0x1]
        %v1840 = vld [vmem:[%s348 + $0x15] sm:$0x1]
        %v1841 = vld [vmem:[%s348 + $0x1d] sm:$0x1]
        %v1846 = vrot.slane %v1835, 7
        %v1847 = vsel %vm370, %v1846, %v1834
        %v1848 = vrot.slane %v1836, 6
        %v1849 = vsel %vm373, %v1848, %v1847
        %v1850 = vrot.slane %v1837, 5
        %v1851 = vsel %vm376, %v1850, %v1849
        %v1857 = vrot.slane %v1838, 4
        %v1858 = vrot.slane %v1839, 3
        %v1859 = vsel %vm385, %v1858, %v1857
        %v1860 = vrot.slane %v1840, 2
        %v1861 = vsel %vm388, %v1860, %v1859
        %v1862 = vrot.slane %v1841, 1
        %v1863 = vsel %vm391, %v1862, %v1861
        %1865 = vrot.lane.b32.xlu0 %v1851, 127
        %v1866 = vpop.permute.xlu0 %1865
        %v1872 = vrot.slane %v1822, 4
        %v1873 = vrot.slane %v1823, 3
        %v1874 = vsel %vm385, %v1873, %v1872
        %v1875 = vrot.slane %v1824, 2
        %v1876 = vsel %vm388, %v1875, %v1874
        %v1877 = vrot.slane %v1825, 1
        %v1878 = vsel %vm391, %v1877, %v1876
        %v1884 = vrot.slane %v1819, 7
        %v1885 = vsel %vm370, %v1884, %v1818
        %v1886 = vrot.slane %v1820, 6
        %v1887 = vsel %vm373, %v1886, %v1885
        %v1888 = vrot.slane %v1821, 5
        %v1889 = vsel %vm376, %v1888, %v1887
        %1891 = vrot.lane.b32.xlu0 %v1878, 127
        %v1892 = vpop.permute.xlu0 %1891
        %v1898 = vrot.slane %v1831, 7
        %v1899 = vsel %vm370, %v1898, %v1830
        %v1900 = vrot.slane %v1832, 6
        %v1901 = vsel %vm373, %v1900, %v1899
        %v1902 = vrot.slane %v1833, 5
        %v1903 = vsel %vm376, %v1902, %v1901
        %v1909 = vrot.slane %v1826, 4
        %v1910 = vrot.slane %v1827, 3
        %v1911 = vsel %vm385, %v1910, %v1909
        %v1912 = vrot.slane %v1828, 2
        %v1913 = vsel %vm388, %v1912, %v1911
        %v1914 = vrot.slane %v1829, 1
        %v1915 = vsel %vm391, %v1914, %v1913
        %1917 = vrot.lane.b32.xlu0 %v1903, 127
        %v1918 = vpop.permute.xlu0 %1917
        %v1919 = vsel %vm448, %v1851, %v1863
        %v1920 = vsel %vm448, %v1866, %v1878
        %v1921 = vsel %vm448, %v1889, %v1892
        %v1922 = vsel %vm448, %v1903, %v1915
        %v1923 = vsel %vm448, %v1918, 0
        %1925 = vmatprep.subr.mxu0 0.0
        %1926 = vmatpush1.msra.mxu0 %v1919
        %1927 = vmatprep.subr.mxu0 0.0
        %1928 = vmatpush1.msra.mxu0 %v1920
        %1929 = vmatprep.subr.mxu0 0.0
        %1930 = vmatpush1.msra.mxu0 %v1921
        %1931 = vmatprep.subr.mxu0 0.0
        %1932 = vmatpush1.msra.mxu0 %v1922
        %1933 = vmatprep.subr.mxu0 0.0
        %1934 = vmatpush1.msra.mxu0 %v1923
        %1935 = vmatprep.subr.mxu0 0.0
        %1936 = vmatpush1.msra.mxu0 0.0
        %1937 = vmatprep.subr.mxu0 0.0
        %1938 = vmatpush1.msra.mxu0 0.0
        %1939 = vmatprep.subr.mxu0 0.0
        %1940 = vmatpush1.msra.mxu0 0.0
        %1941 = vmatprep.subr.mxu0 0.0
        %1942 = vmatpush1.msra.mxu0 0.0
        %1943 = vmatprep.subr.mxu0 0.0
        %1944 = vmatpush1.msra.mxu0 0.0
        %1945 = vmatprep.subr.mxu0 0.0
        %1946 = vmatpush1.msra.mxu0 0.0
        %1947 = vmatprep.subr.mxu0 0.0
        %1948 = vmatpush1.msra.mxu0 0.0
        %1949 = vmatprep.subr.mxu0 0.0
        %1950 = vmatpush1.msra.mxu0 0.0
        %1951 = vmatprep.subr.mxu0 0.0
        %1952 = vmatpush1.msra.mxu0 0.0
        %1953 = vmatprep.subr.mxu0 0.0
        %1954 = vmatpush1.msra.mxu0 0.0
        %1955 = vmatprep.subr.mxu0 0.0
        %1956 = vmatpush1.msra.mxu0 0.0
        %1957 = vmatprep.subr.mxu0 0.0
        %1958 = vmatpush1.msra.mxu0 0.0
        %1959 = vmatprep.subr.mxu0 0.0
        %1960 = vmatpush1.msra.mxu0 0.0
        %1961 = vmatprep.subr.mxu0 0.0
        %1962 = vmatpush1.msra.mxu0 0.0
        %1963 = vmatprep.subr.mxu0 0.0
        %1964 = vmatpush1.msra.mxu0 0.0
        %1965 = vmatprep.subr.mxu0 0.0
        %1966 = vmatpush1.msra.mxu0 0.0
        %1967 = vmatprep.subr.mxu0 0.0
        %1968 = vmatpush1.msra.mxu0 0.0
        %1969 = vmatprep.subr.mxu0 0.0
        %1970 = vmatpush1.msra.mxu0 0.0
        %1971 = vmatprep.subr.mxu0 0.0
        %1972 = vmatpush1.msra.mxu0 0.0
        %1973 = vmatprep.subr.mxu0 0.0
        %1974 = vmatpush1.msra.mxu0 0.0
        %1975 = vmatprep.subr.mxu0 0.0
        %1976 = vmatpush1.msra.mxu0 0.0
        %1977 = vmatprep.subr.mxu0 0.0
        %1978 = vmatpush1.msra.mxu0 0.0
        %1979 = vmatprep.subr.mxu0 0.0
        %1980 = vmatpush1.msra.mxu0 0.0
        %1981 = vmatprep.subr.mxu0 0.0
        %1982 = vmatpush1.msra.mxu0 0.0
        %1983 = vmatprep.subr.mxu0 0.0
        %1984 = vmatpush1.msra.mxu0 0.0
        %1985 = vmatprep.subr.mxu0 0.0
        %1986 = vmatpush1.msra.mxu0 0.0
        %1987 = vmatprep.subr.mxu0 0.0
        %1988 = vmatpush1.msra.mxu0 0.0
        %1989 = vmatprep.mubr.f32.mxu0 0.0
        %1990 = vmatmul.mubr.f32.gmra.mrb[0].mxu0 %v460
        %v1991 = vpop.f32.mrb[0].mxu0
        %v1992 = vadd.f32 %v456, %v1991
        %v1993 = vpop.f32.mrb[0].mxu0
        %1994 = vdwg.mxu0
        %1995 = vrot.lane.b32.xlu0 %v1822, 127
        %v1996 = vpop.permute.xlu0 %1995
        %1997 = vrot.lane.b32.xlu0 %v1823, 127
        %v1998 = vpop.permute.xlu0 %1997
        %1999 = vrot.lane.b32.xlu0 %v1824, 127
        %v2000 = vpop.permute.xlu0 %1999
        %2001 = vrot.lane.b32.xlu0 %v1825, 127
        %v2002 = vpop.permute.xlu0 %2001
        %v2007 = vmax.f32 %v1818, %v1996
        %v2008 = vmax.f32 %v1819, %v1998
        %v2009 = vmax.f32 %v1820, %v2000
        %v2010 = vmax.f32 %v1821, %v2002
        %2011 = vrot.lane.b32.xlu0 %v1830, 127
        %v2012 = vpop.permute.xlu0 %2011
        %2013 = vrot.lane.b32.xlu0 %v1831, 127
        %v2014 = vpop.permute.xlu0 %2013
        %2015 = vrot.lane.b32.xlu0 %v1832, 127
        %v2016 = vpop.permute.xlu0 %2015
        %2017 = vrot.lane.b32.xlu0 %v1833, 127
        %v2018 = vpop.permute.xlu0 %2017
        %v2023 = vmax.f32 %v1826, %v2012
        %v2024 = vmax.f32 %v1827, %v2014
        %v2025 = vmax.f32 %v1828, %v2016
        %v2026 = vmax.f32 %v1829, %v2018
        %v2027 = vmax.f32 %v2007, %v2023
        %v2028 = vmax.f32 %v2008, %v2024
        %v2029 = vmax.f32 %v2009, %v2025
        %v2030 = vmax.f32 %v2010, %v2026
        %v2035 = vrot.slane %v2027, 4
        %v2036 = vrot.slane %v2028, 3
        %v2037 = vsel %vm385, %v2036, %v2035
        %v2038 = vrot.slane %v2029, 2
        %v2039 = vsel %vm388, %v2038, %v2037
        %v2040 = vrot.slane %v2030, 1
        %v2041 = vsel %vm391, %v2040, %v2039
        %v2043 = vsel %vm448, %v1992, %v2041
        %v2045 = vcombine.high %v2043, %v2043
        %v2047 = vunpack.c.l.s4 1966171168
        %v2048 = vunpack.c.0.s8 %v2047
        %v2049 = vlaneseq
        %v2050 = vshrl.u32 %v2049, 7
        %v2051 = vsub.s32 %v2048, %v2050
        %v2052 = vrot.slane %v2043, %v2051
        %v2054 = vunpack.c.l.s4 1966171168
        %v2055 = vunpack.c.0.s8 %v2054
        %v2056 = vlaneseq
        %v2057 = vshrl.u32 %v2056, 7
        %v2058 = vsub.s32 %v2055, %v2057
        %v2059 = vrot.slane %v2045, %v2058
        %v2060 = vcombine.high %v2052, %v2052
        %v2061 = vcombine.high %v2059, %v2059
        %v2063 = vunpack.c.l.s4 1966171168
        %v2064 = vunpack.c.0.s8 %v2063
        %v2065 = vlaneseq
        %v2066 = vshrl.u32 %v2065, 7
        %v2067 = vsub.s32 %v2064, %v2066
        %v2068 = vrot.slane %v2052, %v2067
        %v2070 = vunpack.c.l.s4 1966171168
        %v2071 = vunpack.c.0.s8 %v2070
        %v2072 = vlaneseq
        %v2073 = vshrl.u32 %v2072, 7
        %v2074 = vsub.s32 %v2071, %v2073
        %v2075 = vrot.slane %v2059, %v2074
        %v2077 = vunpack.c.l.s4 1966171168
        %v2078 = vunpack.c.0.s8 %v2077
        %v2079 = vlaneseq
        %v2080 = vshrl.u32 %v2079, 7
        %v2081 = vsub.s32 %v2078, %v2080
        %v2082 = vrot.slane %v2060, %v2081
        %v2084 = vunpack.c.l.s4 1966171168
        %v2085 = vunpack.c.0.s8 %v2084
        %v2086 = vlaneseq
        %v2087 = vshrl.u32 %v2086, 7
        %v2088 = vsub.s32 %v2085, %v2087
        %v2089 = vrot.slane %v2061, %v2088
        %v2090 = vcombine.high %v2068, %v2068
        %v2091 = vcombine.high %v2075, %v2075
        %v2092 = vcombine.high %v2082, %v2082
        %v2093 = vcombine.high %v2089, %v2089
        %2102 = vst.msk [vmem:[%s292 + $0x5] sm:$0x1] %vm641, %v2068
        %2103 = vst.msk [vmem:[%s292 + $0xd] sm:$0x1] %vm641, %v2082
        %2104 = vst.msk [vmem:[%s292 + $0x15] sm:$0x1] %vm641, %v2090
        %2105 = vst.msk [vmem:[%s292 + $0x1d] sm:$0x1] %vm641, %v2092
        %2106 = vst.msk [vmem:[%s292 + $0x25] sm:$0x1] %vm641, %v2075
        %2107 = vst.msk [vmem:[%s292 + $0x2d] sm:$0x1] %vm641, %v2089
        %2108 = vst.msk [vmem:[%s292 + $0x35] sm:$0x1] %vm641, %v2091
        %2109 = vst.msk [vmem:[%s292 + $0x3d] sm:$0x1] %vm641, %v2093
        %v2110 = vld [vmem:[%s338 + $0x6] sm:$0x1]
        %v2111 = vld [vmem:[%s338 + $0xe] sm:$0x1]
        %v2112 = vld [vmem:[%s338 + $0x16] sm:$0x1]
        %v2113 = vld [vmem:[%s338 + $0x1e] sm:$0x1]
        %v2114 = vld [vmem:[%s343 + $0x6] sm:$0x1]
        %v2115 = vld [vmem:[%s343 + $0xe] sm:$0x1]
        %v2116 = vld [vmem:[%s343 + $0x16] sm:$0x1]
        %v2117 = vld [vmem:[%s343 + $0x1e] sm:$0x1]
        %v2118 = vld [vmem:[%s348 + $0x7] sm:$0x1]
        %v2119 = vld [vmem:[%s348 + $0xf] sm:$0x1]
        %v2120 = vld [vmem:[%s348 + $0x17] sm:$0x1]
        %v2121 = vld [vmem:[%s348 + $0x1f] sm:$0x1]
        %v2122 = vld [vmem:[%s316 + $0x7] sm:$0x1]
        %v2123 = vld [vmem:[%s316 + $0xf] sm:$0x1]
        %v2124 = vld [vmem:[%s316 + $0x17] sm:$0x1]
        %v2125 = vld [vmem:[%s316 + $0x1f] sm:$0x1]
        %v2126 = vld [vmem:[%s316 + $0x6] sm:$0x1]
        %v2127 = vld [vmem:[%s316 + $0xe] sm:$0x1]
        %v2128 = vld [vmem:[%s316 + $0x16] sm:$0x1]
        %v2129 = vld [vmem:[%s316 + $0x1e] sm:$0x1]
        %v2130 = vld [vmem:[%s348 + $0x6] sm:$0x1]
        %v2131 = vld [vmem:[%s348 + $0xe] sm:$0x1]
        %v2132 = vld [vmem:[%s348 + $0x16] sm:$0x1]
        %v2133 = vld [vmem:[%s348 + $0x1e] sm:$0x1]
        %v2138 = vrot.slane %v2127, 7
        %v2139 = vsel %vm370, %v2138, %v2126
        %v2140 = vrot.slane %v2128, 6
        %v2141 = vsel %vm373, %v2140, %v2139
        %v2142 = vrot.slane %v2129, 5
        %v2143 = vsel %vm376, %v2142, %v2141
        %v2149 = vrot.slane %v2130, 4
        %v2150 = vrot.slane %v2131, 3
        %v2151 = vsel %vm385, %v2150, %v2149
        %v2152 = vrot.slane %v2132, 2
        %v2153 = vsel %vm388, %v2152, %v2151
        %v2154 = vrot.slane %v2133, 1
        %v2155 = vsel %vm391, %v2154, %v2153
        %2157 = vrot.lane.b32.xlu0 %v2143, 127
        %v2158 = vpop.permute.xlu0 %2157
        %v2164 = vrot.slane %v2114, 4
        %v2165 = vrot.slane %v2115, 3
        %v2166 = vsel %vm385, %v2165, %v2164
        %v2167 = vrot.slane %v2116, 2
        %v2168 = vsel %vm388, %v2167, %v2166
        %v2169 = vrot.slane %v2117, 1
        %v2170 = vsel %vm391, %v2169, %v2168
        %v2176 = vrot.slane %v2111, 7
        %v2177 = vsel %vm370, %v2176, %v2110
        %v2178 = vrot.slane %v2112, 6
        %v2179 = vsel %vm373, %v2178, %v2177
        %v2180 = vrot.slane %v2113, 5
        %v2181 = vsel %vm376, %v2180, %v2179
        %2183 = vrot.lane.b32.xlu0 %v2170, 127
        %v2184 = vpop.permute.xlu0 %2183
        %v2190 = vrot.slane %v2123, 7
        %v2191 = vsel %vm370, %v2190, %v2122
        %v2192 = vrot.slane %v2124, 6
        %v2193 = vsel %vm373, %v2192, %v2191
        %v2194 = vrot.slane %v2125, 5
        %v2195 = vsel %vm376, %v2194, %v2193
        %v2201 = vrot.slane %v2118, 4
        %v2202 = vrot.slane %v2119, 3
        %v2203 = vsel %vm385, %v2202, %v2201
        %v2204 = vrot.slane %v2120, 2
        %v2205 = vsel %vm388, %v2204, %v2203
        %v2206 = vrot.slane %v2121, 1
        %v2207 = vsel %vm391, %v2206, %v2205
        %2209 = vrot.lane.b32.xlu0 %v2195, 127
        %v2210 = vpop.permute.xlu0 %2209
        %v2211 = vsel %vm448, %v2143, %v2155
        %v2212 = vsel %vm448, %v2158, %v2170
        %v2213 = vsel %vm448, %v2181, %v2184
        %v2214 = vsel %vm448, %v2195, %v2207
        %v2215 = vsel %vm448, %v2210, 0
        %2217 = vmatprep.subr.mxu0 0.0
        %2218 = vmatpush1.msra.mxu0 %v2211
        %2219 = vmatprep.subr.mxu0 0.0
        %2220 = vmatpush1.msra.mxu0 %v2212
        %2221 = vmatprep.subr.mxu0 0.0
        %2222 = vmatpush1.msra.mxu0 %v2213
        %2223 = vmatprep.subr.mxu0 0.0
        %2224 = vmatpush1.msra.mxu0 %v2214
        %2225 = vmatprep.subr.mxu0 0.0
        %2226 = vmatpush1.msra.mxu0 %v2215
        %2227 = vmatprep.subr.mxu0 0.0
        %2228 = vmatpush1.msra.mxu0 0.0
        %2229 = vmatprep.subr.mxu0 0.0
        %2230 = vmatpush1.msra.mxu0 0.0
        %2231 = vmatprep.subr.mxu0 0.0
        %2232 = vmatpush1.msra.mxu0 0.0
        %2233 = vmatprep.subr.mxu0 0.0
        %2234 = vmatpush1.msra.mxu0 0.0
        %2235 = vmatprep.subr.mxu0 0.0
        %2236 = vmatpush1.msra.mxu0 0.0
        %2237 = vmatprep.subr.mxu0 0.0
        %2238 = vmatpush1.msra.mxu0 0.0
        %2239 = vmatprep.subr.mxu0 0.0
        %2240 = vmatpush1.msra.mxu0 0.0
        %2241 = vmatprep.subr.mxu0 0.0
        %2242 = vmatpush1.msra.mxu0 0.0
        %2243 = vmatprep.subr.mxu0 0.0
        %2244 = vmatpush1.msra.mxu0 0.0
        %2245 = vmatprep.subr.mxu0 0.0
        %2246 = vmatpush1.msra.mxu0 0.0
        %2247 = vmatprep.subr.mxu0 0.0
        %2248 = vmatpush1.msra.mxu0 0.0
        %2249 = vmatprep.subr.mxu0 0.0
        %2250 = vmatpush1.msra.mxu0 0.0
        %2251 = vmatprep.subr.mxu0 0.0
        %2252 = vmatpush1.msra.mxu0 0.0
        %2253 = vmatprep.subr.mxu0 0.0
        %2254 = vmatpush1.msra.mxu0 0.0
        %2255 = vmatprep.subr.mxu0 0.0
        %2256 = vmatpush1.msra.mxu0 0.0
        %2257 = vmatprep.subr.mxu0 0.0
        %2258 = vmatpush1.msra.mxu0 0.0
        %2259 = vmatprep.subr.mxu0 0.0
        %2260 = vmatpush1.msra.mxu0 0.0
        %2261 = vmatprep.subr.mxu0 0.0
        %2262 = vmatpush1.msra.mxu0 0.0
        %2263 = vmatprep.subr.mxu0 0.0
        %2264 = vmatpush1.msra.mxu0 0.0
        %2265 = vmatprep.subr.mxu0 0.0
        %2266 = vmatpush1.msra.mxu0 0.0
        %2267 = vmatprep.subr.mxu0 0.0
        %2268 = vmatpush1.msra.mxu0 0.0
        %2269 = vmatprep.subr.mxu0 0.0
        %2270 = vmatpush1.msra.mxu0 0.0
        %2271 = vmatprep.subr.mxu0 0.0
        %2272 = vmatpush1.msra.mxu0 0.0
        %2273 = vmatprep.subr.mxu0 0.0
        %2274 = vmatpush1.msra.mxu0 0.0
        %2275 = vmatprep.subr.mxu0 0.0
        %2276 = vmatpush1.msra.mxu0 0.0
        %2277 = vmatprep.subr.mxu0 0.0
        %2278 = vmatpush1.msra.mxu0 0.0
        %2279 = vmatprep.subr.mxu0 0.0
        %2280 = vmatpush1.msra.mxu0 0.0
        %2281 = vmatprep.mubr.f32.mxu0 0.0
        %2282 = vmatmul.mubr.f32.gmra.mrb[0].mxu0 %v460
        %v2283 = vpop.f32.mrb[0].mxu0
        %v2284 = vadd.f32 %v456, %v2283
        %v2285 = vpop.f32.mrb[0].mxu0
        %2286 = vdwg.mxu0
        %2287 = vrot.lane.b32.xlu0 %v2114, 127
        %v2288 = vpop.permute.xlu0 %2287
        %2289 = vrot.lane.b32.xlu0 %v2115, 127
        %v2290 = vpop.permute.xlu0 %2289
        %2291 = vrot.lane.b32.xlu0 %v2116, 127
        %v2292 = vpop.permute.xlu0 %2291
        %2293 = vrot.lane.b32.xlu0 %v2117, 127
        %v2294 = vpop.permute.xlu0 %2293
        %v2299 = vmax.f32 %v2110, %v2288
        %v2300 = vmax.f32 %v2111, %v2290
        %v2301 = vmax.f32 %v2112, %v2292
        %v2302 = vmax.f32 %v2113, %v2294
        %2303 = vrot.lane.b32.xlu0 %v2122, 127
        %v2304 = vpop.permute.xlu0 %2303
        %2305 = vrot.lane.b32.xlu0 %v2123, 127
        %v2306 = vpop.permute.xlu0 %2305
        %2307 = vrot.lane.b32.xlu0 %v2124, 127
        %v2308 = vpop.permute.xlu0 %2307
        %2309 = vrot.lane.b32.xlu0 %v2125, 127
        %v2310 = vpop.permute.xlu0 %2309
        %v2315 = vmax.f32 %v2118, %v2304
        %v2316 = vmax.f32 %v2119, %v2306
        %v2317 = vmax.f32 %v2120, %v2308
        %v2318 = vmax.f32 %v2121, %v2310
        %v2319 = vmax.f32 %v2299, %v2315
        %v2320 = vmax.f32 %v2300, %v2316
        %v2321 = vmax.f32 %v2301, %v2317
        %v2322 = vmax.f32 %v2302, %v2318
        %v2327 = vrot.slane %v2319, 4
        %v2328 = vrot.slane %v2320, 3
        %v2329 = vsel %vm385, %v2328, %v2327
        %v2330 = vrot.slane %v2321, 2
        %v2331 = vsel %vm388, %v2330, %v2329
        %v2332 = vrot.slane %v2322, 1
        %v2333 = vsel %vm391, %v2332, %v2331
        %v2335 = vsel %vm448, %v2284, %v2333
        %v2337 = vcombine.high %v2335, %v2335
        %v2339 = vunpack.c.l.s4 1966171168
        %v2340 = vunpack.c.0.s8 %v2339
        %v2341 = vlaneseq
        %v2342 = vshrl.u32 %v2341, 7
        %v2343 = vsub.s32 %v2340, %v2342
        %v2344 = vrot.slane %v2335, %v2343
        %v2346 = vunpack.c.l.s4 1966171168
        %v2347 = vunpack.c.0.s8 %v2346
        %v2348 = vlaneseq
        %v2349 = vshrl.u32 %v2348, 7
        %v2350 = vsub.s32 %v2347, %v2349
        %v2351 = vrot.slane %v2337, %v2350
        %v2352 = vcombine.high %v2344, %v2344
        %v2353 = vcombine.high %v2351, %v2351
        %v2355 = vunpack.c.l.s4 1966171168
        %v2356 = vunpack.c.0.s8 %v2355
        %v2357 = vlaneseq
        %v2358 = vshrl.u32 %v2357, 7
        %v2359 = vsub.s32 %v2356, %v2358
        %v2360 = vrot.slane %v2344, %v2359
        %v2362 = vunpack.c.l.s4 1966171168
        %v2363 = vunpack.c.0.s8 %v2362
        %v2364 = vlaneseq
        %v2365 = vshrl.u32 %v2364, 7
        %v2366 = vsub.s32 %v2363, %v2365
        %v2367 = vrot.slane %v2351, %v2366
        %v2369 = vunpack.c.l.s4 1966171168
        %v2370 = vunpack.c.0.s8 %v2369
        %v2371 = vlaneseq
        %v2372 = vshrl.u32 %v2371, 7
        %v2373 = vsub.s32 %v2370, %v2372
        %v2374 = vrot.slane %v2352, %v2373
        %v2376 = vunpack.c.l.s4 1966171168
        %v2377 = vunpack.c.0.s8 %v2376
        %v2378 = vlaneseq
        %v2379 = vshrl.u32 %v2378, 7
        %v2380 = vsub.s32 %v2377, %v2379
        %v2381 = vrot.slane %v2353, %v2380
        %v2382 = vcombine.high %v2360, %v2360
        %v2383 = vcombine.high %v2367, %v2367
        %v2384 = vcombine.high %v2374, %v2374
        %v2385 = vcombine.high %v2381, %v2381
        %2394 = vst.msk [vmem:[%s292 + $0x6] sm:$0x1] %vm641, %v2360
        %2395 = vst.msk [vmem:[%s292 + $0xe] sm:$0x1] %vm641, %v2374
        %2396 = vst.msk [vmem:[%s292 + $0x16] sm:$0x1] %vm641, %v2382
        %2397 = vst.msk [vmem:[%s292 + $0x1e] sm:$0x1] %vm641, %v2384
        %2398 = vst.msk [vmem:[%s292 + $0x26] sm:$0x1] %vm641, %v2367
        %2399 = vst.msk [vmem:[%s292 + $0x2e] sm:$0x1] %vm641, %v2381
        %2400 = vst.msk [vmem:[%s292 + $0x36] sm:$0x1] %vm641, %v2383
        %2401 = vst.msk [vmem:[%s292 + $0x3e] sm:$0x1] %vm641, %v2385
        %v2402 = vld [vmem:[%s338 + $0x7] sm:$0x1]
        %v2403 = vld [vmem:[%s338 + $0xf] sm:$0x1]
        %v2404 = vld [vmem:[%s338 + $0x17] sm:$0x1]
        %v2405 = vld [vmem:[%s338 + $0x1f] sm:$0x1]
        %v2406 = vld [vmem:[%s343 + $0x7] sm:$0x1]
        %v2407 = vld [vmem:[%s343 + $0xf] sm:$0x1]
        %v2408 = vld [vmem:[%s343 + $0x17] sm:$0x1]
        %v2409 = vld [vmem:[%s343 + $0x1f] sm:$0x1]
        %v2410 = vld [vmem:[%s323 + $0x4] sm:$0xf]
        %v2411 = vld [vmem:[%s323] sm:$0xf]
        %v2412 = vld [vmem:[%s316 + $0x7] sm:$0x1]
        %v2413 = vld [vmem:[%s316 + $0xf] sm:$0x1]
        %v2414 = vld [vmem:[%s316 + $0x17] sm:$0x1]
        %v2415 = vld [vmem:[%s316 + $0x1f] sm:$0x1]
        %v2416 = vld [vmem:[%s348 + $0x7] sm:$0x1]
        %v2417 = vld [vmem:[%s348 + $0xf] sm:$0x1]
        %v2418 = vld [vmem:[%s348 + $0x17] sm:$0x1]
        %v2419 = vld [vmem:[%s348 + $0x1f] sm:$0x1]
        %v2424 = vrot.slane %v2413, 7
        %v2425 = vsel %vm370, %v2424, %v2412
        %v2426 = vrot.slane %v2414, 6
        %v2427 = vsel %vm373, %v2426, %v2425
        %v2428 = vrot.slane %v2415, 5
        %v2429 = vsel %vm376, %v2428, %v2427
        %v2435 = vrot.slane %v2416, 4
        %v2436 = vrot.slane %v2417, 3
        %v2437 = vsel %vm385, %v2436, %v2435
        %v2438 = vrot.slane %v2418, 2
        %v2439 = vsel %vm388, %v2438, %v2437
        %v2440 = vrot.slane %v2419, 1
        %v2441 = vsel %vm391, %v2440, %v2439
        %2443 = vrot.lane.b32.xlu0 %v2429, 127
        %v2444 = vpop.permute.xlu0 %2443
        %v2450 = vrot.slane %v2406, 4
        %v2451 = vrot.slane %v2407, 3
        %v2452 = vsel %vm385, %v2451, %v2450
        %v2453 = vrot.slane %v2408, 2
        %v2454 = vsel %vm388, %v2453, %v2452
        %v2455 = vrot.slane %v2409, 1
        %v2456 = vsel %vm391, %v2455, %v2454
        %v2462 = vrot.slane %v2403, 7
        %v2463 = vsel %vm370, %v2462, %v2402
        %v2464 = vrot.slane %v2404, 6
        %v2465 = vsel %vm373, %v2464, %v2463
        %v2466 = vrot.slane %v2405, 5
        %v2467 = vsel %vm376, %v2466, %v2465
        %2469 = vrot.lane.b32.xlu0 %v2456, 127
        %v2470 = vpop.permute.xlu0 %2469
        %v2473 = vrot.slane %v2410, 4
        %2476 = vrot.lane.b32.xlu0 %v2411, 127
        %v2477 = vpop.permute.xlu0 %2476
        %v2478 = vsel %vm448, %v2429, %v2441
        %v2479 = vsel %vm448, %v2444, %v2456
        %v2480 = vsel %vm448, %v2467, %v2470
        %v2481 = vsel %vm448, %v2411, %v2473
        %v2482 = vsel %vm448, %v2477, 0
        %2484 = vmatprep.subr.mxu0 0.0
        %2485 = vmatpush1.msra.mxu0 %v2478
        %2486 = vmatprep.subr.mxu0 0.0
        %2487 = vmatpush1.msra.mxu0 %v2479
        %2488 = vmatprep.subr.mxu0 0.0
        %2489 = vmatpush1.msra.mxu0 %v2480
        %2490 = vmatprep.subr.mxu0 0.0
        %2491 = vmatpush1.msra.mxu0 %v2481
        %2492 = vmatprep.subr.mxu0 0.0
        %2493 = vmatpush1.msra.mxu0 %v2482
        %2494 = vmatprep.subr.mxu0 0.0
        %2495 = vmatpush1.msra.mxu0 0.0
        %2496 = vmatprep.subr.mxu0 0.0
        %2497 = vmatpush1.msra.mxu0 0.0
        %2498 = vmatprep.subr.mxu0 0.0
        %2499 = vmatpush1.msra.mxu0 0.0
        %2500 = vmatprep.subr.mxu0 0.0
        %2501 = vmatpush1.msra.mxu0 0.0
        %2502 = vmatprep.subr.mxu0 0.0
        %2503 = vmatpush1.msra.mxu0 0.0
        %2504 = vmatprep.subr.mxu0 0.0
        %2505 = vmatpush1.msra.mxu0 0.0
        %2506 = vmatprep.subr.mxu0 0.0
        %2507 = vmatpush1.msra.mxu0 0.0
        %2508 = vmatprep.subr.mxu0 0.0
        %2509 = vmatpush1.msra.mxu0 0.0
        %2510 = vmatprep.subr.mxu0 0.0
        %2511 = vmatpush1.msra.mxu0 0.0
        %2512 = vmatprep.subr.mxu0 0.0
        %2513 = vmatpush1.msra.mxu0 0.0
        %2514 = vmatprep.subr.mxu0 0.0
        %2515 = vmatpush1.msra.mxu0 0.0
        %2516 = vmatprep.subr.mxu0 0.0
        %2517 = vmatpush1.msra.mxu0 0.0
        %2518 = vmatprep.subr.mxu0 0.0
        %2519 = vmatpush1.msra.mxu0 0.0
        %2520 = vmatprep.subr.mxu0 0.0
        %2521 = vmatpush1.msra.mxu0 0.0
        %2522 = vmatprep.subr.mxu0 0.0
        %2523 = vmatpush1.msra.mxu0 0.0
        %2524 = vmatprep.subr.mxu0 0.0
        %2525 = vmatpush1.msra.mxu0 0.0
        %2526 = vmatprep.subr.mxu0 0.0
        %2527 = vmatpush1.msra.mxu0 0.0
        %2528 = vmatprep.subr.mxu0 0.0
        %2529 = vmatpush1.msra.mxu0 0.0
        %2530 = vmatprep.subr.mxu0 0.0
        %2531 = vmatpush1.msra.mxu0 0.0
        %2532 = vmatprep.subr.mxu0 0.0
        %2533 = vmatpush1.msra.mxu0 0.0
        %2534 = vmatprep.subr.mxu0 0.0
        %2535 = vmatpush1.msra.mxu0 0.0
        %2536 = vmatprep.subr.mxu0 0.0
        %2537 = vmatpush1.msra.mxu0 0.0
        %2538 = vmatprep.subr.mxu0 0.0
        %2539 = vmatpush1.msra.mxu0 0.0
        %2540 = vmatprep.subr.mxu0 0.0
        %2541 = vmatpush1.msra.mxu0 0.0
        %2542 = vmatprep.subr.mxu0 0.0
        %2543 = vmatpush1.msra.mxu0 0.0
        %2544 = vmatprep.subr.mxu0 0.0
        %2545 = vmatpush1.msra.mxu0 0.0
        %2546 = vmatprep.subr.mxu0 0.0
        %2547 = vmatpush1.msra.mxu0 0.0
        %2548 = vmatprep.mubr.f32.mxu0 0.0
        %2549 = vmatmul.mubr.f32.gmra.mrb[0].mxu0 %v460
        %v2550 = vpop.f32.mrb[0].mxu0
        %v2551 = vadd.f32 %v456, %v2550
        %v2552 = vpop.f32.mrb[0].mxu0
        %2553 = vdwg.mxu0
        %2554 = vrot.lane.b32.xlu0 %v2406, 127
        %v2555 = vpop.permute.xlu0 %2554
        %2556 = vrot.lane.b32.xlu0 %v2407, 127
        %v2557 = vpop.permute.xlu0 %2556
        %2558 = vrot.lane.b32.xlu0 %v2408, 127
        %v2559 = vpop.permute.xlu0 %2558
        %2560 = vrot.lane.b32.xlu0 %v2409, 127
        %v2561 = vpop.permute.xlu0 %2560
        %v2566 = vmax.f32 %v2402, %v2555
        %v2567 = vmax.f32 %v2403, %v2557
        %v2568 = vmax.f32 %v2404, %v2559
        %v2569 = vmax.f32 %v2405, %v2561
        %v2571 = vmax.f32 %v2410, %v2477
        %v2573 = vrot.slane %v2571, 1
        %v2574 = vrot.slane %v2571, 2
        %v2575 = vrot.slane %v2571, 3
        %v2580 = vmax.f32 %v2566, %v2571
        %v2581 = vmax.f32 %v2567, %v2573
        %v2582 = vmax.f32 %v2568, %v2574
        %v2583 = vmax.f32 %v2569, %v2575
        %v2588 = vrot.slane %v2580, 4
        %v2589 = vrot.slane %v2581, 3
        %v2590 = vsel %vm385, %v2589, %v2588
        %v2591 = vrot.slane %v2582, 2
        %v2592 = vsel %vm388, %v2591, %v2590
        %v2593 = vrot.slane %v2583, 1
        %v2594 = vsel %vm391, %v2593, %v2592
        %v2596 = vsel %vm448, %v2551, %v2594
        %v2598 = vcombine.high %v2596, %v2596
        %v2600 = vunpack.c.l.s4 1966171168
        %v2601 = vunpack.c.0.s8 %v2600
        %v2602 = vlaneseq
        %v2603 = vshrl.u32 %v2602, 7
        %v2604 = vsub.s32 %v2601, %v2603
        %v2605 = vrot.slane %v2596, %v2604
        %v2607 = vunpack.c.l.s4 1966171168
        %v2608 = vunpack.c.0.s8 %v2607
        %v2609 = vlaneseq
        %v2610 = vshrl.u32 %v2609, 7
        %v2611 = vsub.s32 %v2608, %v2610
        %v2612 = vrot.slane %v2598, %v2611
        %v2613 = vcombine.high %v2605, %v2605
        %v2614 = vcombine.high %v2612, %v2612
        %v2616 = vunpack.c.l.s4 1966171168
        %v2617 = vunpack.c.0.s8 %v2616
        %v2618 = vlaneseq
        %v2619 = vshrl.u32 %v2618, 7
        %v2620 = vsub.s32 %v2617, %v2619
        %v2621 = vrot.slane %v2605, %v2620
        %v2623 = vunpack.c.l.s4 1966171168
        %v2624 = vunpack.c.0.s8 %v2623
        %v2625 = vlaneseq
        %v2626 = vshrl.u32 %v2625, 7
        %v2627 = vsub.s32 %v2624, %v2626
        %v2628 = vrot.slane %v2612, %v2627
        %v2630 = vunpack.c.l.s4 1966171168
        %v2631 = vunpack.c.0.s8 %v2630
        %v2632 = vlaneseq
        %v2633 = vshrl.u32 %v2632, 7
        %v2634 = vsub.s32 %v2631, %v2633
        %v2635 = vrot.slane %v2613, %v2634
        %v2637 = vunpack.c.l.s4 1966171168
        %v2638 = vunpack.c.0.s8 %v2637
        %v2639 = vlaneseq
        %v2640 = vshrl.u32 %v2639, 7
        %v2641 = vsub.s32 %v2638, %v2640
        %v2642 = vrot.slane %v2614, %v2641
        %v2643 = vcombine.high %v2621, %v2621
        %v2644 = vcombine.high %v2628, %v2628
        %v2645 = vcombine.high %v2635, %v2635
        %v2646 = vcombine.high %v2642, %v2642
        %2655 = vst.msk [vmem:[%s292 + $0x7] sm:$0x1] %vm641, %v2621
        %2656 = vst.msk [vmem:[%s292 + $0xf] sm:$0x1] %vm641, %v2635
        %2657 = vst.msk [vmem:[%s292 + $0x17] sm:$0x1] %vm641, %v2643
        %2658 = vst.msk [vmem:[%s292 + $0x1f] sm:$0x1] %vm641, %v2645
        %2659 = vst.msk [vmem:[%s292 + $0x27] sm:$0x1] %vm641, %v2628
        %2660 = vst.msk [vmem:[%s292 + $0x2f] sm:$0x1] %vm641, %v2642
        %2661 = vst.msk [vmem:[%s292 + $0x37] sm:$0x1] %vm641, %v2644
        %2662 = vst.msk [vmem:[%s292 + $0x3f] sm:$0x1] %vm641, %v2646
        %v2663 = vld [vmem:[%s292] sm:$0xff]
        %v2664 = vld [vmem:[%s292 + $0x8] sm:$0xff]
        %v2665 = vld [vmem:[%s292 + $0x10] sm:$0xff]
        %v2666 = vld [vmem:[%s292 + $0x18] sm:$0xff]
        %v2667 = vld [vmem:[%s292 + $0x20] sm:$0xff]
        %v2668 = vld [vmem:[%s292 + $0x28] sm:$0xff]
        %v2669 = vld [vmem:[%s292 + $0x30] sm:$0xff]
        %v2670 = vld [vmem:[%s292 + $0x38] sm:$0xff]
        %s2671 = smul.u32 %s26, 8
        %s2672 = ssub.s32 8, %s2671
        %p2673 = scmp.lt.s32.totalorder %s2672, 8
        %s2674 = scalar_select %p2673, %s2672, 8
        %p2675 = scmp.eq.s32.totalorder %s2674, 8
        // Predicated region
        $region37: #{downsampler_block.2} parent=35 // pred_check
          %p2676 = pneg %p2675
        $region38: #{downsampler_block.2} parent=35 // pred_check_branch
          %2678 = sbr.rel (%p2676) target = $region40
        $region39: #{downsampler_block.2} parent=35 // pred_region
          %vm2679 = vcmask 64512
          %v2680 = vsel %vm2679, %v2663, 0.0
          %2681 = vadd.xlane.f32.xlu0 %v2680
          %v2682 = vpop.xlane.xlu0 %2681
          %v2683 = vsel %vm2679, %v2664, 0.0
          %2684 = vadd.xlane.f32.xlu0 %v2683
          %v2685 = vpop.xlane.xlu0 %2684
          %v2686 = vsel %vm2679, %v2665, 0.0
          %2687 = vadd.xlane.f32.xlu0 %v2686
          %v2688 = vpop.xlane.xlu0 %2687
          %v2689 = vsel %vm2679, %v2666, 0.0
          %2690 = vadd.xlane.f32.xlu0 %v2689
          %v2691 = vpop.xlane.xlu0 %2690
          %v2692 = vsel %vm2679, %v2667, 0.0
          %2693 = vadd.xlane.f32.xlu0 %v2692
          %v2694 = vpop.xlane.xlu0 %2693
          %v2695 = vsel %vm2679, %v2668, 0.0
          %2696 = vadd.xlane.f32.xlu0 %v2695
          %v2697 = vpop.xlane.xlu0 %2696
          %v2698 = vsel %vm2679, %v2669, 0.0
          %2699 = vadd.xlane.f32.xlu0 %v2698
          %v2700 = vpop.xlane.xlu0 %2699
          %v2701 = vsel %vm2679, %v2670, 0.0
          %2702 = vadd.xlane.f32.xlu0 %v2701
          %v2703 = vpop.xlane.xlu0 %2702
          %v2712 = vlaneseq
          %v2713 = vand.u32 %v2712, 127
          %v2714 = vlaneseq
          %v2715 = vshrl.u32 %v2714, 7
          %v2716 = vsub.s32 %v2713, %v2715
          %v2717 = vrot.slane %v2682, %v2716
          %v2718 = vlaneseq
          %v2719 = vshrl.u32 %v2718, 7
          %v2720 = vsub.s32 %v2713, %v2719
          %v2721 = vrot.slane %v2685, %v2720
          %v2722 = vlaneseq
          %v2723 = vshrl.u32 %v2722, 7
          %v2724 = vsub.s32 %v2713, %v2723
          %v2725 = vrot.slane %v2688, %v2724
          %v2726 = vlaneseq
          %v2727 = vshrl.u32 %v2726, 7
          %v2728 = vsub.s32 %v2713, %v2727
          %v2729 = vrot.slane %v2691, %v2728
          %v2730 = vlaneseq
          %v2731 = vshrl.u32 %v2730, 7
          %v2732 = vsub.s32 %v2713, %v2731
          %v2733 = vrot.slane %v2694, %v2732
          %v2734 = vlaneseq
          %v2735 = vshrl.u32 %v2734, 7
          %v2736 = vsub.s32 %v2713, %v2735
          %v2737 = vrot.slane %v2697, %v2736
          %v2738 = vlaneseq
          %v2739 = vshrl.u32 %v2738, 7
          %v2740 = vsub.s32 %v2713, %v2739
          %v2741 = vrot.slane %v2700, %v2740
          %v2742 = vlaneseq
          %v2743 = vshrl.u32 %v2742, 7
          %v2744 = vsub.s32 %v2713, %v2743
          %v2745 = vrot.slane %v2703, %v2744
          %v2746 = vsel %vm370, %v2721, %v2717
          %v2747 = vsel %vm373, %v2725, %v2746
          %v2748 = vsel %vm376, %v2729, %v2747
          %vm2749 = vcmask 1044484
          %v2750 = vsel %vm2749, %v2733, %v2748
          %v2751 = vsel %vm385, %v2737, %v2750
          %v2752 = vsel %vm388, %v2741, %v2751
          %v2753 = vsel %vm391, %v2745, %v2752
          %v2755 = vsel %vm2679, %v2753, 0.0
          %2756 = vadd.xlane.f32.xlu0 %v2755
          %v2757 = vpop.xlane.xlu0 %2756
          %v2758 = vmul.f32 %v2757, 0.015625
          %v2760 = vlaneseq
          %v2761 = vshrl.u32 %v2760, 7
          %v2762 = vsub.s32 0, %v2761
          %v2763 = vrot.slane %v2758, %v2762
          %v2764 = vlaneseq
          %v2765 = vshrl.u32 %v2764, 7
          %v2766 = vsub.s32 1, %v2765
          %v2767 = vrot.slane %v2758, %v2766
          %v2768 = vlaneseq
          %v2769 = vshrl.u32 %v2768, 7
          %v2770 = vsub.s32 2, %v2769
          %v2771 = vrot.slane %v2758, %v2770
          %v2772 = vlaneseq
          %v2773 = vshrl.u32 %v2772, 7
          %v2774 = vsub.s32 3, %v2773
          %v2775 = vrot.slane %v2758, %v2774
          %v2776 = vlaneseq
          %v2777 = vshrl.u32 %v2776, 7
          %v2778 = vsub.s32 4, %v2777
          %v2779 = vrot.slane %v2758, %v2778
          %v2780 = vlaneseq
          %v2781 = vshrl.u32 %v2780, 7
          %v2782 = vsub.s32 5, %v2781
          %v2783 = vrot.slane %v2758, %v2782
          %v2784 = vlaneseq
          %v2785 = vshrl.u32 %v2784, 7
          %v2786 = vsub.s32 6, %v2785
          %v2787 = vrot.slane %v2758, %v2786
          %v2788 = vlaneseq
          %v2789 = vshrl.u32 %v2788, 7
          %v2790 = vsub.s32 7, %v2789
          %v2791 = vrot.slane %v2758, %v2790
          %v2800 = vsub.f32 %v2663, %v2763
          %v2801 = vsub.f32 %v2664, %v2767
          %v2802 = vsub.f32 %v2665, %v2771
          %v2803 = vsub.f32 %v2666, %v2775
          %v2804 = vsub.f32 %v2667, %v2779
          %v2805 = vsub.f32 %v2668, %v2783
          %v2806 = vsub.f32 %v2669, %v2787
          %v2807 = vsub.f32 %v2670, %v2791
          %v2808 = vmul.f32 %v2800, %v2800
          %v2809 = vmul.f32 %v2801, %v2801
          %v2810 = vmul.f32 %v2802, %v2802
          %v2811 = vmul.f32 %v2803, %v2803
          %v2812 = vmul.f32 %v2804, %v2804
          %v2813 = vmul.f32 %v2805, %v2805
          %v2814 = vmul.f32 %v2806, %v2806
          %v2815 = vmul.f32 %v2807, %v2807
          %v2816 = vsel %vm2679, %v2808, 0.0
          %2817 = vadd.xlane.f32.xlu0 %v2816
          %v2818 = vpop.xlane.xlu0 %2817
          %v2819 = vsel %vm2679, %v2809, 0.0
          %2820 = vadd.xlane.f32.xlu0 %v2819
          %v2821 = vpop.xlane.xlu0 %2820
          %v2822 = vsel %vm2679, %v2810, 0.0
          %2823 = vadd.xlane.f32.xlu0 %v2822
          %v2824 = vpop.xlane.xlu0 %2823
          %v2825 = vsel %vm2679, %v2811, 0.0
          %2826 = vadd.xlane.f32.xlu0 %v2825
          %v2827 = vpop.xlane.xlu0 %2826
          %v2828 = vsel %vm2679, %v2812, 0.0
          %2829 = vadd.xlane.f32.xlu0 %v2828
          %v2830 = vpop.xlane.xlu0 %2829
          %v2831 = vsel %vm2679, %v2813, 0.0
          %2832 = vadd.xlane.f32.xlu0 %v2831
          %v2833 = vpop.xlane.xlu0 %2832
          %v2834 = vsel %vm2679, %v2814, 0.0
          %2835 = vadd.xlane.f32.xlu0 %v2834
          %v2836 = vpop.xlane.xlu0 %2835
          %v2837 = vsel %vm2679, %v2815, 0.0
          %2838 = vadd.xlane.f32.xlu0 %v2837
          %v2839 = vpop.xlane.xlu0 %2838
          %v2848 = vlaneseq
          %v2849 = vshrl.u32 %v2848, 7
          %v2850 = vsub.s32 %v2713, %v2849
          %v2851 = vrot.slane %v2818, %v2850
          %v2852 = vlaneseq
          %v2853 = vshrl.u32 %v2852, 7
          %v2854 = vsub.s32 %v2713, %v2853
          %v2855 = vrot.slane %v2821, %v2854
          %v2856 = vlaneseq
          %v2857 = vshrl.u32 %v2856, 7
          %v2858 = vsub.s32 %v2713, %v2857
          %v2859 = vrot.slane %v2824, %v2858
          %v2860 = vlaneseq
          %v2861 = vshrl.u32 %v2860, 7
          %v2862 = vsub.s32 %v2713, %v2861
          %v2863 = vrot.slane %v2827, %v2862
          %v2864 = vlaneseq
          %v2865 = vshrl.u32 %v2864, 7
          %v2866 = vsub.s32 %v2713, %v2865
          %v2867 = vrot.slane %v2830, %v2866
          %v2868 = vlaneseq
          %v2869 = vshrl.u32 %v2868, 7
          %v2870 = vsub.s32 %v2713, %v2869
          %v2871 = vrot.slane %v2833, %v2870
          %v2872 = vlaneseq
          %v2873 = vshrl.u32 %v2872, 7
          %v2874 = vsub.s32 %v2713, %v2873
          %v2875 = vrot.slane %v2836, %v2874
          %v2876 = vlaneseq
          %v2877 = vshrl.u32 %v2876, 7
          %v2878 = vsub.s32 %v2713, %v2877
          %v2879 = vrot.slane %v2839, %v2878
          %v2880 = vsel %vm370, %v2855, %v2851
          %v2881 = vsel %vm373, %v2859, %v2880
          %v2882 = vsel %vm376, %v2863, %v2881
          %v2883 = vsel %vm2749, %v2867, %v2882
          %v2884 = vsel %vm385, %v2871, %v2883
          %v2885 = vsel %vm388, %v2875, %v2884
          %v2886 = vsel %vm391, %v2879, %v2885
          %v2888 = vsel %vm2679, %v2886, 0.0
          %2889 = vadd.xlane.f32.xlu0 %v2888
          %v2890 = vpop.xlane.xlu0 %2889
          %v2892 = vlaneseq
          %v2893 = vshrl.u32 %v2892, 7
          %v2894 = vsub.s32 %v2713, %v2893
          %v2895 = vrot.slane %v2757, %v2894
          %2897 = vst.msk [vmem:[%s329] sm:$0x1] %vm641, %v2895
          %v2899 = vlaneseq
          %v2900 = vshrl.u32 %v2899, 7
          %v2901 = vsub.s32 %v2713, %v2900
          %v2902 = vrot.slane %v2890, %v2901
          %2904 = vst.msk [vmem:[%s335] sm:$0x1] %vm641, %v2902
        $region40: #{downsampler_block.2} parent=35 // pred_fallthru
          _
        %p2905 = scmp.lt.s32.totalorder %s2674, 8
        // Predicated region
        $region41: #{downsampler_block.2} parent=35 // pred_check
          %p2906 = pneg %p2905
        $region42: #{downsampler_block.2} parent=35 // pred_check_branch
          %2908 = sbr.rel (%p2906) target = $region44
        $region43: #{downsampler_block.2} parent=35 // pred_region
          %v2909 = vlaneseq
          %v2910 = vshrl.u32 %v2909, 7
          %v2911 = vstv %s2674
          %vm2912 = vcmp.lt.s32.totalorder %v2910, %v2911
          %s2913 = smul.u32 %s2674, 8
          %s2914 = scvt.s32.f32 %s2913
          %v2915 = vsel %vm2912, 1, 0
          %vm2916 = vcmp.eq.s32.totalorder %v2915, 1
          %v2917 = vsel %vm2916, %v2663, 0.0
          %v2918 = vsel %vm2916, %v2664, 0.0
          %v2919 = vsel %vm2916, %v2665, 0.0
          %v2920 = vsel %vm2916, %v2666, 0.0
          %v2921 = vsel %vm2916, %v2667, 0.0
          %v2922 = vsel %vm2916, %v2668, 0.0
          %v2923 = vsel %vm2916, %v2669, 0.0
          %v2924 = vsel %vm2916, %v2670, 0.0
          %vm2925 = vcmask 64512
          %v2926 = vsel %vm2925, %v2917, 0.0
          %2927 = vadd.xlane.f32.xlu0 %v2926
          %v2928 = vpop.xlane.xlu0 %2927
          %v2929 = vsel %vm2925, %v2918, 0.0
          %2930 = vadd.xlane.f32.xlu0 %v2929
          %v2931 = vpop.xlane.xlu0 %2930
          %v2932 = vsel %vm2925, %v2919, 0.0
          %2933 = vadd.xlane.f32.xlu0 %v2932
          %v2934 = vpop.xlane.xlu0 %2933
          %v2935 = vsel %vm2925, %v2920, 0.0
          %2936 = vadd.xlane.f32.xlu0 %v2935
          %v2937 = vpop.xlane.xlu0 %2936
          %v2938 = vsel %vm2925, %v2921, 0.0
          %2939 = vadd.xlane.f32.xlu0 %v2938
          %v2940 = vpop.xlane.xlu0 %2939
          %v2941 = vsel %vm2925, %v2922, 0.0
          %2942 = vadd.xlane.f32.xlu0 %v2941
          %v2943 = vpop.xlane.xlu0 %2942
          %v2944 = vsel %vm2925, %v2923, 0.0
          %2945 = vadd.xlane.f32.xlu0 %v2944
          %v2946 = vpop.xlane.xlu0 %2945
          %v2947 = vsel %vm2925, %v2924, 0.0
          %2948 = vadd.xlane.f32.xlu0 %v2947
          %v2949 = vpop.xlane.xlu0 %2948
          %v2958 = vlaneseq
          %v2959 = vand.u32 %v2958, 127
          %v2960 = vlaneseq
          %v2961 = vshrl.u32 %v2960, 7
          %v2962 = vsub.s32 %v2959, %v2961
          %v2963 = vrot.slane %v2928, %v2962
          %v2964 = vlaneseq
          %v2965 = vshrl.u32 %v2964, 7
          %v2966 = vsub.s32 %v2959, %v2965
          %v2967 = vrot.slane %v2931, %v2966
          %v2968 = vlaneseq
          %v2969 = vshrl.u32 %v2968, 7
          %v2970 = vsub.s32 %v2959, %v2969
          %v2971 = vrot.slane %v2934, %v2970
          %v2972 = vlaneseq
          %v2973 = vshrl.u32 %v2972, 7
          %v2974 = vsub.s32 %v2959, %v2973
          %v2975 = vrot.slane %v2937, %v2974
          %v2976 = vlaneseq
          %v2977 = vshrl.u32 %v2976, 7
          %v2978 = vsub.s32 %v2959, %v2977
          %v2979 = vrot.slane %v2940, %v2978
          %v2980 = vlaneseq
          %v2981 = vshrl.u32 %v2980, 7
          %v2982 = vsub.s32 %v2959, %v2981
          %v2983 = vrot.slane %v2943, %v2982
          %v2984 = vlaneseq
          %v2985 = vshrl.u32 %v2984, 7
          %v2986 = vsub.s32 %v2959, %v2985
          %v2987 = vrot.slane %v2946, %v2986
          %v2988 = vlaneseq
          %v2989 = vshrl.u32 %v2988, 7
          %v2990 = vsub.s32 %v2959, %v2989
          %v2991 = vrot.slane %v2949, %v2990
          %v2992 = vsel %vm370, %v2967, %v2963
          %v2993 = vsel %vm373, %v2971, %v2992
          %v2994 = vsel %vm376, %v2975, %v2993
          %vm2995 = vcmask 1044484
          %v2996 = vsel %vm2995, %v2979, %v2994
          %v2997 = vsel %vm385, %v2983, %v2996
          %v2998 = vsel %vm388, %v2987, %v2997
          %v2999 = vsel %vm391, %v2991, %v2998
          %v3001 = vsel %vm2925, %v2999, 0.0
          %3002 = vadd.xlane.f32.xlu0 %v3001
          %v3003 = vpop.xlane.xlu0 %3002
          %v3004 = vstv %s2914
          %v3005 = vrcp.pop %v3004
          %v3006 = vmul.f32 %v3003, %v3005
          %v3008 = vlaneseq
          %v3009 = vshrl.u32 %v3008, 7
          %v3010 = vsub.s32 0, %v3009
          %v3011 = vrot.slane %v3006, %v3010
          %v3012 = vlaneseq
          %v3013 = vshrl.u32 %v3012, 7
          %v3014 = vsub.s32 1, %v3013
          %v3015 = vrot.slane %v3006, %v3014
          %v3016 = vlaneseq
          %v3017 = vshrl.u32 %v3016, 7
          %v3018 = vsub.s32 2, %v3017
          %v3019 = vrot.slane %v3006, %v3018
          %v3020 = vlaneseq
          %v3021 = vshrl.u32 %v3020, 7
          %v3022 = vsub.s32 3, %v3021
          %v3023 = vrot.slane %v3006, %v3022
          %v3024 = vlaneseq
          %v3025 = vshrl.u32 %v3024, 7
          %v3026 = vsub.s32 4, %v3025
          %v3027 = vrot.slane %v3006, %v3026
          %v3028 = vlaneseq
          %v3029 = vshrl.u32 %v3028, 7
          %v3030 = vsub.s32 5, %v3029
          %v3031 = vrot.slane %v3006, %v3030
          %v3032 = vlaneseq
          %v3033 = vshrl.u32 %v3032, 7
          %v3034 = vsub.s32 6, %v3033
          %v3035 = vrot.slane %v3006, %v3034
          %v3036 = vlaneseq
          %v3037 = vshrl.u32 %v3036, 7
          %v3038 = vsub.s32 7, %v3037
          %v3039 = vrot.slane %v3006, %v3038
          %v3048 = vsub.f32 %v2663, %v3011
          %v3049 = vsub.f32 %v2664, %v3015
          %v3050 = vsub.f32 %v2665, %v3019
          %v3051 = vsub.f32 %v2666, %v3023
          %v3052 = vsub.f32 %v2667, %v3027
          %v3053 = vsub.f32 %v2668, %v3031
          %v3054 = vsub.f32 %v2669, %v3035
          %v3055 = vsub.f32 %v2670, %v3039
          %v3056 = vsel %vm2916, %v3048, 0.0
          %v3057 = vsel %vm2916, %v3049, 0.0
          %v3058 = vsel %vm2916, %v3050, 0.0
          %v3059 = vsel %vm2916, %v3051, 0.0
          %v3060 = vsel %vm2916, %v3052, 0.0
          %v3061 = vsel %vm2916, %v3053, 0.0
          %v3062 = vsel %vm2916, %v3054, 0.0
          %v3063 = vsel %vm2916, %v3055, 0.0
          %v3064 = vmul.f32 %v3056, %v3056
          %v3065 = vmul.f32 %v3057, %v3057
          %v3066 = vmul.f32 %v3058, %v3058
          %v3067 = vmul.f32 %v3059, %v3059
          %v3068 = vmul.f32 %v3060, %v3060
          %v3069 = vmul.f32 %v3061, %v3061
          %v3070 = vmul.f32 %v3062, %v3062
          %v3071 = vmul.f32 %v3063, %v3063
          %v3072 = vsel %vm2925, %v3064, 0.0
          %3073 = vadd.xlane.f32.xlu0 %v3072
          %v3074 = vpop.xlane.xlu0 %3073
          %v3075 = vsel %vm2925, %v3065, 0.0
          %3076 = vadd.xlane.f32.xlu0 %v3075
          %v3077 = vpop.xlane.xlu0 %3076
          %v3078 = vsel %vm2925, %v3066, 0.0
          %3079 = vadd.xlane.f32.xlu0 %v3078
          %v3080 = vpop.xlane.xlu0 %3079
          %v3081 = vsel %vm2925, %v3067, 0.0
          %3082 = vadd.xlane.f32.xlu0 %v3081
          %v3083 = vpop.xlane.xlu0 %3082
          %v3084 = vsel %vm2925, %v3068, 0.0
          %3085 = vadd.xlane.f32.xlu0 %v3084
          %v3086 = vpop.xlane.xlu0 %3085
          %v3087 = vsel %vm2925, %v3069, 0.0
          %3088 = vadd.xlane.f32.xlu0 %v3087
          %v3089 = vpop.xlane.xlu0 %3088
          %v3090 = vsel %vm2925, %v3070, 0.0
          %3091 = vadd.xlane.f32.xlu0 %v3090
          %v3092 = vpop.xlane.xlu0 %3091
          %v3093 = vsel %vm2925, %v3071, 0.0
          %3094 = vadd.xlane.f32.xlu0 %v3093
          %v3095 = vpop.xlane.xlu0 %3094
          %v3104 = vlaneseq
          %v3105 = vshrl.u32 %v3104, 7
          %v3106 = vsub.s32 %v2959, %v3105
          %v3107 = vrot.slane %v3074, %v3106
          %v3108 = vlaneseq
          %v3109 = vshrl.u32 %v3108, 7
          %v3110 = vsub.s32 %v2959, %v3109
          %v3111 = vrot.slane %v3077, %v3110
          %v3112 = vlaneseq
          %v3113 = vshrl.u32 %v3112, 7
          %v3114 = vsub.s32 %v2959, %v3113
          %v3115 = vrot.slane %v3080, %v3114
          %v3116 = vlaneseq
          %v3117 = vshrl.u32 %v3116, 7
          %v3118 = vsub.s32 %v2959, %v3117
          %v3119 = vrot.slane %v3083, %v3118
          %v3120 = vlaneseq
          %v3121 = vshrl.u32 %v3120, 7
          %v3122 = vsub.s32 %v2959, %v3121
          %v3123 = vrot.slane %v3086, %v3122
          %v3124 = vlaneseq
          %v3125 = vshrl.u32 %v3124, 7
          %v3126 = vsub.s32 %v2959, %v3125
          %v3127 = vrot.slane %v3089, %v3126
          %v3128 = vlaneseq
          %v3129 = vshrl.u32 %v3128, 7
          %v3130 = vsub.s32 %v2959, %v3129
          %v3131 = vrot.slane %v3092, %v3130
          %v3132 = vlaneseq
          %v3133 = vshrl.u32 %v3132, 7
          %v3134 = vsub.s32 %v2959, %v3133
          %v3135 = vrot.slane %v3095, %v3134
          %v3136 = vsel %vm370, %v3111, %v3107
          %v3137 = vsel %vm373, %v3115, %v3136
          %v3138 = vsel %vm376, %v3119, %v3137
          %v3139 = vsel %vm2995, %v3123, %v3138
          %v3140 = vsel %vm385, %v3127, %v3139
          %v3141 = vsel %vm388, %v3131, %v3140
          %v3142 = vsel %vm391, %v3135, %v3141
          %v3144 = vsel %vm2925, %v3142, 0.0
          %3145 = vadd.xlane.f32.xlu0 %v3144
          %v3146 = vpop.xlane.xlu0 %3145
          %v3148 = vlaneseq
          %v3149 = vshrl.u32 %v3148, 7
          %v3150 = vsub.s32 %v2959, %v3149
          %v3151 = vrot.slane %v3003, %v3150
          %3153 = vst.msk [vmem:[%s329] sm:$0x1] %vm641, %v3151
          %v3155 = vlaneseq
          %v3156 = vshrl.u32 %v3155, 7
          %v3157 = vsub.s32 %v2959, %v3156
          %v3158 = vrot.slane %v3146, %v3157
          %3160 = vst.msk [vmem:[%s335] sm:$0x1] %vm641, %v3158
        $region44: #{downsampler_block.2} parent=35 // pred_fallthru
          _
        %s3161 = sand.u32 %s141, 1
        %s3162 = scalar_lea.sflag [#allocation3], %s3161
        %s3163 = sand.u32 %s141, 1
        %s3164 = smul.addr %s3163, 64
        %s3165 = scalar_lea.vmem [#allocation2], %s3164
        %p3166 = scmp.lt.s32.totalorder %s25, 1
        %s3167 = scalar_select %p3166, %s25, 1
        %p3168 = scmp.lt.s32.totalorder %s26, 0
        %s3169 = scalar_select %p3168, %s26, 0
        %s3170 = sadd.s32 %s3169, %s3167
        %s3171 = scalar_lea.vmem %s5, %s3170
        %p3172 = scmp.lt.s32.totalorder %s25, 1
        %s3173 = scalar_select %p3172, %s25, 1
        %p3174 = scmp.lt.s32.totalorder %s26, 0
        %s3175 = scalar_select %p3174, %s26, 0
        %s3176 = sadd.s32 %s3175, %s3173
        %s3177 = scalar_lea.vmem %s6, %s3176
        // Predicated region
        $region45: #{downsampler_block.2} parent=35 // pred_check
          %p3178 = pneg %p151
        $region46: #{downsampler_block.2} parent=35 // pred_check_branch
          %3180 = sbr.rel (%p3178) target = $region48
        $region47: #{downsampler_block.2} parent=35 // pred_region
          %s3182 = ssub.s32 1024, 1024
          %3183 = vsyncadd %s3162, %s3182
          %s3184 = smul.addr %s25, 8
          %s3185 = sadd.s32 %s26, %s3184
          %s3186 = smul.addr %s3185, 128
          %s3187 = scalar_lea.hbm %s4, %s3186
          %s3188 = sshll.u32 %s3165, 4
          %s3189 = int_to_ptr.vmem [resolvable:$true] %s3188
          %3194 = dma.vmem_to_hbm [thread:$0]  %s3189, 1024, %s3187, %s3162, 128, 128, 8
        $region48: #{downsampler_block.2} parent=35 // pred_fallthru
          _
        // Predicated region
        $region49: #{downsampler_block.2} parent=35 // pred_check
          %p3195 = pneg %p179
        $region50: #{downsampler_block.2} parent=35 // pred_check_branch
          %3197 = sbr.rel (%p3195) target = $region52
        $region51: #{downsampler_block.2} parent=35 // pred_region
          _
        $region52: #{downsampler_block.2} parent=35 // pred_fallthru
          _
        // Predicated region
        $region53: #{downsampler_block.2} parent=35 // pred_check
          %p3198 = pneg %p207
        $region54: #{downsampler_block.2} parent=35 // pred_check_branch
          %3200 = sbr.rel (%p3198) target = $region56
        $region55: #{downsampler_block.2} parent=35 // pred_region
          _
        $region56: #{downsampler_block.2} parent=35 // pred_fallthru
          _
      $region36: #{downsampler_block.2} parent=5 // pred_fallthru
        _
      %p3201 = scmp.le.s32.totalorder 2, %s16
      // Predicated region
      $region57: #{downsampler_block.2} parent=5 // pred_check
        %p3202 = pneg %p3201
      $region58: #{downsampler_block.2} parent=5 // pred_check_branch
        %3204 = sbr.rel (%p3202) target = $region60
      $region59: #{downsampler_block.2} parent=5 // pred_region
        %s3205 = ssub.s32 %s16, 2
        // Predicated region
        $region61: #{downsampler_block.2} parent=59 // pred_check
          %p3206 = pneg %p157
        $region62: #{downsampler_block.2} parent=59 // pred_check_branch
          %3208 = sbr.rel (%p3206) target = $region64
        $region63: #{downsampler_block.2} parent=59 // pred_region
          %s3209 = sand.u32 %s142, 1
          %s3210 = scalar_lea.sflag [#allocation3], %s3209
          %s3211 = sand.u32 %s142, 1
          %s3212 = smul.addr %s3211, 64
          %s3213 = scalar_lea.vmem [#allocation2], %s3212
          %3214 = dma.done %s3210, 1024
        $region64: #{downsampler_block.2} parent=59 // pred_fallthru
          _
        // Predicated region
        $region65: #{downsampler_block.2} parent=59 // pred_check
          %p3215 = pneg %p185
        $region66: #{downsampler_block.2} parent=59 // pred_check_branch
          %3217 = sbr.rel (%p3215) target = $region68
        $region67: #{downsampler_block.2} parent=59 // pred_region
          %p3218 = scmp.lt.s32.totalorder %s27, 1
          %s3219 = scalar_select %p3218, %s27, 1
          %p3220 = scmp.lt.s32.totalorder %s28, 0
          %s3221 = scalar_select %p3220, %s28, 0
          %s3222 = sadd.s32 %s3221, %s3219
          %s3223 = scalar_lea.vmem %s5, %s3222
        $region68: #{downsampler_block.2} parent=59 // pred_fallthru
          _
        // Predicated region
        $region69: #{downsampler_block.2} parent=59 // pred_check
          %p3224 = pneg %p213
        $region70: #{downsampler_block.2} parent=59 // pred_check_branch
          %3226 = sbr.rel (%p3224) target = $region72
        $region71: #{downsampler_block.2} parent=59 // pred_region
          %p3227 = scmp.lt.s32.totalorder %s27, 1
          %s3228 = scalar_select %p3227, %s27, 1
          %p3229 = scmp.lt.s32.totalorder %s28, 0
          %s3230 = scalar_select %p3229, %s28, 0
          %s3231 = sadd.s32 %s3230, %s3228
          %s3232 = scalar_lea.vmem %s6, %s3231
        $region72: #{downsampler_block.2} parent=59 // pred_fallthru
          _
      $region60: #{downsampler_block.2} parent=5 // pred_fallthru
        _
    $region6: #{downsampler_block.2} parent=1 // loop_footer
      %s20 = sadd.s32 1, %s16
    $region7: #{downsampler_block.2} parent=1 // loop_footer_branch
      %15 = sbr.rel target = $region3
    $region8: #{downsampler_block.2} parent=1 // loop_exit
      _
    %3233 = vsyncpa [#allocation3], 1
    %s3234 = scalar_lea.sflag [#allocation3], 1
    %3235 = vsyncpa %s3234, 1

</llo_original>
